<compile_context>
chip_gen: v7x
topology: tpu7x:2x2x1
jax: 0.10.0
libtpu: 0.0.40
codegen_flags: <defaults>
</compile_context>

<pallas_src>
import functools

import jax
import jax.numpy as jnp
from jax import lax
from jax.experimental import pallas as pl
from jax.experimental.pallas import tpu as pltpu

MATMUL_DTYPE = jnp.bfloat16   # MXU input dtype (f32 accumulation everywhere)


def _round_up(x, m):
    return ((x + m - 1) // m) * m


# ----------------------------------------------------------------------------
# In-kernel helpers (pure array math on values already loaded from refs)
# ----------------------------------------------------------------------------

def _mm(x, w):
    """x @ w with MXU-friendly dtypes; w is pre-transposed to (In, Out)."""
    return jnp.dot(x.astype(w.dtype), w, preferred_element_type=jnp.float32)


def _layer_norm(y, g, b, eps):
    mean = jnp.mean(y, axis=-1, keepdims=True)
    yc = y - mean
    var = jnp.mean(yc * yc, axis=-1, keepdims=True)
    return yc * lax.rsqrt(var + eps) * g + b


def _mha(q_src, kv_src, w_in, b_in, w_out, b_out, num_heads, fused_qkv):
    """nn.MultiheadAttention forward for one batch element, all heads.

    q_src: (Lq, E), kv_src: (Lk, E).  w_in: (E, 3E) packed [Wq|Wk|Wv]^T.
    """
    e = q_src.shape[-1]
    dh = e // num_heads
    scale = 1.0 / float(dh) ** 0.5

    if fused_qkv:                       # self-attention: one packed matmul
        qkv = _mm(q_src, w_in) + b_in                      # (Lq, 3E)
        q, k, v = qkv[:, :e], qkv[:, e:2 * e], qkv[:, 2 * e:]
    else:                               # cross-attention: Q from x, KV packed
        q = _mm(q_src, w_in[:, :e]) + b_in[:, :e]          # (Lq, E)
        kv = _mm(kv_src, w_in[:, e:]) + b_in[:, e:]        # (Lk, 2E)
        k, v = kv[:, :e], kv[:, e:]

    heads = []
    for h in range(num_heads):          # statically unrolled, all inside VMEM
        sl = slice(h * dh, (h + 1) * dh)
        # scores: contract last dims directly (no in-kernel k transpose)
        s = lax.dot_general(q[:, sl], k[:, sl], (((1,), (1,)), ((), ())),
                            preferred_element_type=jnp.float32) * scale
        m = jnp.max(s, axis=-1, keepdims=True)
        p = jnp.exp(s - m)
        denom = jnp.sum(p, axis=-1, keepdims=True)
        p = p * pl.reciprocal(denom, approx=True)
        heads.append(jnp.dot(p, v[:, sl], preferred_element_type=jnp.float32))
    o = jnp.concatenate(heads, axis=-1)                    # (Lq, E)
    return _mm(o, w_out) + b_out


# ----------------------------------------------------------------------------
# Fused decoder-layer kernel (one pallas_call per layer, grid over batch)
# ----------------------------------------------------------------------------

def _decoder_layer_kernel(
    x_ref, mem_ref,
    sa_w_in_ref, sa_b_in_ref, sa_w_out_ref, sa_b_out_ref, n1_g_ref, n1_b_ref,
    ca_w_in_ref, ca_b_in_ref, ca_w_out_ref, ca_b_out_ref, n2_g_ref, n2_b_ref,
    ff_w1_ref, ff_b1_ref, ff_w2_ref, ff_b2_ref, n3_g_ref, n3_b_ref,
    o_ref, *, num_heads, eps):
    x = x_ref[0]        # (Lq, E)  f32
    mem = mem_ref[0]    # (Lk, E)  f32

    # --- self-attention sublayer (post-norm) ---
    sa = _mha(x, x, sa_w_in_ref[...], sa_b_in_ref[...],
              sa_w_out_ref[...], sa_b_out_ref[...], num_heads, True)
    x = _layer_norm(x + sa, n1_g_ref[...], n1_b_ref[...], eps)

    # --- cross-attention sublayer ---
    ca = _mha(x, mem, ca_w_in_ref[...], ca_b_in_ref[...],
              ca_w_out_ref[...], ca_b_out_ref[...], num_heads, False)
    x = _layer_norm(x + ca, n2_g_ref[...], n2_b_ref[...], eps)

    # --- feed-forward sublayer (4H intermediate never leaves VMEM) ---
    h1 = jnp.maximum(_mm(x, ff_w1_ref[...]) + ff_b1_ref[...], 0.0)
    ff = _mm(h1, ff_w2_ref[...]) + ff_b2_ref[...]
    x = _layer_norm(x + ff, n3_g_ref[...], n3_b_ref[...], eps)

    o_ref[0] = x.astype(o_ref.dtype)


def _const_spec(arr):
    """Full-array block that stays resident in VMEM across all grid steps."""
    zeros = (0,) * arr.ndim
    return pl.BlockSpec(arr.shape, lambda b, _z=zeros: _z)


def decoder_layer(x, mem, p, num_heads, eps=1e-5):
    """One nn.TransformerDecoderLayer on batch-first tensors.

    x: (N, Lq, E), mem: (N, Lk, E)  ->  (N, Lq, E)
    """
    n, lq, e = x.shape
    lk = mem.shape[1]

    weights = [
        p["sa_w_in"], p["sa_b_in"], p["sa_w_out"], p["sa_b_out"],
        p["n1_g"], p["n1_b"],
        p["ca_w_in"], p["ca_b_in"], p["ca_w_out"], p["ca_b_out"],
        p["n2_g"], p["n2_b"],
        p["ff_w1"], p["ff_b1"], p["ff_w2"], p["ff_b2"],
        p["n3_g"], p["n3_b"],
    ]
    return pl.pallas_call(
        functools.partial(_decoder_layer_kernel, num_heads=num_heads, eps=eps),
        out_shape=jax.ShapeDtypeStruct((n, lq, e), jnp.float32),
        grid=(n,),
        in_specs=[pl.BlockSpec((1, lq, e), lambda b: (b, 0, 0)),
                  pl.BlockSpec((1, lk, e), lambda b: (b, 0, 0))]
                 + [_const_spec(w) for w in weights],
        out_specs=pl.BlockSpec((1, lq, e), lambda b: (b, 0, 0)),
        compiler_params=pltpu.CompilerParams(
            dimension_semantics=("parallel",)),
    )(x, mem, *weights)


# ----------------------------------------------------------------------------
# Tiled, lane-dense vocab projection (final nn.Linear)
# ----------------------------------------------------------------------------

def _vocab_kernel(x_ref, w_ref, b_ref, o_ref, acc_ref):
    @pl.when(pl.program_id(2) == 0)
    def _init():
        acc_ref[...] = jnp.zeros_like(acc_ref)

    acc_ref[...] += jnp.dot(x_ref[...], w_ref[...],
                            preferred_element_type=jnp.float32)

    @pl.when(pl.program_id(2) == pl.num_programs(2) - 1)
    def _done():
        o_ref[...] = (acc_ref[...] + b_ref[...]).astype(o_ref.dtype)


def vocab_projection(x, w, b):
    """logits = x @ w + b, tiled with a lane-dense (128-padded) vocab axis.

    x: (R, K) f32, w: (K, V) bf16 (pre-transposed nn.Linear weight), b: (V,).
    """
    r, k = x.shape
    v = w.shape[1]
    tn = 128
    tm = min(256, _round_up(r, 8))
    tk = min(512, _round_up(k, 128))
    rp, kp, vp = _round_up(r, tm), _round_up(k, tk), _round_up(v, tn)

    xp = jnp.zeros((rp, kp), MATMUL_DTYPE).at[:r, :k].set(x.astype(MATMUL_DTYPE))
    wp = jnp.zeros((kp, vp), MATMUL_DTYPE).at[:k, :v].set(w.astype(MATMUL_DTYPE))
    bp = jnp.zeros((1, vp), jnp.float32).at[0, :v].set(b)

    out = pl.pallas_call(
        _vocab_kernel,
        out_shape=jax.ShapeDtypeStruct((rp, vp), jnp.float32),
        grid=(rp // tm, vp // tn, kp // tk),
        in_specs=[pl.BlockSpec((tm, tk), lambda i, j, kk: (i, kk)),
                  pl.BlockSpec((tk, tn), lambda i, j, kk: (kk, j)),
                  pl.BlockSpec((1, tn), lambda i, j, kk: (0, j))],
        out_specs=pl.BlockSpec((tm, tn), lambda i, j, kk: (i, j)),
        scratch_shapes=[pltpu.VMEM((tm, tn), jnp.float32)],
        compiler_params=pltpu.CompilerParams(
            dimension_semantics=("parallel", "parallel", "arbitrary")),
    )(xp, wp, bp)
    return out[:r, :v]


# ----------------------------------------------------------------------------
# Full forward (embedding gather + layout transposes left to XLA)
# ----------------------------------------------------------------------------

def custom_decoder_forward(params, tgt, memory, num_heads):
    """Equivalent of CustomDecoder.forward (masks=None, dropout in eval)."""
    t0, t1 = tgt.shape
    emb = jnp.take(params["embedding"], tgt, axis=0)          # (T0, T1, H)
    pos = params["pos_encoding"][:t1]                         # (T1, H)
    x = emb + pos[None, :, :]

    # Run the layer stack in batch-first (N=T1, L, H) layout internally.
    x = jnp.transpose(x, (1, 0, 2))                           # (T1, T0, H)
    mem = jnp.transpose(memory, (1, 0, 2))                    # (T1, M,  H)
    for lp in params["layers"]:
        x = decoder_layer(x, mem, lp, num_heads)

    n, l, h = x.shape
    logits = vocab_projection(x.reshape(n * l, h),
                              params["linear_w"], params["linear_b"])
    v = params["linear_b"].shape[0]
    return jnp.transpose(logits.reshape(n, l, v), (1, 0, 2))  # (T0, T1, V)


# ----------------------------------------------------------------------------
# Parameters: init in PyTorch layout, then pre-transpose/pack once for kernels
# ----------------------------------------------------------------------------

def init_torch_layout_params(key, vocab_size, hidden_size, num_layers,
                             num_heads, max_len):
    del num_heads
    H = hidden_size
    keys = iter(jax.random.split(key, 3 + 6 * num_layers))

    def nrm(shape, scale=0.02):
        return (scale * jax.random.normal(next(keys), shape)).astype(jnp.float32)

    def attn_params():
        return {"in_proj_w": nrm((3 * H, H)),
                "in_proj_b": jnp.zeros((3 * H,), jnp.float32),
                "out_proj_w": nrm((H, H)),
                "out_proj_b": jnp.zeros((H,), jnp.float32)}

    params = {"embedding": nrm((vocab_size, H)),
              "pos_encoding": nrm((max_len, H)),
              "linear_w": nrm((vocab_size, H)),
              "linear_b": jnp.zeros((vocab_size,), jnp.float32),
              "layers": []}
    for _ in range(num_layers):
        params["layers"].append({
            "self_attn": attn_params(), "cross_attn": attn_params(),
            "linear1_w": nrm((4 * H, H)), "linear1_b": jnp.zeros((4 * H,), jnp.float32),
            "linear2_w": nrm((H, 4 * H)), "linear2_b": jnp.zeros((H,), jnp.float32),
            "norm1_g": jnp.ones((H,), jnp.float32), "norm1_b": jnp.zeros((H,), jnp.float32),
            "norm2_g": jnp.ones((H,), jnp.float32), "norm2_b": jnp.zeros((H,), jnp.float32),
            "norm3_g": jnp.ones((H,), jnp.float32), "norm3_b": jnp.zeros((H,), jnp.float32),
        })
    return params


def prepare_params(raw):
    """Pre-transpose weights to (In, Out), cast MXU weights to bf16, reshape
    biases/gammas to (1, D) so they are VMEM-resident rows inside kernels."""
    def row(v):
        return v.reshape(1, -1).astype(jnp.float32)

    prepared = {"embedding": raw["embedding"],
                "pos_encoding": raw["pos_encoding"],
                "linear_w": raw["linear_w"].T.astype(MATMUL_DTYPE),   # (H, V)
                "linear_b": raw["linear_b"],
                "layers": []}
    for lp in raw["layers"]:
        sa, ca = lp["self_attn"], lp["cross_attn"]
        prepared["layers"].append({
            "sa_w_in": sa["in_proj_w"].T.astype(MATMUL_DTYPE),    # (H, 3H)
            "sa_b_in": row(sa["in_proj_b"]),
            "sa_w_out": sa["out_proj_w"].T.astype(MATMUL_DTYPE),  # (H, H)
            "sa_b_out": row(sa["out_proj_b"]),
            "ca_w_in": ca["in_proj_w"].T.astype(MATMUL_DTYPE),
            "ca_b_in": row(ca["in_proj_b"]),
            "ca_w_out": ca["out_proj_w"].T.astype(MATMUL_DTYPE),
            "ca_b_out": row(ca["out_proj_b"]),
            "ff_w1": lp["linear1_w"].T.astype(MATMUL_DTYPE),      # (H, 4H)
            "ff_b1": row(lp["linear1_b"]),
            "ff_w2": lp["linear2_w"].T.astype(MATMUL_DTYPE),      # (4H, H)
            "ff_b2": row(lp["linear2_b"]),
            "n1_g": row(lp["norm1_g"]), "n1_b": row(lp["norm1_b"]),
            "n2_g": row(lp["norm2_g"]), "n2_b": row(lp["norm2_b"]),
            "n3_g": row(lp["norm3_g"]), "n3_b": row(lp["norm3_b"]),
        })
    return prepared


if __name__ == "__main__":
    vocab_size = 50
    hidden_size = 32
    num_layers = 2
    num_heads = 8
    max_len = 64

    T0, T1, M = 2, 8, 6   # tgt: (T0, T1) ids; memory: (M, T1, H)

    root = jax.random.PRNGKey(0)
    k_params, k_tgt, k_mem = jax.random.split(root, 3)

    raw = init_torch_layout_params(k_params, vocab_size, hidden_size,
                                   num_layers, num_heads, max_len)
    params = prepare_params(raw)

    tgt = jax.random.randint(k_tgt, (T0, T1), 0, vocab_size, dtype=jnp.int32)
    memory = jax.random.normal(k_mem, (M, T1, hidden_size), dtype=jnp.float32)

    fwd = jax.jit(functools.partial(custom_decoder_forward, num_heads=num_heads))
    logits = jax.block_until_ready(fwd(params, tgt, memory))

    assert logits.shape == (T0, T1, vocab_size), logits.shape
    assert bool(jnp.all(jnp.isfinite(logits)))
    print("KERNEL_OK")
</pallas_src>

<mosaic_0001>
module attributes {stable_mosaic.version = 11 : i64} {
  func.func @_vocab_kernel(%arg0: i32, %arg1: i32, %arg2: i32, %arg3: memref<16x128xbf16, #tpu.memory_space<vmem>>, %arg4: memref<128x128xbf16, #tpu.memory_space<vmem>>, %arg5: memref<1x128xf32, #tpu.memory_space<vmem>>, %arg6: memref<16x128xf32, #tpu.memory_space<vmem>>, %arg7: memref<16x128xf32, #tpu.memory_space<vmem>>) attributes {dimension_semantics = [#tpu.dimension_semantics<parallel>, #tpu.dimension_semantics<parallel>, #tpu.dimension_semantics<arbitrary>], iteration_bounds = array<i64: 1, 1, 1>, scalar_prefetch = 0 : i64, scratch_operands = 1 : i64, tpu.core_type = #tpu.core_type<tc>, window_params = [{transform_indices = @transform_0, window_bounds = array<i64: 16, 128>}, {transform_indices = @transform_1, window_bounds = array<i64: 128, 128>}, {transform_indices = @transform_2, window_bounds = array<i64: 1, 128>}, {transform_indices = @transform_3, window_bounds = array<i64: 16, 128>}]} {
    %c0_i32 = arith.constant 0 : i32
    %0 = arith.cmpi eq, %arg2, %c0_i32 : i32
    %1 = arith.extui %0 : i1 to i32
    %c0_i32_0 = arith.constant 0 : i32
    %2 = arith.cmpi ne, %1, %c0_i32_0 : i32
    scf.if %2 {
      %cst_10 = arith.constant 0.000000e+00 : f32
      %12 = vector.broadcast %cst_10 : f32 to vector<16x128xf32>
      %c0_11 = arith.constant 0 : index
      %c0_12 = arith.constant 0 : index
      %13 = vector.load %arg7[%c0_11, %c0_12] : memref<16x128xf32, #tpu.memory_space<vmem>>, vector<16x128xf32>
      tpu.vector_store %arg7[%c0_11, %c0_12], %12 {strides = array<i32>} : memref<16x128xf32, #tpu.memory_space<vmem>>, vector<16x128xf32>,
    } else {
    }
    %c0 = arith.constant 0 : index
    %c0_1 = arith.constant 0 : index
    %3 = vector.load %arg7[%c0, %c0_1] : memref<16x128xf32, #tpu.memory_space<vmem>>, vector<16x128xf32>
    %c0_2 = arith.constant 0 : index
    %c0_3 = arith.constant 0 : index
    %4 = vector.load %arg3[%c0_2, %c0_3] : memref<16x128xbf16, #tpu.memory_space<vmem>>, vector<16x128xbf16>
    %c0_4 = arith.constant 0 : index
    %c0_5 = arith.constant 0 : index
    %5 = vector.load %arg4[%c0_4, %c0_5] : memref<128x128xbf16, #tpu.memory_space<vmem>>, vector<128x128xbf16>
    %cst = arith.constant dense<0.000000e+00> : vector<16x128xf32>
    %6 = tpu.matmul %4, %5, %cst {dimension_numbers = #tpu.dot_dimension_numbers<[1], [0], [0], [1], [0, 0, 1, 1], [], []>} : vector<16x128xbf16>, vector<128x128xbf16>, vector<16x128xf32> -> vector<16x128xf32>
    %7 = arith.addf %3, %6 : vector<16x128xf32>
    %c0_6 = arith.constant 0 : index
    %c0_7 = arith.constant 0 : index
    %8 = vector.load %arg7[%c0_6, %c0_7] : memref<16x128xf32, #tpu.memory_space<vmem>>, vector<16x128xf32>
    tpu.vector_store %arg7[%c0_6, %c0_7], %7 {strides = array<i32>} : memref<16x128xf32, #tpu.memory_space<vmem>>, vector<16x128xf32>,
    %c0_i32_8 = arith.constant 0 : i32
    %9 = arith.cmpi eq, %arg2, %c0_i32_8 : i32
    %10 = arith.extui %9 : i1 to i32
    %c0_i32_9 = arith.constant 0 : i32
    %11 = arith.cmpi ne, %10, %c0_i32_9 : i32
    scf.if %11 {
      %c0_10 = arith.constant 0 : index
      %c0_11 = arith.constant 0 : index
      %12 = vector.load %arg7[%c0_10, %c0_11] : memref<16x128xf32, #tpu.memory_space<vmem>>, vector<16x128xf32>
      %c0_12 = arith.constant 0 : index
      %c0_13 = arith.constant 0 : index
      %13 = vector.load %arg5[%c0_12, %c0_13] : memref<1x128xf32, #tpu.memory_space<vmem>>, vector<1x128xf32>
      %14 = vector.broadcast %13 : vector<1x128xf32> to vector<16x128xf32>
      %15 = arith.addf %12, %14 : vector<16x128xf32>
      %c0_14 = arith.constant 0 : index
      %c0_15 = arith.constant 0 : index
      %16 = vector.load %arg6[%c0_14, %c0_15] : memref<16x128xf32, #tpu.memory_space<vmem>>, vector<16x128xf32>
      tpu.vector_store %arg6[%c0_14, %c0_15], %15 {strides = array<i32>} : memref<16x128xf32, #tpu.memory_space<vmem>>, vector<16x128xf32>,
    } else {
    }
    return
  }
  func.func @transform_0(%arg0: i32, %arg1: i32, %arg2: i32) -> (i32, i32) {
    %c0_i32 = arith.constant 0 : i32
    return %arg0, %arg2 : i32, i32
  }
  func.func @transform_1(%arg0: i32, %arg1: i32, %arg2: i32) -> (i32, i32) {
    %c0_i32 = arith.constant 0 : i32
    return %arg2, %arg1 : i32, i32
  }
  func.func @transform_2(%arg0: i32, %arg1: i32, %arg2: i32) -> (i32, i32) {
    %c0_i32 = arith.constant 0 : i32
    %c0_i32_0 = arith.constant 0 : i32
    return %c0_i32, %arg1 : i32, i32
  }
  func.func @transform_3(%arg0: i32, %arg1: i32, %arg2: i32) -> (i32, i32) {
    %c0_i32 = arith.constant 0 : i32
    return %arg0, %arg1 : i32, i32
  }
}

module attributes {stable_mosaic.version = 11 : i64} {
  func.func @_decoder_layer_kernel(%arg0: i32, %arg1: memref<1x2x32xf32, #tpu.memory_space<vmem>>, %arg2: memref<1x6x32xf32, #tpu.memory_space<vmem>>, %arg3: memref<32x96xbf16, #tpu.memory_space<vmem>>, %arg4: memref<1x96xf32, #tpu.memory_space<vmem>>, %arg5: memref<32x32xbf16, #tpu.memory_space<vmem>>, %arg6: memref<1x32xf32, #tpu.memory_space<vmem>>, %arg7: memref<1x32xf32, #tpu.memory_space<vmem>>, %arg8: memref<1x32xf32, #tpu.memory_space<vmem>>, %arg9: memref<32x96xbf16, #tpu.memory_space<vmem>>, %arg10: memref<1x96xf32, #tpu.memory_space<vmem>>, %arg11: memref<32x32xbf16, #tpu.memory_space<vmem>>, %arg12: memref<1x32xf32, #tpu.memory_space<vmem>>, %arg13: memref<1x32xf32, #tpu.memory_space<vmem>>, %arg14: memref<1x32xf32, #tpu.memory_space<vmem>>, %arg15: memref<32x128xbf16, #tpu.memory_space<vmem>>, %arg16: memref<1x128xf32, #tpu.memory_space<vmem>>, %arg17: memref<128x32xbf16, #tpu.memory_space<vmem>>, %arg18: memref<1x32xf32, #tpu.memory_space<vmem>>, %arg19: memref<1x32xf32, #tpu.memory_space<vmem>>, %arg20: memref<1x32xf32, #tpu.memory_space<vmem>>, %arg21: memref<1x2x32xf32, #tpu.memory_space<vmem>>) attributes {dimension_semantics = [#tpu.dimension_semantics<parallel>], iteration_bounds = array<i64: 8>, scalar_prefetch = 0 : i64, scratch_operands = 0 : i64, tpu.core_type = #tpu.core_type<tc>, window_params = [{transform_indices = @transform_0, window_bounds = array<i64: 1, 2, 32>}, {transform_indices = @transform_1, window_bounds = array<i64: 1, 6, 32>}, {pipeline_mode = #tpu.pipeline_mode<synchronous>, transform_indices = @transform_2, window_bounds = array<i64: 32, 96>}, {pipeline_mode = #tpu.pipeline_mode<synchronous>, transform_indices = @transform_3, window_bounds = array<i64: 1, 96>}, {pipeline_mode = #tpu.pipeline_mode<synchronous>, transform_indices = @transform_4, window_bounds = array<i64: 32, 32>}, {pipeline_mode = #tpu.pipeline_mode<synchronous>, transform_indices = @transform_5, window_bounds = array<i64: 1, 32>}, {pipeline_mode = #tpu.pipeline_mode<synchronous>, transform_indices = @transform_6, window_bounds = array<i64: 1, 32>}, {pipeline_mode = #tpu.pipeline_mode<synchronous>, transform_indices = @transform_7, window_bounds = array<i64: 1, 32>}, {pipeline_mode = #tpu.pipeline_mode<synchronous>, transform_indices = @transform_8, window_bounds = array<i64: 32, 96>}, {pipeline_mode = #tpu.pipeline_mode<synchronous>, transform_indices = @transform_9, window_bounds = array<i64: 1, 96>}, {pipeline_mode = #tpu.pipeline_mode<synchronous>, transform_indices = @transform_10, window_bounds = array<i64: 32, 32>}, {pipeline_mode = #tpu.pipeline_mode<synchronous>, transform_indices = @transform_11, window_bounds = array<i64: 1, 32>}, {pipeline_mode = #tpu.pipeline_mode<synchronous>, transform_indices = @transform_12, window_bounds = array<i64: 1, 32>}, {pipeline_mode = #tpu.pipeline_mode<synchronous>, transform_indices = @transform_13, window_bounds = array<i64: 1, 32>}, {pipeline_mode = #tpu.pipeline_mode<synchronous>, transform_indices = @transform_14, window_bounds = array<i64: 32, 128>}, {pipeline_mode = #tpu.pipeline_mode<synchronous>, transform_indices = @transform_15, window_bounds = array<i64: 1, 128>}, {pipeline_mode = #tpu.pipeline_mode<synchronous>, transform_indices = @transform_16, window_bounds = array<i64: 128, 32>}, {pipeline_mode = #tpu.pipeline_mode<synchronous>, transform_indices = @transform_17, window_bounds = array<i64: 1, 32>}, {pipeline_mode = #tpu.pipeline_mode<synchronous>, transform_indices = @transform_18, window_bounds = array<i64: 1, 32>}, {pipeline_mode = #tpu.pipeline_mode<synchronous>, transform_indices = @transform_19, window_bounds = array<i64: 1, 32>}, {transform_indices = @transform_20, window_bounds = array<i64: 1, 2, 32>}]} {
    %c0 = arith.constant 0 : index
    %c0_0 = arith.constant 0 : index
    %c0_1 = arith.constant 0 : index
    %0 = vector.load %arg1[%c0, %c0_0, %c0_1] : memref<1x2x32xf32, #tpu.memory_space<vmem>>, vector<1x2x32xf32>
    %1 = vector.shape_cast %0 : vector<1x2x32xf32> to vector<2x32xf32>
    %c0_2 = arith.constant 0 : index
    %c0_3 = arith.constant 0 : index
    %c0_4 = arith.constant 0 : index
    %2 = vector.load %arg2[%c0_2, %c0_3, %c0_4] : memref<1x6x32xf32, #tpu.memory_space<vmem>>, vector<1x6x32xf32>
    %3 = vector.shape_cast %2 : vector<1x6x32xf32> to vector<6x32xf32>
    %c0_5 = arith.constant 0 : index
    %c0_6 = arith.constant 0 : index
    %4 = vector.load %arg3[%c0_5, %c0_6] : memref<32x96xbf16, #tpu.memory_space<vmem>>, vector<32x96xbf16>
    %c0_7 = arith.constant 0 : index
    %c0_8 = arith.constant 0 : index
    %5 = vector.load %arg4[%c0_7, %c0_8] : memref<1x96xf32, #tpu.memory_space<vmem>>, vector<1x96xf32>
    %c0_9 = arith.constant 0 : index
    %c0_10 = arith.constant 0 : index
    %6 = vector.load %arg5[%c0_9, %c0_10] : memref<32x32xbf16, #tpu.memory_space<vmem>>, vector<32x32xbf16>
    %c0_11 = arith.constant 0 : index
    %c0_12 = arith.constant 0 : index
    %7 = vector.load %arg6[%c0_11, %c0_12] : memref<1x32xf32, #tpu.memory_space<vmem>>, vector<1x32xf32>
    %8 = arith.truncf %1 : vector<2x32xf32> to vector<2x32xbf16>
    %cst = arith.constant dense<0.000000e+00> : vector<2x96xf32>
    %9 = tpu.matmul %8, %4, %cst {dimension_numbers = #tpu.dot_dimension_numbers<[1], [0], [0], [1], [0, 0, 1, 1], [], []>} : vector<2x32xbf16>, vector<32x96xbf16>, vector<2x96xf32> -> vector<2x96xf32>
    %10 = vector.broadcast %5 : vector<1x96xf32> to vector<2x96xf32>
    %11 = arith.addf %9, %10 : vector<2x96xf32>
    %12 = vector.extract_strided_slice %11 {offsets = [0, 0], sizes = [2, 32], strides = [1, 1]} : vector<2x96xf32> to vector<2x32xf32>
    %13 = vector.extract_strided_slice %11 {offsets = [0, 32], sizes = [2, 32], strides = [1, 1]} : vector<2x96xf32> to vector<2x32xf32>
    %14 = vector.extract_strided_slice %11 {offsets = [0, 64], sizes = [2, 32], strides = [1, 1]} : vector<2x96xf32> to vector<2x32xf32>
    %15 = vector.extract_strided_slice %12 {offsets = [0, 0], sizes = [2, 4], strides = [1, 1]} : vector<2x32xf32> to vector<2x4xf32>
    %16 = vector.extract_strided_slice %13 {offsets = [0, 0], sizes = [2, 4], strides = [1, 1]} : vector<2x32xf32> to vector<2x4xf32>
    %cst_13 = arith.constant dense<0.000000e+00> : vector<2x2xf32>
    %17 = tpu.matmul %15, %16, %cst_13 {dimension_numbers = #tpu.dot_dimension_numbers<[1], [1], [0], [0], [0, 0, 1, 0], [], []>} : vector<2x4xf32>, vector<2x4xf32>, vector<2x2xf32> -> vector<2x2xf32>
    %cst_14 = arith.constant 5.000000e-01 : f32
    %18 = vector.broadcast %cst_14 : f32 to vector<2x2xf32>
    %19 = arith.mulf %17, %18 : vector<2x2xf32>
    %cst_15 = arith.constant dense<0xFF800000> : vector<2xf32>
    %20 = vector.multi_reduction <maximumf>, %19, %cst_15 [1] : vector<2x2xf32> to vector<2xf32>
    %21 = vector.shape_cast %20 : vector<2xf32> to vector<2x1xf32>
    %22 = vector.broadcast %21 : vector<2x1xf32> to vector<2x2xf32>
    %23 = arith.subf %19, %22 : vector<2x2xf32>
    %24 = math.exp %23 : vector<2x2xf32>
    %cst_16 = arith.constant dense<0.000000e+00> : vector<2xf32>
    %25 = vector.multi_reduction <add>, %24, %cst_16 [1] : vector<2x2xf32> to vector<2xf32>
    %26 = vector.shape_cast %25 : vector<2xf32> to vector<2x1xf32>
    %27 = tpu.reciprocal %26 {approx = true} : vector<2x1xf32> -> vector<2x1xf32>
    %28 = vector.broadcast %27 : vector<2x1xf32> to vector<2x2xf32>
    %29 = arith.mulf %24, %28 : vector<2x2xf32>
    %30 = vector.extract_strided_slice %14 {offsets = [0, 0], sizes = [2, 4], strides = [1, 1]} : vector<2x32xf32> to vector<2x4xf32>
    %cst_17 = arith.constant dense<0.000000e+00> : vector<2x4xf32>
    %31 = tpu.matmul %29, %30, %cst_17 {dimension_numbers = #tpu.dot_dimension_numbers<[1], [0], [0], [1], [0, 0, 1, 1], [], []>} : vector<2x2xf32>, vector<2x4xf32>, vector<2x4xf32> -> vector<2x4xf32>
    %32 = vector.extract_strided_slice %12 {offsets = [0, 4], sizes = [2, 4], strides = [1, 1]} : vector<2x32xf32> to vector<2x4xf32>
    %33 = vector.extract_strided_slice %13 {offsets = [0, 4], sizes = [2, 4], strides = [1, 1]} : vector<2x32xf32> to vector<2x4xf32>
    %cst_18 = arith.constant dense<0.000000e+00> : vector<2x2xf32>
    %34 = tpu.matmul %32, %33, %cst_18 {dimension_numbers = #tpu.dot_dimension_numbers<[1], [1], [0], [0], [0, 0, 1, 0], [], []>} : vector<2x4xf32>, vector<2x4xf32>, vector<2x2xf32> -> vector<2x2xf32>
    %cst_19 = arith.constant 5.000000e-01 : f32
    %35 = vector.broadcast %cst_19 : f32 to vector<2x2xf32>
    %36 = arith.mulf %34, %35 : vector<2x2xf32>
    %cst_20 = arith.constant dense<0xFF800000> : vector<2xf32>
    %37 = vector.multi_reduction <maximumf>, %36, %cst_20 [1] : vector<2x2xf32> to vector<2xf32>
    %38 = vector.shape_cast %37 : vector<2xf32> to vector<2x1xf32>
    %39 = vector.broadcast %38 : vector<2x1xf32> to vector<2x2xf32>
    %40 = arith.subf %36, %39 : vector<2x2xf32>
    %41 = math.exp %40 : vector<2x2xf32>
    %cst_21 = arith.constant dense<0.000000e+00> : vector<2xf32>
    %42 = vector.multi_reduction <add>, %41, %cst_21 [1] : vector<2x2xf32> to vector<2xf32>
    %43 = vector.shape_cast %42 : vector<2xf32> to vector<2x1xf32>
    %44 = tpu.reciprocal %43 {approx = true} : vector<2x1xf32> -> vector<2x1xf32>
    %45 = vector.broadcast %44 : vector<2x1xf32> to vector<2x2xf32>
    %46 = arith.mulf %41, %45 : vector<2x2xf32>
    %47 = vector.extract_strided_slice %14 {offsets = [0, 4], sizes = [2, 4], strides = [1, 1]} : vector<2x32xf32> to vector<2x4xf32>
    %cst_22 = arith.constant dense<0.000000e+00> : vector<2x4xf32>
    %48 = tpu.matmul %46, %47, %cst_22 {dimension_numbers = #tpu.dot_dimension_numbers<[1], [0], [0], [1], [0, 0, 1, 1], [], []>} : vector<2x2xf32>, vector<2x4xf32>, vector<2x4xf32> -> vector<2x4xf32>
    %49 = vector.extract_strided_slice %12 {offsets = [0, 8], sizes = [2, 4], strides = [1, 1]} : vector<2x32xf32> to vector<2x4xf32>
    %50 = vector.extract_strided_slice %13 {offsets = [0, 8], sizes = [2, 4], strides = [1, 1]} : vector<2x32xf32> to vector<2x4xf32>
    %cst_23 = arith.constant dense<0.000000e+00> : vector<2x2xf32>
    %51 = tpu.matmul %49, %50, %cst_23 {dimension_numbers = #tpu.dot_dimension_numbers<[1], [1], [0], [0], [0, 0, 1, 0], [], []>} : vector<2x4xf32>, vector<2x4xf32>, vector<2x2xf32> -> vector<2x2xf32>
    %cst_24 = arith.constant 5.000000e-01 : f32
    %52 = vector.broadcast %cst_24 : f32 to vector<2x2xf32>
    %53 = arith.mulf %51, %52 : vector<2x2xf32>
    %cst_25 = arith.constant dense<0xFF800000> : vector<2xf32>
    %54 = vector.multi_reduction <maximumf>, %53, %cst_25 [1] : vector<2x2xf32> to vector<2xf32>
    %55 = vector.shape_cast %54 : vector<2xf32> to vector<2x1xf32>
    %56 = vector.broadcast %55 : vector<2x1xf32> to vector<2x2xf32>
    %57 = arith.subf %53, %56 : vector<2x2xf32>
    %58 = math.exp %57 : vector<2x2xf32>
    %cst_26 = arith.constant dense<0.000000e+00> : vector<2xf32>
    %59 = vector.multi_reduction <add>, %58, %cst_26 [1] : vector<2x2xf32> to vector<2xf32>
    %60 = vector.shape_cast %59 : vector<2xf32> to vector<2x1xf32>
    %61 = tpu.reciprocal %60 {approx = true} : vector<2x1xf32> -> vector<2x1xf32>
    %62 = vector.broadcast %61 : vector<2x1xf32> to vector<2x2xf32>
    %63 = arith.mulf %58, %62 : vector<2x2xf32>
    %64 = vector.extract_strided_slice %14 {offsets = [0, 8], sizes = [2, 4], strides = [1, 1]} : vector<2x32xf32> to vector<2x4xf32>
    %cst_27 = arith.constant dense<0.000000e+00> : vector<2x4xf32>
    %65 = tpu.matmul %63, %64, %cst_27 {dimension_numbers = #tpu.dot_dimension_numbers<[1], [0], [0], [1], [0, 0, 1, 1], [], []>} : vector<2x2xf32>, vector<2x4xf32>, vector<2x4xf32> -> vector<2x4xf32>
    %66 = vector.extract_strided_slice %12 {offsets = [0, 12], sizes = [2, 4], strides = [1, 1]} : vector<2x32xf32> to vector<2x4xf32>
    %67 = vector.extract_strided_slice %13 {offsets = [0, 12], sizes = [2, 4], strides = [1, 1]} : vector<2x32xf32> to vector<2x4xf32>
    %cst_28 = arith.constant dense<0.000000e+00> : vector<2x2xf32>
    %68 = tpu.matmul %66, %67, %cst_28 {dimension_numbers = #tpu.dot_dimension_numbers<[1], [1], [0], [0], [0, 0, 1, 0], [], []>} : vector<2x4xf32>, vector<2x4xf32>, vector<2x2xf32> -> vector<2x2xf32>
    %cst_29 = arith.constant 5.000000e-01 : f32
    %69 = vector.broadcast %cst_29 : f32 to vector<2x2xf32>
    %70 = arith.mulf %68, %69 : vector<2x2xf32>
    %cst_30 = arith.constant dense<0xFF800000> : vector<2xf32>
    %71 = vector.multi_reduction <maximumf>, %70, %cst_30 [1] : vector<2x2xf32> to vector<2xf32>
    %72 = vector.shape_cast %71 : vector<2xf32> to vector<2x1xf32>
    %73 = vector.broadcast %72 : vector<2x1xf32> to vector<2x2xf32>
    %74 = arith.subf %70, %73 : vector<2x2xf32>
    %75 = math.exp %74 : vector<2x2xf32>
    %cst_31 = arith.constant dense<0.000000e+00> : vector<2xf32>
    %76 = vector.multi_reduction <add>, %75, %cst_31 [1] : vector<2x2xf32> to vector<2xf32>
    %77 = vector.shape_cast %76 : vector<2xf32> to vector<2x1xf32>
    %78 = tpu.reciprocal %77 {approx = true} : vector<2x1xf32> -> vector<2x1xf32>
    %79 = vector.broadcast %78 : vector<2x1xf32> to vector<2x2xf32>
    %80 = arith.mulf %75, %79 : vector<2x2xf32>
    %81 = vector.extract_strided_slice %14 {offsets = [0, 12], sizes = [2, 4], strides = [1, 1]} : vector<2x32xf32> to vector<2x4xf32>
    %cst_32 = arith.constant dense<0.000000e+00> : vector<2x4xf32>
    %82 = tpu.matmul %80, %81, %cst_32 {dimension_numbers = #tpu.dot_dimension_numbers<[1], [0], [0], [1], [0, 0, 1, 1], [], []>} : vector<2x2xf32>, vector<2x4xf32>, vector<2x4xf32> -> vector<2x4xf32>
    %83 = vector.extract_strided_slice %12 {offsets = [0, 16], sizes = [2, 4], strides = [1, 1]} : vector<2x32xf32> to vector<2x4xf32>
    %84 = vector.extract_strided_slice %13 {offsets = [0, 16], sizes = [2, 4], strides = [1, 1]} : vector<2x32xf32> to vector<2x4xf32>
    %cst_33 = arith.constant dense<0.000000e+00> : vector<2x2xf32>
    %85 = tpu.matmul %83, %84, %cst_33 {dimension_numbers = #tpu.dot_dimension_numbers<[1], [1], [0], [0], [0, 0, 1, 0], [], []>} : vector<2x4xf32>, vector<2x4xf32>, vector<2x2xf32> -> vector<2x2xf32>
    %cst_34 = arith.constant 5.000000e-01 : f32
    %86 = vector.broadcast %cst_34 : f32 to vector<2x2xf32>
    %87 = arith.mulf %85, %86 : vector<2x2xf32>
    %cst_35 = arith.constant dense<0xFF800000> : vector<2xf32>
    %88 = vector.multi_reduction <maximumf>, %87, %cst_35 [1] : vector<2x2xf32> to vector<2xf32>
    %89 = vector.shape_cast %88 : vector<2xf32> to vector<2x1xf32>
    %90 = vector.broadcast %89 : vector<2x1xf32> to vector<2x2xf32>
    %91 = arith.subf %87, %90 : vector<2x2xf32>
    %92 = math.exp %91 : vector<2x2xf32>
    %cst_36 = arith.constant dense<0.000000e+00> : vector<2xf32>
    %93 = vector.multi_reduction <add>, %92, %cst_36 [1] : vector<2x2xf32> to vector<2xf32>
    %94 = vector.shape_cast %93 : vector<2xf32> to vector<2x1xf32>
    %95 = tpu.reciprocal %94 {approx = true} : vector<2x1xf32> -> vector<2x1xf32>
    %96 = vector.broadcast %95 : vector<2x1xf32> to vector<2x2xf32>
    %97 = arith.mulf %92, %96 : vector<2x2xf32>
    %98 = vector.extract_strided_slice %14 {offsets = [0, 16], sizes = [2, 4], strides = [1, 1]} : vector<2x32xf32> to vector<2x4xf32>
    %cst_37 = arith.constant dense<0.000000e+00> : vector<2x4xf32>
    %99 = tpu.matmul %97, %98, %cst_37 {dimension_numbers = #tpu.dot_dimension_numbers<[1], [0], [0], [1], [0, 0, 1, 1], [], []>} : vector<2x2xf32>, vector<2x4xf32>, vector<2x4xf32> -> vector<2x4xf32>
    %100 = vector.extract_strided_slice %12 {offsets = [0, 20], sizes = [2, 4], strides = [1, 1]} : vector<2x32xf32> to vector<2x4xf32>
    %101 = vector.extract_strided_slice %13 {offsets = [0, 20], sizes = [2, 4], strides = [1, 1]} : vector<2x32xf32> to vector<2x4xf32>
    %cst_38 = arith.constant dense<0.000000e+00> : vector<2x2xf32>
    %102 = tpu.matmul %100, %101, %cst_38 {dimension_numbers = #tpu.dot_dimension_numbers<[1], [1], [0], [0], [0, 0, 1, 0], [], []>} : vector<2x4xf32>, vector<2x4xf32>, vector<2x2xf32> -> vector<2x2xf32>
    %cst_39 = arith.constant 5.000000e-01 : f32
    %103 = vector.broadcast %cst_39 : f32 to vector<2x2xf32>
    %104 = arith.mulf %102, %103 : vector<2x2xf32>
    %cst_40 = arith.constant dense<0xFF800000> : vector<2xf32>
    %105 = vector.multi_reduction <maximumf>, %104, %cst_40 [1] : vector<2x2xf32> to vector<2xf32>
    %106 = vector.shape_cast %105 : vector<2xf32> to vector<2x1xf32>
    %107 = vector.broadcast %106 : vector<2x1xf32> to vector<2x2xf32>
    %108 = arith.subf %104, %107 : vector<2x2xf32>
    %109 = math.exp %108 : vector<2x2xf32>
    %cst_41 = arith.constant dense<0.000000e+00> : vector<2xf32>
    %110 = vector.multi_reduction <add>, %109, %cst_41 [1] : vector<2x2xf32> to vector<2xf32>
    %111 = vector.shape_cast %110 : vector<2xf32> to vector<2x1xf32>
    %112 = tpu.reciprocal %111 {approx = true} : vector<2x1xf32> -> vector<2x1xf32>
    %113 = vector.broadcast %112 : vector<2x1xf32> to vector<2x2xf32>
    %114 = arith.mulf %109, %113 : vector<2x2xf32>
    %115 = vector.extract_strided_slice %14 {offsets = [0, 20], sizes = [2, 4], strides = [1, 1]} : vector<2x32xf32> to vector<2x4xf32>
    %cst_42 = arith.constant dense<0.000000e+00> : vector<2x4xf32>
    %116 = tpu.matmul %114, %115, %cst_42 {dimension_numbers = #tpu.dot_dimension_numbers<[1], [0], [0], [1], [0, 0, 1, 1], [], []>} : vector<2x2xf32>, vector<2x4xf32>, vector<2x4xf32> -> vector<2x4xf32>
    %117 = vector.extract_strided_slice %12 {offsets = [0, 24], sizes = [2, 4], strides = [1, 1]} : vector<2x32xf32> to vector<2x4xf32>
    %118 = vector.extract_strided_slice %13 {offsets = [0, 24], sizes = [2, 4], strides = [1, 1]} : vector<2x32xf32> to vector<2x4xf32>
    %cst_43 = arith.constant dense<0.000000e+00> : vector<2x2xf32>
    %119 = tpu.matmul %117, %118, %cst_43 {dimension_numbers = #tpu.dot_dimension_numbers<[1], [1], [0], [0], [0, 0, 1, 0], [], []>} : vector<2x4xf32>, vector<2x4xf32>, vector<2x2xf32> -> vector<2x2xf32>
    %cst_44 = arith.constant 5.000000e-01 : f32
    %120 = vector.broadcast %cst_44 : f32 to vector<2x2xf32>
    %121 = arith.mulf %119, %120 : vector<2x2xf32>
    %cst_45 = arith.constant dense<0xFF800000> : vector<2xf32>
    %122 = vector.multi_reduction <maximumf>, %121, %cst_45 [1] : vector<2x2xf32> to vector<2xf32>
    %123 = vector.shape_cast %122 : vector<2xf32> to vector<2x1xf32>
    %124 = vector.broadcast %123 : vector<2x1xf32> to vector<2x2xf32>
    %125 = arith.subf %121, %124 : vector<2x2xf32>
    %126 = math.exp %125 : vector<2x2xf32>
    %cst_46 = arith.constant dense<0.000000e+00> : vector<2xf32>
    %127 = vector.multi_reduction <add>, %126, %cst_46 [1] : vector<2x2xf32> to vector<2xf32>
    %128 = vector.shape_cast %127 : vector<2xf32> to vector<2x1xf32>
    %129 = tpu.reciprocal %128 {approx = true} : vector<2x1xf32> -> vector<2x1xf32>
    %130 = vector.broadcast %129 : vector<2x1xf32> to vector<2x2xf32>
    %131 = arith.mulf %126, %130 : vector<2x2xf32>
    %132 = vector.extract_strided_slice %14 {offsets = [0, 24], sizes = [2, 4], strides = [1, 1]} : vector<2x32xf32> to vector<2x4xf32>
    %cst_47 = arith.constant dense<0.000000e+00> : vector<2x4xf32>
    %133 = tpu.matmul %131, %132, %cst_47 {dimension_numbers = #tpu.dot_dimension_numbers<[1], [0], [0], [1], [0, 0, 1, 1], [], []>} : vector<2x2xf32>, vector<2x4xf32>, vector<2x4xf32> -> vector<2x4xf32>
    %134 = vector.extract_strided_slice %12 {offsets = [0, 28], sizes = [2, 4], strides = [1, 1]} : vector<2x32xf32> to vector<2x4xf32>
    %135 = vector.extract_strided_slice %13 {offsets = [0, 28], sizes = [2, 4], strides = [1, 1]} : vector<2x32xf32> to vector<2x4xf32>
    %cst_48 = arith.constant dense<0.000000e+00> : vector<2x2xf32>
    %136 = tpu.matmul %134, %135, %cst_48 {dimension_numbers = #tpu.dot_dimension_numbers<[1], [1], [0], [0], [0, 0, 1, 0], [], []>} : vector<2x4xf32>, vector<2x4xf32>, vector<2x2xf32> -> vector<2x2xf32>
    %cst_49 = arith.constant 5.000000e-01 : f32
    %137 = vector.broadcast %cst_49 : f32 to vector<2x2xf32>
    %138 = arith.mulf %136, %137 : vector<2x2xf32>
    %cst_50 = arith.constant dense<0xFF800000> : vector<2xf32>
    %139 = vector.multi_reduction <maximumf>, %138, %cst_50 [1] : vector<2x2xf32> to vector<2xf32>
    %140 = vector.shape_cast %139 : vector<2xf32> to vector<2x1xf32>
    %141 = vector.broadcast %140 : vector<2x1xf32> to vector<2x2xf32>
    %142 = arith.subf %138, %141 : vector<2x2xf32>
    %143 = math.exp %142 : vector<2x2xf32>
    %cst_51 = arith.constant dense<0.000000e+00> : vector<2xf32>
    %144 = vector.multi_reduction <add>, %143, %cst_51 [1] : vector<2x2xf32> to vector<2xf32>
    %145 = vector.shape_cast %144 : vector<2xf32> to vector<2x1xf32>
    %146 = tpu.reciprocal %145 {approx = true} : vector<2x1xf32> -> vector<2x1xf32>
    %147 = vector.broadcast %146 : vector<2x1xf32> to vector<2x2xf32>
    %148 = arith.mulf %143, %147 : vector<2x2xf32>
    %149 = vector.extract_strided_slice %14 {offsets = [0, 28], sizes = [2, 4], strides = [1, 1]} : vector<2x32xf32> to vector<2x4xf32>
    %cst_52 = arith.constant dense<0.000000e+00> : vector<2x4xf32>
    %150 = tpu.matmul %148, %149, %cst_52 {dimension_numbers = #tpu.dot_dimension_numbers<[1], [0], [0], [1], [0, 0, 1, 1], [], []>} : vector<2x2xf32>, vector<2x4xf32>, vector<2x4xf32> -> vector<2x4xf32>
    %151 = tpu.concatenate %31, %48, %65, %82, %99, %116, %133, %150 in 1 : vector<2x4xf32>, vector<2x4xf32>, vector<2x4xf32>, vector<2x4xf32>, vector<2x4xf32>, vector<2x4xf32>, vector<2x4xf32>, vector<2x4xf32> -> vector<2x32xf32>
    %152 = arith.truncf %151 : vector<2x32xf32> to vector<2x32xbf16>
    %cst_53 = arith.constant dense<0.000000e+00> : vector<2x32xf32>
    %153 = tpu.matmul %152, %6, %cst_53 {dimension_numbers = #tpu.dot_dimension_numbers<[1], [0], [0], [1], [0, 0, 1, 1], [], []>} : vector<2x32xbf16>, vector<32x32xbf16>, vector<2x32xf32> -> vector<2x32xf32>
    %154 = vector.broadcast %7 : vector<1x32xf32> to vector<2x32xf32>
    %155 = arith.addf %153, %154 : vector<2x32xf32>
    %156 = arith.addf %1, %155 : vector<2x32xf32>
    %c0_54 = arith.constant 0 : index
    %c0_55 = arith.constant 0 : index
    %157 = vector.load %arg7[%c0_54, %c0_55] : memref<1x32xf32, #tpu.memory_space<vmem>>, vector<1x32xf32>
    %c0_56 = arith.constant 0 : index
    %c0_57 = arith.constant 0 : index
    %158 = vector.load %arg8[%c0_56, %c0_57] : memref<1x32xf32, #tpu.memory_space<vmem>>, vector<1x32xf32>
    %cst_58 = arith.constant dense<0.000000e+00> : vector<2xf32>
    %159 = vector.multi_reduction <add>, %156, %cst_58 [1] : vector<2x32xf32> to vector<2xf32>
    %160 = vector.shape_cast %159 : vector<2xf32> to vector<2x1xf32>
    %cst_59 = arith.constant 3.200000e+01 : f32
    %161 = vector.broadcast %cst_59 : f32 to vector<2x1xf32>
    %162 = arith.divf %160, %161 : vector<2x1xf32>
    %163 = vector.broadcast %162 : vector<2x1xf32> to vector<2x32xf32>
    %164 = arith.subf %156, %163 : vector<2x32xf32>
    %165 = arith.mulf %164, %164 : vector<2x32xf32>
    %cst_60 = arith.constant dense<0.000000e+00> : vector<2xf32>
    %166 = vector.multi_reduction <add>, %165, %cst_60 [1] : vector<2x32xf32> to vector<2xf32>
    %167 = vector.shape_cast %166 : vector<2xf32> to vector<2x1xf32>
    %cst_61 = arith.constant 3.200000e+01 : f32
    %168 = vector.broadcast %cst_61 : f32 to vector<2x1xf32>
    %169 = arith.divf %167, %168 : vector<2x1xf32>
    %cst_62 = arith.constant 9.99999974E-6 : f32
    %170 = vector.broadcast %cst_62 : f32 to vector<2x1xf32>
    %171 = arith.addf %169, %170 : vector<2x1xf32>
    %172 = math.rsqrt %171 : vector<2x1xf32>
    %173 = vector.broadcast %172 : vector<2x1xf32> to vector<2x32xf32>
    %174 = arith.mulf %164, %173 : vector<2x32xf32>
    %175 = vector.broadcast %157 : vector<1x32xf32> to vector<2x32xf32>
    %176 = arith.mulf %174, %175 : vector<2x32xf32>
    %177 = vector.broadcast %158 : vector<1x32xf32> to vector<2x32xf32>
    %178 = arith.addf %176, %177 : vector<2x32xf32>
    %c0_63 = arith.constant 0 : index
    %c0_64 = arith.constant 0 : index
    %179 = vector.load %arg9[%c0_63, %c0_64] : memref<32x96xbf16, #tpu.memory_space<vmem>>, vector<32x96xbf16>
    %c0_65 = arith.constant 0 : index
    %c0_66 = arith.constant 0 : index
    %180 = vector.load %arg10[%c0_65, %c0_66] : memref<1x96xf32, #tpu.memory_space<vmem>>, vector<1x96xf32>
    %c0_67 = arith.constant 0 : index
    %c0_68 = arith.constant 0 : index
    %181 = vector.load %arg11[%c0_67, %c0_68] : memref<32x32xbf16, #tpu.memory_space<vmem>>, vector<32x32xbf16>
    %c0_69 = arith.constant 0 : index
    %c0_70 = arith.constant 0 : index
    %182 = vector.load %arg12[%c0_69, %c0_70] : memref<1x32xf32, #tpu.memory_space<vmem>>, vector<1x32xf32>
    %183 = vector.extract_strided_slice %179 {offsets = [0, 0], sizes = [32, 32], strides = [1, 1]} : vector<32x96xbf16> to vector<32x32xbf16>
    %184 = arith.truncf %178 : vector<2x32xf32> to vector<2x32xbf16>
    %cst_71 = arith.constant dense<0.000000e+00> : vector<2x32xf32>
    %185 = tpu.matmul %184, %183, %cst_71 {dimension_numbers = #tpu.dot_dimension_numbers<[1], [0], [0], [1], [0, 0, 1, 1], [], []>} : vector<2x32xbf16>, vector<32x32xbf16>, vector<2x32xf32> -> vector<2x32xf32>
    %186 = vector.extract_strided_slice %180 {offsets = [0, 0], sizes = [1, 32], strides = [1, 1]} : vector<1x96xf32> to vector<1x32xf32>
    %187 = vector.broadcast %186 : vector<1x32xf32> to vector<2x32xf32>
    %188 = arith.addf %185, %187 : vector<2x32xf32>
    %189 = vector.extract_strided_slice %179 {offsets = [0, 32], sizes = [32, 64], strides = [1, 1]} : vector<32x96xbf16> to vector<32x64xbf16>
    %190 = arith.truncf %3 : vector<6x32xf32> to vector<6x32xbf16>
    %cst_72 = arith.constant dense<0.000000e+00> : vector<6x64xf32>
    %191 = tpu.matmul %190, %189, %cst_72 {dimension_numbers = #tpu.dot_dimension_numbers<[1], [0], [0], [1], [0, 0, 1, 1], [], []>} : vector<6x32xbf16>, vector<32x64xbf16>, vector<6x64xf32> -> vector<6x64xf32>
    %192 = vector.extract_strided_slice %180 {offsets = [0, 32], sizes = [1, 64], strides = [1, 1]} : vector<1x96xf32> to vector<1x64xf32>
    %193 = vector.broadcast %192 : vector<1x64xf32> to vector<6x64xf32>
    %194 = arith.addf %191, %193 : vector<6x64xf32>
    %195 = vector.extract_strided_slice %194 {offsets = [0, 0], sizes = [6, 32], strides = [1, 1]} : vector<6x64xf32> to vector<6x32xf32>
    %196 = vector.extract_strided_slice %194 {offsets = [0, 32], sizes = [6, 32], strides = [1, 1]} : vector<6x64xf32> to vector<6x32xf32>
    %197 = vector.extract_strided_slice %188 {offsets = [0, 0], sizes = [2, 4], strides = [1, 1]} : vector<2x32xf32> to vector<2x4xf32>
    %198 = vector.extract_strided_slice %195 {offsets = [0, 0], sizes = [6, 4], strides = [1, 1]} : vector<6x32xf32> to vector<6x4xf32>
    %cst_73 = arith.constant dense<0.000000e+00> : vector<2x6xf32>
    %199 = tpu.matmul %197, %198, %cst_73 {dimension_numbers = #tpu.dot_dimension_numbers<[1], [1], [0], [0], [0, 0, 1, 0], [], []>} : vector<2x4xf32>, vector<6x4xf32>, vector<2x6xf32> -> vector<2x6xf32>
    %cst_74 = arith.constant 5.000000e-01 : f32
    %200 = vector.broadcast %cst_74 : f32 to vector<2x6xf32>
    %201 = arith.mulf %199, %200 : vector<2x6xf32>
    %cst_75 = arith.constant dense<0xFF800000> : vector<2xf32>
    %202 = vector.multi_reduction <maximumf>, %201, %cst_75 [1] : vector<2x6xf32> to vector<2xf32>
    %203 = vector.shape_cast %202 : vector<2xf32> to vector<2x1xf32>
    %204 = vector.broadcast %203 : vector<2x1xf32> to vector<2x6xf32>
    %205 = arith.subf %201, %204 : vector<2x6xf32>
    %206 = math.exp %205 : vector<2x6xf32>
    %cst_76 = arith.constant dense<0.000000e+00> : vector<2xf32>
    %207 = vector.multi_reduction <add>, %206, %cst_76 [1] : vector<2x6xf32> to vector<2xf32>
    %208 = vector.shape_cast %207 : vector<2xf32> to vector<2x1xf32>
    %209 = tpu.reciprocal %208 {approx = true} : vector<2x1xf32> -> vector<2x1xf32>
    %210 = vector.broadcast %209 : vector<2x1xf32> to vector<2x6xf32>
    %211 = arith.mulf %206, %210 : vector<2x6xf32>
    %212 = vector.extract_strided_slice %196 {offsets = [0, 0], sizes = [6, 4], strides = [1, 1]} : vector<6x32xf32> to vector<6x4xf32>
    %cst_77 = arith.constant dense<0.000000e+00> : vector<2x4xf32>
    %213 = tpu.matmul %211, %212, %cst_77 {dimension_numbers = #tpu.dot_dimension_numbers<[1], [0], [0], [1], [0, 0, 1, 1], [], []>} : vector<2x6xf32>, vector<6x4xf32>, vector<2x4xf32> -> vector<2x4xf32>
    %214 = vector.extract_strided_slice %188 {offsets = [0, 4], sizes = [2, 4], strides = [1, 1]} : vector<2x32xf32> to vector<2x4xf32>
    %215 = vector.extract_strided_slice %195 {offsets = [0, 4], sizes = [6, 4], strides = [1, 1]} : vector<6x32xf32> to vector<6x4xf32>
    %cst_78 = arith.constant dense<0.000000e+00> : vector<2x6xf32>
    %216 = tpu.matmul %214, %215, %cst_78 {dimension_numbers = #tpu.dot_dimension_numbers<[1], [1], [0], [0], [0, 0, 1, 0], [], []>} : vector<2x4xf32>, vector<6x4xf32>, vector<2x6xf32> -> vector<2x6xf32>
    %cst_79 = arith.constant 5.000000e-01 : f32
    %217 = vector.broadcast %cst_79 : f32 to vector<2x6xf32>
    %218 = arith.mulf %216, %217 : vector<2x6xf32>
    %cst_80 = arith.constant dense<0xFF800000> : vector<2xf32>
    %219 = vector.multi_reduction <maximumf>, %218, %cst_80 [1] : vector<2x6xf32> to vector<2xf32>
    %220 = vector.shape_cast %219 : vector<2xf32> to vector<2x1xf32>
    %221 = vector.broadcast %220 : vector<2x1xf32> to vector<2x6xf32>
    %222 = arith.subf %218, %221 : vector<2x6xf32>
    %223 = math.exp %222 : vector<2x6xf32>
    %cst_81 = arith.constant dense<0.000000e+00> : vector<2xf32>
    %224 = vector.multi_reduction <add>, %223, %cst_81 [1] : vector<2x6xf32> to vector<2xf32>
    %225 = vector.shape_cast %224 : vector<2xf32> to vector<2x1xf32>
    %226 = tpu.reciprocal %225 {approx = true} : vector<2x1xf32> -> vector<2x1xf32>
    %227 = vector.broadcast %226 : vector<2x1xf32> to vector<2x6xf32>
    %228 = arith.mulf %223, %227 : vector<2x6xf32>
    %229 = vector.extract_strided_slice %196 {offsets = [0, 4], sizes = [6, 4], strides = [1, 1]} : vector<6x32xf32> to vector<6x4xf32>
    %cst_82 = arith.constant dense<0.000000e+00> : vector<2x4xf32>
    %230 = tpu.matmul %228, %229, %cst_82 {dimension_numbers = #tpu.dot_dimension_numbers<[1], [0], [0], [1], [0, 0, 1, 1], [], []>} : vector<2x6xf32>, vector<6x4xf32>, vector<2x4xf32> -> vector<2x4xf32>
    %231 = vector.extract_strided_slice %188 {offsets = [0, 8], sizes = [2, 4], strides = [1, 1]} : vector<2x32xf32> to vector<2x4xf32>
    %232 = vector.extract_strided_slice %195 {offsets = [0, 8], sizes = [6, 4], strides = [1, 1]} : vector<6x32xf32> to vector<6x4xf32>
    %cst_83 = arith.constant dense<0.000000e+00> : vector<2x6xf32>
    %233 = tpu.matmul %231, %232, %cst_83 {dimension_numbers = #tpu.dot_dimension_numbers<[1], [1], [0], [0], [0, 0, 1, 0], [], []>} : vector<2x4xf32>, vector<6x4xf32>, vector<2x6xf32> -> vector<2x6xf32>
    %cst_84 = arith.constant 5.000000e-01 : f32
    %234 = vector.broadcast %cst_84 : f32 to vector<2x6xf32>
    %235 = arith.mulf %233, %234 : vector<2x6xf32>
    %cst_85 = arith.constant dense<0xFF800000> : vector<2xf32>
    %236 = vector.multi_reduction <maximumf>, %235, %cst_85 [1] : vector<2x6xf32> to vector<2xf32>
    %237 = vector.shape_cast %236 : vector<2xf32> to vector<2x1xf32>
    %238 = vector.broadcast %237 : vector<2x1xf32> to vector<2x6xf32>
    %239 = arith.subf %235, %238 : vector<2x6xf32>
    %240 = math.exp %239 : vector<2x6xf32>
    %cst_86 = arith.constant dense<0.000000e+00> : vector<2xf32>
    %241 = vector.multi_reduction <add>, %240, %cst_86 [1] : vector<2x6xf32> to vector<2xf32>
    %242 = vector.shape_cast %241 : vector<2xf32> to vector<2x1xf32>
    %243 = tpu.reciprocal %242 {approx = true} : vector<2x1xf32> -> vector<2x1xf32>
    %244 = vector.broadcast %243 : vector<2x1xf32> to vector<2x6xf32>
    %245 = arith.mulf %240, %244 : vector<2x6xf32>
    %246 = vector.extract_strided_slice %196 {offsets = [0, 8], sizes = [6, 4], strides = [1, 1]} : vector<6x32xf32> to vector<6x4xf32>
    %cst_87 = arith.constant dense<0.000000e+00> : vector<2x4xf32>
    %247 = tpu.matmul %245, %246, %cst_87 {dimension_numbers = #tpu.dot_dimension_numbers<[1], [0], [0], [1], [0, 0, 1, 1], [], []>} : vector<2x6xf32>, vector<6x4xf32>, vector<2x4xf32> -> vector<2x4xf32>
    %248 = vector.extract_strided_slice %188 {offsets = [0, 12], sizes = [2, 4], strides = [1, 1]} : vector<2x32xf32> to vector<2x4xf32>
    %249 = vector.extract_strided_slice %195 {offsets = [0, 12], sizes = [6, 4], strides = [1, 1]} : vector<6x32xf32> to vector<6x4xf32>
    %cst_88 = arith.constant dense<0.000000e+00> : vector<2x6xf32>
    %250 = tpu.matmul %248, %249, %cst_88 {dimension_numbers = #tpu.dot_dimension_numbers<[1], [1], [0], [0], [0, 0, 1, 0], [], []>} : vector<2x4xf32>, vector<6x4xf32>, vector<2x6xf32> -> vector<2x6xf32>
    %cst_89 = arith.constant 5.000000e-01 : f32
    %251 = vector.broadcast %cst_89 : f32 to vector<2x6xf32>
    %252 = arith.mulf %250, %251 : vector<2x6xf32>
    %cst_90 = arith.constant dense<0xFF800000> : vector<2xf32>
    %253 = vector.multi_reduction <maximumf>, %252, %cst_90 [1] : vector<2x6xf32> to vector<2xf32>
    %254 = vector.shape_cast %253 : vector<2xf32> to vector<2x1xf32>
    %255 = vector.broadcast %254 : vector<2x1xf32> to vector<2x6xf32>
    %256 = arith.subf %252, %255 : vector<2x6xf32>
    %257 = math.exp %256 : vector<2x6xf32>
    %cst_91 = arith.constant dense<0.000000e+00> : vector<2xf32>
    %258 = vector.multi_reduction <add>, %257, %cst_91 [1] : vector<2x6xf32> to vector<2xf32>
    %259 = vector.shape_cast %258 : vector<2xf32> to vector<2x1xf32>
    %260 = tpu.reciprocal %259 {approx = true} : vector<2x1xf32> -> vector<2x1xf32>
    %261 = vector.broadcast %260 : vector<2x1xf32> to vector<2x6xf32>
    %262 = arith.mulf %257, %261 : vector<2x6xf32>
    %263 = vector.extract_strided_slice %196 {offsets = [0, 12], sizes = [6, 4], strides = [1, 1]} : vector<6x32xf32> to vector<6x4xf32>
    %cst_92 = arith.constant dense<0.000000e+00> : vector<2x4xf32>
    %264 = tpu.matmul %262, %263, %cst_92 {dimension_numbers = #tpu.dot_dimension_numbers<[1], [0], [0], [1], [0, 0, 1, 1], [], []>} : vector<2x6xf32>, vector<6x4xf32>, vector<2x4xf32> -> vector<2x4xf32>
    %265 = vector.extract_strided_slice %188 {offsets = [0, 16], sizes = [2, 4], strides = [1, 1]} : vector<2x32xf32> to vector<2x4xf32>
    %266 = vector.extract_strided_slice %195 {offsets = [0, 16], sizes = [6, 4], strides = [1, 1]} : vector<6x32xf32> to vector<6x4xf32>
    %cst_93 = arith.constant dense<0.000000e+00> : vector<2x6xf32>
    %267 = tpu.matmul %265, %266, %cst_93 {dimension_numbers = #tpu.dot_dimension_numbers<[1], [1], [0], [0], [0, 0, 1, 0], [], []>} : vector<2x4xf32>, vector<6x4xf32>, vector<2x6xf32> -> vector<2x6xf32>
    %cst_94 = arith.constant 5.000000e-01 : f32
    %268 = vector.broadcast %cst_94 : f32 to vector<2x6xf32>
    %269 = arith.mulf %267, %268 : vector<2x6xf32>
    %cst_95 = arith.constant dense<0xFF800000> : vector<2xf32>
    %270 = vector.multi_reduction <maximumf>, %269, %cst_95 [1] : vector<2x6xf32> to vector<2xf32>
    %271 = vector.shape_cast %270 : vector<2xf32> to vector<2x1xf32>
    %272 = vector.broadcast %271 : vector<2x1xf32> to vector<2x6xf32>
    %273 = arith.subf %269, %272 : vector<2x6xf32>
    %274 = math.exp %273 : vector<2x6xf32>
    %cst_96 = arith.constant dense<0.000000e+00> : vector<2xf32>
    %275 = vector.multi_reduction <add>, %274, %cst_96 [1] : vector<2x6xf32> to vector<2xf32>
    %276 = vector.shape_cast %275 : vector<2xf32> to vector<2x1xf32>
    %277 = tpu.reciprocal %276 {approx = true} : vector<2x1xf32> -> vector<2x1xf32>
    %278 = vector.broadcast %277 : vector<2x1xf32> to vector<2x6xf32>
    %279 = arith.mulf %274, %278 : vector<2x6xf32>
    %280 = vector.extract_strided_slice %196 {offsets = [0, 16], sizes = [6, 4], strides = [1, 1]} : vector<6x32xf32> to vector<6x4xf32>
    %cst_97 = arith.constant dense<0.000000e+00> : vector<2x4xf32>
    %281 = tpu.matmul %279, %280, %cst_97 {dimension_numbers = #tpu.dot_dimension_numbers<[1], [0], [0], [1], [0, 0, 1, 1], [], []>} : vector<2x6xf32>, vector<6x4xf32>, vector<2x4xf32> -> vector<2x4xf32>
    %282 = vector.extract_strided_slice %188 {offsets = [0, 20], sizes = [2, 4], strides = [1, 1]} : vector<2x32xf32> to vector<2x4xf32>
    %283 = vector.extract_strided_slice %195 {offsets = [0, 20], sizes = [6, 4], strides = [1, 1]} : vector<6x32xf32> to vector<6x4xf32>
    %cst_98 = arith.constant dense<0.000000e+00> : vector<2x6xf32>
    %284 = tpu.matmul %282, %283, %cst_98 {dimension_numbers = #tpu.dot_dimension_numbers<[1], [1], [0], [0], [0, 0, 1, 0], [], []>} : vector<2x4xf32>, vector<6x4xf32>, vector<2x6xf32> -> vector<2x6xf32>
    %cst_99 = arith.constant 5.000000e-01 : f32
    %285 = vector.broadcast %cst_99 : f32 to vector<2x6xf32>
    %286 = arith.mulf %284, %285 : vector<2x6xf32>
    %cst_100 = arith.constant dense<0xFF800000> : vector<2xf32>
    %287 = vector.multi_reduction <maximumf>, %286, %cst_100 [1] : vector<2x6xf32> to vector<2xf32>
    %288 = vector.shape_cast %287 : vector<2xf32> to vector<2x1xf32>
    %289 = vector.broadcast %288 : vector<2x1xf32> to vector<2x6xf32>
    %290 = arith.subf %286, %289 : vector<2x6xf32>
    %291 = math.exp %290 : vector<2x6xf32>
    %cst_101 = arith.constant dense<0.000000e+00> : vector<2xf32>
    %292 = vector.multi_reduction <add>, %291, %cst_101 [1] : vector<2x6xf32> to vector<2xf32>
    %293 = vector.shape_cast %292 : vector<2xf32> to vector<2x1xf32>
    %294 = tpu.reciprocal %293 {approx = true} : vector<2x1xf32> -> vector<2x1xf32>
    %295 = vector.broadcast %294 : vector<2x1xf32> to vector<2x6xf32>
    %296 = arith.mulf %291, %295 : vector<2x6xf32>
    %297 = vector.extract_strided_slice %196 {offsets = [0, 20], sizes = [6, 4], strides = [1, 1]} : vector<6x32xf32> to vector<6x4xf32>
    %cst_102 = arith.constant dense<0.000000e+00> : vector<2x4xf32>
    %298 = tpu.matmul %296, %297, %cst_102 {dimension_numbers = #tpu.dot_dimension_numbers<[1], [0], [0], [1], [0, 0, 1, 1], [], []>} : vector<2x6xf32>, vector<6x4xf32>, vector<2x4xf32> -> vector<2x4xf32>
    %299 = vector.extract_strided_slice %188 {offsets = [0, 24], sizes = [2, 4], strides = [1, 1]} : vector<2x32xf32> to vector<2x4xf32>
    %300 = vector.extract_strided_slice %195 {offsets = [0, 24], sizes = [6, 4], strides = [1, 1]} : vector<6x32xf32> to vector<6x4xf32>
    %cst_103 = arith.constant dense<0.000000e+00> : vector<2x6xf32>
    %301 = tpu.matmul %299, %300, %cst_103 {dimension_numbers = #tpu.dot_dimension_numbers<[1], [1], [0], [0], [0, 0, 1, 0], [], []>} : vector<2x4xf32>, vector<6x4xf32>, vector<2x6xf32> -> vector<2x6xf32>
    %cst_104 = arith.constant 5.000000e-01 : f32
    %302 = vector.broadcast %cst_104 : f32 to vector<2x6xf32>
    %303 = arith.mulf %301, %302 : vector<2x6xf32>
    %cst_105 = arith.constant dense<0xFF800000> : vector<2xf32>
    %304 = vector.multi_reduction <maximumf>, %303, %cst_105 [1] : vector<2x6xf32> to vector<2xf32>
    %305 = vector.shape_cast %304 : vector<2xf32> to vector<2x1xf32>
    %306 = vector.broadcast %305 : vector<2x1xf32> to vector<2x6xf32>
    %307 = arith.subf %303, %306 : vector<2x6xf32>
    %308 = math.exp %307 : vector<2x6xf32>
    %cst_106 = arith.constant dense<0.000000e+00> : vector<2xf32>
    %309 = vector.multi_reduction <add>, %308, %cst_106 [1] : vector<2x6xf32> to vector<2xf32>
    %310 = vector.shape_cast %309 : vector<2xf32> to vector<2x1xf32>
    %311 = tpu.reciprocal %310 {approx = true} : vector<2x1xf32> -> vector<2x1xf32>
    %312 = vector.broadcast %311 : vector<2x1xf32> to vector<2x6xf32>
    %313 = arith.mulf %308, %312 : vector<2x6xf32>
    %314 = vector.extract_strided_slice %196 {offsets = [0, 24], sizes = [6, 4], strides = [1, 1]} : vector<6x32xf32> to vector<6x4xf32>
    %cst_107 = arith.constant dense<0.000000e+00> : vector<2x4xf32>
    %315 = tpu.matmul %313, %314, %cst_107 {dimension_numbers = #tpu.dot_dimension_numbers<[1], [0], [0], [1], [0, 0, 1, 1], [], []>} : vector<2x6xf32>, vector<6x4xf32>, vector<2x4xf32> -> vector<2x4xf32>
    %316 = vector.extract_strided_slice %188 {offsets = [0, 28], sizes = [2, 4], strides = [1, 1]} : vector<2x32xf32> to vector<2x4xf32>
    %317 = vector.extract_strided_slice %195 {offsets = [0, 28], sizes = [6, 4], strides = [1, 1]} : vector<6x32xf32> to vector<6x4xf32>
    %cst_108 = arith.constant dense<0.000000e+00> : vector<2x6xf32>
    %318 = tpu.matmul %316, %317, %cst_108 {dimension_numbers = #tpu.dot_dimension_numbers<[1], [1], [0], [0], [0, 0, 1, 0], [], []>} : vector<2x4xf32>, vector<6x4xf32>, vector<2x6xf32> -> vector<2x6xf32>
    %cst_109 = arith.constant 5.000000e-01 : f32
    %319 = vector.broadcast %cst_109 : f32 to vector<2x6xf32>
    %320 = arith.mulf %318, %319 : vector<2x6xf32>
    %cst_110 = arith.constant dense<0xFF800000> : vector<2xf32>
    %321 = vector.multi_reduction <maximumf>, %320, %cst_110 [1] : vector<2x6xf32> to vector<2xf32>
    %322 = vector.shape_cast %321 : vector<2xf32> to vector<2x1xf32>
    %323 = vector.broadcast %322 : vector<2x1xf32> to vector<2x6xf32>
    %324 = arith.subf %320, %323 : vector<2x6xf32>
    %325 = math.exp %324 : vector<2x6xf32>
    %cst_111 = arith.constant dense<0.000000e+00> : vector<2xf32>
    %326 = vector.multi_reduction <add>, %325, %cst_111 [1] : vector<2x6xf32> to vector<2xf32>
    %327 = vector.shape_cast %326 : vector<2xf32> to vector<2x1xf32>
    %328 = tpu.reciprocal %327 {approx = true} : vector<2x1xf32> -> vector<2x1xf32>
    %329 = vector.broadcast %328 : vector<2x1xf32> to vector<2x6xf32>
    %330 = arith.mulf %325, %329 : vector<2x6xf32>
    %331 = vector.extract_strided_slice %196 {offsets = [0, 28], sizes = [6, 4], strides = [1, 1]} : vector<6x32xf32> to vector<6x4xf32>
    %cst_112 = arith.constant dense<0.000000e+00> : vector<2x4xf32>
    %332 = tpu.matmul %330, %331, %cst_112 {dimension_numbers = #tpu.dot_dimension_numbers<[1], [0], [0], [1], [0, 0, 1, 1], [], []>} : vector<2x6xf32>, vector<6x4xf32>, vector<2x4xf32> -> vector<2x4xf32>
    %333 = tpu.concatenate %213, %230, %247, %264, %281, %298, %315, %332 in 1 : vector<2x4xf32>, vector<2x4xf32>, vector<2x4xf32>, vector<2x4xf32>, vector<2x4xf32>, vector<2x4xf32>, vector<2x4xf32>, vector<2x4xf32> -> vector<2x32xf32>
    %334 = arith.truncf %333 : vector<2x32xf32> to vector<2x32xbf16>
    %cst_113 = arith.constant dense<0.000000e+00> : vector<2x32xf32>
    %335 = tpu.matmul %334, %181, %cst_113 {dimension_numbers = #tpu.dot_dimension_numbers<[1], [0], [0], [1], [0, 0, 1, 1], [], []>} : vector<2x32xbf16>, vector<32x32xbf16>, vector<2x32xf32> -> vector<2x32xf32>
    %336 = vector.broadcast %182 : vector<1x32xf32> to vector<2x32xf32>
    %337 = arith.addf %335, %336 : vector<2x32xf32>
    %338 = arith.addf %178, %337 : vector<2x32xf32>
    %c0_114 = arith.constant 0 : index
    %c0_115 = arith.constant 0 : index
    %339 = vector.load %arg13[%c0_114, %c0_115] : memref<1x32xf32, #tpu.memory_space<vmem>>, vector<1x32xf32>
    %c0_116 = arith.constant 0 : index
    %c0_117 = arith.constant 0 : index
    %340 = vector.load %arg14[%c0_116, %c0_117] : memref<1x32xf32, #tpu.memory_space<vmem>>, vector<1x32xf32>
    %cst_118 = arith.constant dense<0.000000e+00> : vector<2xf32>
    %341 = vector.multi_reduction <add>, %338, %cst_118 [1] : vector<2x32xf32> to vector<2xf32>
    %342 = vector.shape_cast %341 : vector<2xf32> to vector<2x1xf32>
    %cst_119 = arith.constant 3.200000e+01 : f32
    %343 = vector.broadcast %cst_119 : f32 to vector<2x1xf32>
    %344 = arith.divf %342, %343 : vector<2x1xf32>
    %345 = vector.broadcast %344 : vector<2x1xf32> to vector<2x32xf32>
    %346 = arith.subf %338, %345 : vector<2x32xf32>
    %347 = arith.mulf %346, %346 : vector<2x32xf32>
    %cst_120 = arith.constant dense<0.000000e+00> : vector<2xf32>
    %348 = vector.multi_reduction <add>, %347, %cst_120 [1] : vector<2x32xf32> to vector<2xf32>
    %349 = vector.shape_cast %348 : vector<2xf32> to vector<2x1xf32>
    %cst_121 = arith.constant 3.200000e+01 : f32
    %350 = vector.broadcast %cst_121 : f32 to vector<2x1xf32>
    %351 = arith.divf %349, %350 : vector<2x1xf32>
    %cst_122 = arith.constant 9.99999974E-6 : f32
    %352 = vector.broadcast %cst_122 : f32 to vector<2x1xf32>
    %353 = arith.addf %351, %352 : vector<2x1xf32>
    %354 = math.rsqrt %353 : vector<2x1xf32>
    %355 = vector.broadcast %354 : vector<2x1xf32> to vector<2x32xf32>
    %356 = arith.mulf %346, %355 : vector<2x32xf32>
    %357 = vector.broadcast %339 : vector<1x32xf32> to vector<2x32xf32>
    %358 = arith.mulf %356, %357 : vector<2x32xf32>
    %359 = vector.broadcast %340 : vector<1x32xf32> to vector<2x32xf32>
    %360 = arith.addf %358, %359 : vector<2x32xf32>
    %c0_123 = arith.constant 0 : index
    %c0_124 = arith.constant 0 : index
    %361 = vector.load %arg15[%c0_123, %c0_124] : memref<32x128xbf16, #tpu.memory_space<vmem>>, vector<32x128xbf16>
    %362 = arith.truncf %360 : vector<2x32xf32> to vector<2x32xbf16>
    %cst_125 = arith.constant dense<0.000000e+00> : vector<2x128xf32>
    %363 = tpu.matmul %362, %361, %cst_125 {dimension_numbers = #tpu.dot_dimension_numbers<[1], [0], [0], [1], [0, 0, 1, 1], [], []>} : vector<2x32xbf16>, vector<32x128xbf16>, vector<2x128xf32> -> vector<2x128xf32>
    %c0_126 = arith.constant 0 : index
    %c0_127 = arith.constant 0 : index
    %364 = vector.load %arg16[%c0_126, %c0_127] : memref<1x128xf32, #tpu.memory_space<vmem>>, vector<1x128xf32>
    %365 = vector.broadcast %364 : vector<1x128xf32> to vector<2x128xf32>
    %366 = arith.addf %363, %365 : vector<2x128xf32>
    %cst_128 = arith.constant 0.000000e+00 : f32
    %367 = vector.broadcast %cst_128 : f32 to vector<2x128xf32>
    %368 = arith.maximumf %366, %367 : vector<2x128xf32>
    %c0_129 = arith.constant 0 : index
    %c0_130 = arith.constant 0 : index
    %369 = vector.load %arg17[%c0_129, %c0_130] : memref<128x32xbf16, #tpu.memory_space<vmem>>, vector<128x32xbf16>
    %370 = arith.truncf %368 : vector<2x128xf32> to vector<2x128xbf16>
    %cst_131 = arith.constant dense<0.000000e+00> : vector<2x32xf32>
    %371 = tpu.matmul %370, %369, %cst_131 {dimension_numbers = #tpu.dot_dimension_numbers<[1], [0], [0], [1], [0, 0, 1, 1], [], []>} : vector<2x128xbf16>, vector<128x32xbf16>, vector<2x32xf32> -> vector<2x32xf32>
    %c0_132 = arith.constant 0 : index
    %c0_133 = arith.constant 0 : index
    %372 = vector.load %arg18[%c0_132, %c0_133] : memref<1x32xf32, #tpu.memory_space<vmem>>, vector<1x32xf32>
    %373 = vector.broadcast %372 : vector<1x32xf32> to vector<2x32xf32>
    %374 = arith.addf %371, %373 : vector<2x32xf32>
    %375 = arith.addf %360, %374 : vector<2x32xf32>
    %c0_134 = arith.constant 0 : index
    %c0_135 = arith.constant 0 : index
    %376 = vector.load %arg19[%c0_134, %c0_135] : memref<1x32xf32, #tpu.memory_space<vmem>>, vector<1x32xf32>
    %c0_136 = arith.constant 0 : index
    %c0_137 = arith.constant 0 : index
    %377 = vector.load %arg20[%c0_136, %c0_137] : memref<1x32xf32, #tpu.memory_space<vmem>>, vector<1x32xf32>
    %cst_138 = arith.constant dense<0.000000e+00> : vector<2xf32>
    %378 = vector.multi_reduction <add>, %375, %cst_138 [1] : vector<2x32xf32> to vector<2xf32>
    %379 = vector.shape_cast %378 : vector<2xf32> to vector<2x1xf32>
    %cst_139 = arith.constant 3.200000e+01 : f32
    %380 = vector.broadcast %cst_139 : f32 to vector<2x1xf32>
    %381 = arith.divf %379, %380 : vector<2x1xf32>
    %382 = vector.broadcast %381 : vector<2x1xf32> to vector<2x32xf32>
    %383 = arith.subf %375, %382 : vector<2x32xf32>
    %384 = arith.mulf %383, %383 : vector<2x32xf32>
    %cst_140 = arith.constant dense<0.000000e+00> : vector<2xf32>
    %385 = vector.multi_reduction <add>, %384, %cst_140 [1] : vector<2x32xf32> to vector<2xf32>
    %386 = vector.shape_cast %385 : vector<2xf32> to vector<2x1xf32>
    %cst_141 = arith.constant 3.200000e+01 : f32
    %387 = vector.broadcast %cst_141 : f32 to vector<2x1xf32>
    %388 = arith.divf %386, %387 : vector<2x1xf32>
    %cst_142 = arith.constant 9.99999974E-6 : f32
    %389 = vector.broadcast %cst_142 : f32 to vector<2x1xf32>
    %390 = arith.addf %388, %389 : vector<2x1xf32>
    %391 = math.rsqrt %390 : vector<2x1xf32>
    %392 = vector.broadcast %391 : vector<2x1xf32> to vector<2x32xf32>
    %393 = arith.mulf %383, %392 : vector<2x32xf32>
    %394 = vector.broadcast %376 : vector<1x32xf32> to vector<2x32xf32>
    %395 = arith.mulf %393, %394 : vector<2x32xf32>
    %396 = vector.broadcast %377 : vector<1x32xf32> to vector<2x32xf32>
    %397 = arith.addf %395, %396 : vector<2x32xf32>
    %c0_143 = arith.constant 0 : index
    %c0_144 = arith.constant 0 : index
    %c0_145 = arith.constant 0 : index
    %398 = vector.load %arg21[%c0_143, %c0_144, %c0_145] : memref<1x2x32xf32, #tpu.memory_space<vmem>>, vector<1x2x32xf32>
    %399 = vector.shape_cast %398 : vector<1x2x32xf32> to vector<2x32xf32>
    %400 = vector.shape_cast %397 : vector<2x32xf32> to vector<1x2x32xf32>
    tpu.vector_store %arg21[%c0_143, %c0_144, %c0_145], %400 {strides = array<i32>} : memref<1x2x32xf32, #tpu.memory_space<vmem>>, vector<1x2x32xf32>,
    return
  }
  func.func @transform_0(%arg0: i32) -> (i32, i32, i32) {
    %c0_i32 = arith.constant 0 : i32
    %c0_i32_0 = arith.constant 0 : i32
    %c0_i32_1 = arith.constant 0 : i32
    return %arg0, %c0_i32, %c0_i32_0 : i32, i32, i32
  }
  func.func @transform_1(%arg0: i32) -> (i32, i32, i32) {
    %c0_i32 = arith.constant 0 : i32
    %c0_i32_0 = arith.constant 0 : i32
    %c0_i32_1 = arith.constant 0 : i32
    return %arg0, %c0_i32, %c0_i32_0 : i32, i32, i32
  }
  func.func @transform_2(%arg0: i32) -> (i32, i32) {
    %c0_i32 = arith.constant 0 : i32
    %c0_i32_0 = arith.constant 0 : i32
    %c0_i32_1 = arith.constant 0 : i32
    return %c0_i32, %c0_i32_0 : i32, i32
  }
  func.func @transform_3(%arg0: i32) -> (i32, i32) {
    %c0_i32 = arith.constant 0 : i32
    %c0_i32_0 = arith.constant 0 : i32
    %c0_i32_1 = arith.constant 0 : i32
    return %c0_i32, %c0_i32_0 : i32, i32
  }
  func.func @transform_4(%arg0: i32) -> (i32, i32) {
    %c0_i32 = arith.constant 0 : i32
    %c0_i32_0 = arith.constant 0 : i32
    %c0_i32_1 = arith.constant 0 : i32
    return %c0_i32, %c0_i32_0 : i32, i32
  }
  func.func @transform_5(%arg0: i32) -> (i32, i32) {
    %c0_i32 = arith.constant 0 : i32
    %c0_i32_0 = arith.constant 0 : i32
    %c0_i32_1 = arith.constant 0 : i32
    return %c0_i32, %c0_i32_0 : i32, i32
  }
  func.func @transform_6(%arg0: i32) -> (i32, i32) {
    %c0_i32 = arith.constant 0 : i32
    %c0_i32_0 = arith.constant 0 : i32
    %c0_i32_1 = arith.constant 0 : i32
    return %c0_i32, %c0_i32_0 : i32, i32
  }
  func.func @transform_7(%arg0: i32) -> (i32, i32) {
    %c0_i32 = arith.constant 0 : i32
    %c0_i32_0 = arith.constant 0 : i32
    %c0_i32_1 = arith.constant 0 : i32
    return %c0_i32, %c0_i32_0 : i32, i32
  }
  func.func @transform_8(%arg0: i32) -> (i32, i32) {
    %c0_i32 = arith.constant 0 : i32
    %c0_i32_0 = arith.constant 0 : i32
    %c0_i32_1 = arith.constant 0 : i32
    return %c0_i32, %c0_i32_0 : i32, i32
  }
  func.func @transform_9(%arg0: i32) -> (i32, i32) {
    %c0_i32 = arith.constant 0 : i32
    %c0_i32_0 = arith.constant 0 : i32
    %c0_i32_1 = arith.constant 0 : i32
    return %c0_i32, %c0_i32_0 : i32, i32
  }
  func.func @transform_10(%arg0: i32) -> (i32, i32) {
    %c0_i32 = arith.constant 0 : i32
    %c0_i32_0 = arith.constant 0 : i32
    %c0_i32_1 = arith.constant 0 : i32
    return %c0_i32, %c0_i32_0 : i32, i32
  }
  func.func @transform_11(%arg0: i32) -> (i32, i32) {
    %c0_i32 = arith.constant 0 : i32
    %c0_i32_0 = arith.constant 0 : i32
    %c0_i32_1 = arith.constant 0 : i32
    return %c0_i32, %c0_i32_0 : i32, i32
  }
  func.func @transform_12(%arg0: i32) -> (i32, i32) {
    %c0_i32 = arith.constant 0 : i32
    %c0_i32_0 = arith.constant 0 : i32
    %c0_i32_1 = arith.constant 0 : i32
    return %c0_i32, %c0_i32_0 : i32, i32
  }
  func.func @transform_13(%arg0: i32) -> (i32, i32) {
    %c0_i32 = arith.constant 0 : i32
    %c0_i32_0 = arith.constant 0 : i32
    %c0_i32_1 = arith.constant 0 : i32
    return %c0_i32, %c0_i32_0 : i32, i32
  }
  func.func @transform_14(%arg0: i32) -> (i32, i32) {
    %c0_i32 = arith.constant 0 : i32
    %c0_i32_0 = arith.constant 0 : i32
    %c0_i32_1 = arith.constant 0 : i32
    return %c0_i32, %c0_i32_0 : i32, i32
  }
  func.func @transform_15(%arg0: i32) -> (i32, i32) {
    %c0_i32 = arith.constant 0 : i32
    %c0_i32_0 = arith.constant 0 : i32
    %c0_i32_1 = arith.constant 0 : i32
    return %c0_i32, %c0_i32_0 : i32, i32
  }
  func.func @transform_16(%arg0: i32) -> (i32, i32) {
    %c0_i32 = arith.constant 0 : i32
    %c0_i32_0 = arith.constant 0 : i32
    %c0_i32_1 = arith.constant 0 : i32
    return %c0_i32, %c0_i32_0 : i32, i32
  }
  func.func @transform_17(%arg0: i32) -> (i32, i32) {
    %c0_i32 = arith.constant 0 : i32
    %c0_i32_0 = arith.constant 0 : i32
    %c0_i32_1 = arith.constant 0 : i32
    return %c0_i32, %c0_i32_0 : i32, i32
  }
  func.func @transform_18(%arg0: i32) -> (i32, i32) {
    %c0_i32 = arith.constant 0 : i32
    %c0_i32_0 = arith.constant 0 : i32
    %c0_i32_1 = arith.constant 0 : i32
    return %c0_i32, %c0_i32_0 : i32, i32
  }
  func.func @transform_19(%arg0: i32) -> (i32, i32) {
    %c0_i32 = arith.constant 0 : i32
    %c0_i32_0 = arith.constant 0 : i32
    %c0_i32_1 = arith.constant 0 : i32
    return %c0_i32, %c0_i32_0 : i32, i32
  }
  func.func @transform_20(%arg0: i32) -> (i32, i32, i32) {
    %c0_i32 = arith.constant 0 : i32
    %c0_i32_0 = arith.constant 0 : i32
    %c0_i32_1 = arith.constant 0 : i32
    return %arg0, %c0_i32, %c0_i32_0 : i32, i32, i32
  }
}

</mosaic_0001>

<llo_original>
// kernel: custom_decoder_forward.5
$region0: #{custom_decoder_forward.5}
  #allocation0 [shape = 'u32[]', space=smem, size = 0x4, offset = 0x4, fixed_abs, tag = 'smem constant byte address 0x4 - core index']
  #allocation1 [shape = 'u32[144,128]{1,0:T(1,128)}', space=vmem, size = 0x12000, scoped, tag = 'internal scratch']
  #allocation2 [shape = 'f32[16,128]{1,0:T(8,128)}', space=vmem, size = 0x2000, scoped, tag = 'scratch operand']
  %s0 = inlined_call_operand.vmem [shape: bf16[16,128], index: 0, kind: input, shape index: {}]
  %s1 = inlined_call_operand.vmem [shape: bf16[128,128], index: 1, kind: input, shape index: {}]
  %s2 = inlined_call_operand.vmem [shape: f32[1,128], index: 2, kind: input, shape index: {}]
  %s3 = inlined_call_operand.vmem [shape: f32[16,128], index: 3, kind: output, shape index: {}]
  %s4 = sld [smem:[#allocation0]]
  $region30: #{custom_decoder_forward.5} parent=0
    _
  %s6 = ssub.s32 1, %s4
  %s7 = scalar_select 0, %s6, %s4
  // Predicated region
  $region2: #{custom_decoder_forward.5} parent=0 // pred_check
    _
  $region3: #{custom_decoder_forward.5} parent=0 // pred_check_branch
    %9 = sbr.rel (0) target = $region5
  $region4: #{custom_decoder_forward.5} parent=0 // pred_region
    _
  $region5: #{custom_decoder_forward.5} parent=0 // pred_fallthru
    _
  // Predicated region
  $region6: #{custom_decoder_forward.5} parent=0 // pred_check
    _
  $region7: #{custom_decoder_forward.5} parent=0 // pred_check_branch
    %11 = sbr.rel (0) target = $region9
  $region8: #{custom_decoder_forward.5} parent=0 // pred_region
    _
  $region9: #{custom_decoder_forward.5} parent=0 // pred_fallthru
    _
  // Predicated region
  $region10: #{custom_decoder_forward.5} parent=0 // pred_check
    _
  $region11: #{custom_decoder_forward.5} parent=0 // pred_check_branch
    %13 = sbr.rel (0) target = $region13
  $region12: #{custom_decoder_forward.5} parent=0 // pred_region
    _
  $region13: #{custom_decoder_forward.5} parent=0 // pred_fallthru
    _
  %p15 = scmp.eq.s32.totalorder 0, 0
  // Predicated region
  $region14: #{custom_decoder_forward.5} parent=0 // pred_check
    %p16 = pneg %p15
  $region15: #{custom_decoder_forward.5} parent=0 // pred_check_branch
    %18 = sbr.rel (%p16) target = $region17
  $region16: #{custom_decoder_forward.5} parent=0 // pred_region
    %19 = vst [vmem:[#allocation2] sm:$0xff] 0.0
    %20 = vst [vmem:[#allocation2 + $0x8] sm:$0xff] 0.0
  $region17: #{custom_decoder_forward.5} parent=0 // pred_fallthru
    _
  %v21 = vld [vmem:[#allocation2] sm:$0xff]
  %v22 = vld [vmem:[#allocation2 + $0x8] sm:$0xff]
  %v23 = vld [vmem:[%s0] sm:$0xf]
  %v24 = vld [vmem:[%s0 + $0x4] sm:$0xf]
  %v25 = vld [vmem:[%s1] sm:$0xf]
  %v26 = vld [vmem:[%s1 + $0x4] sm:$0xf]
  %v27 = vld [vmem:[%s1 + $0x8] sm:$0xf]
  %v28 = vld [vmem:[%s1 + $0xc] sm:$0xf]
  %v29 = vld [vmem:[%s1 + $0x10] sm:$0xf]
  %v30 = vld [vmem:[%s1 + $0x14] sm:$0xf]
  %v31 = vld [vmem:[%s1 + $0x18] sm:$0xf]
  %v32 = vld [vmem:[%s1 + $0x1c] sm:$0xf]
  %v33 = vld [vmem:[%s1 + $0x20] sm:$0xf]
  %v34 = vld [vmem:[%s1 + $0x24] sm:$0xf]
  %v35 = vld [vmem:[%s1 + $0x28] sm:$0xf]
  %v36 = vld [vmem:[%s1 + $0x2c] sm:$0xf]
  %v37 = vld [vmem:[%s1 + $0x30] sm:$0xf]
  %v38 = vld [vmem:[%s1 + $0x34] sm:$0xf]
  %v39 = vld [vmem:[%s1 + $0x38] sm:$0xf]
  %v40 = vld [vmem:[%s1 + $0x3c] sm:$0xf]
  %v43 = vunpack.c.l.b16 %v23
  %v44 = vunpack.c.l.b16 %v24
  %v45 = vpack.c.b16 %v44, %v43
  %v63 = vunpack.c.l.b16 %v25
  %v64 = vunpack.c.l.b16 %v26
  %v65 = vunpack.c.l.b16 %v27
  %v66 = vunpack.c.l.b16 %v28
  %v67 = vunpack.c.l.b16 %v29
  %v68 = vunpack.c.l.b16 %v30
  %v69 = vunpack.c.l.b16 %v31
  %v70 = vunpack.c.l.b16 %v32
  %v71 = vunpack.c.l.b16 %v33
  %v72 = vunpack.c.l.b16 %v34
  %v73 = vunpack.c.l.b16 %v35
  %v74 = vunpack.c.l.b16 %v36
  %v75 = vunpack.c.l.b16 %v37
  %v76 = vunpack.c.l.b16 %v38
  %v77 = vunpack.c.l.b16 %v39
  %v78 = vunpack.c.l.b16 %v40
  %v79 = vpack.c.b16 %v64, %v63
  %v80 = vpack.c.b16 %v66, %v65
  %v81 = vpack.c.b16 %v68, %v67
  %v82 = vpack.c.b16 %v70, %v69
  %v83 = vpack.c.b16 %v72, %v71
  %v84 = vpack.c.b16 %v74, %v73
  %v85 = vpack.c.b16 %v76, %v75
  %v86 = vpack.c.b16 %v78, %v77
  %95 = vmatprep.subr.bf16.mxu0 0
  %96 = vmatpush1.bf16.msra.mxu0 %v79
  %97 = vmatprep.subr.bf16.mxu0 0
  %98 = vmatpush1.bf16.msra.mxu0 %v80
  %99 = vmatprep.subr.bf16.mxu0 0
  %100 = vmatpush1.bf16.msra.mxu0 %v81
  %101 = vmatprep.subr.bf16.mxu0 0
  %102 = vmatpush1.bf16.msra.mxu0 %v82
  %103 = vmatprep.subr.bf16.mxu0 0
  %104 = vmatpush1.bf16.msra.mxu0 %v83
  %105 = vmatprep.subr.bf16.mxu0 0
  %106 = vmatpush1.bf16.msra.mxu0 %v84
  %107 = vmatprep.subr.bf16.mxu0 0
  %108 = vmatpush1.bf16.msra.mxu0 %v85
  %109 = vmatprep.subr.bf16.mxu0 0
  %110 = vmatpush1.bf16.msra.mxu0 %v86
  %111 = vmatprep.subr.bf16.mxu0 0
  %112 = vmatpush1.bf16.msra.mxu0 0
  %113 = vmatprep.subr.bf16.mxu0 0
  %114 = vmatpush1.bf16.msra.mxu0 0
  %115 = vmatprep.subr.bf16.mxu0 0
  %116 = vmatpush1.bf16.msra.mxu0 0
  %117 = vmatprep.subr.bf16.mxu0 0
  %118 = vmatpush1.bf16.msra.mxu0 0
  %119 = vmatprep.subr.bf16.mxu0 0
  %120 = vmatpush1.bf16.msra.mxu0 0
  %121 = vmatprep.subr.bf16.mxu0 0
  %122 = vmatpush1.bf16.msra.mxu0 0
  %123 = vmatprep.subr.bf16.mxu0 0
  %124 = vmatpush1.bf16.msra.mxu0 0
  %125 = vmatprep.subr.bf16.mxu0 0
  %126 = vmatpush1.bf16.msra.mxu0 0
  %127 = vmatprep.mubr.bf16.mxu0 0
  %128 = vmatmul.mubr.bf16.gmra.mrb[0].mxu0 %v45
  %v129 = vpop.f32.mrb[0].mxu0
  %v130 = vadd.f32 0.0, %v129
  %v131 = vpop.f32.mrb[0].mxu0
  %v132 = vpop.f32.mrb[0].mxu0
  %v133 = vadd.f32 0.0, %v132
  %v134 = vpop.f32.mrb[0].mxu0
  %135 = vdwg.mxu0
  %v136 = vadd.f32 %v21, %v130
  %v137 = vadd.f32 %v22, %v133
  %138 = vst [vmem:[#allocation2] sm:$0xff] %v136
  %139 = vst [vmem:[#allocation2 + $0x8] sm:$0xff] %v137
  // Predicated region
  $region18: #{custom_decoder_forward.5} parent=0 // pred_check
    %p140 = pneg %p15
  $region19: #{custom_decoder_forward.5} parent=0 // pred_check_branch
    %142 = sbr.rel (%p140) target = $region21
  $region20: #{custom_decoder_forward.5} parent=0 // pred_region
    %v143 = vld [vmem:[#allocation2] sm:$0xff]
    %v144 = vld [vmem:[#allocation2 + $0x8] sm:$0xff]
    %v145 = vld [vmem:[%s2] sm:$0x1]
    %v147 = vlaneseq
    %v148 = vshrl.u32 %v147, 7
    %v149 = vsub.s32 0, %v148
    %v150 = vrot.slane %v145, %v149
    %v152 = vadd.f32 %v143, %v150
    %v153 = vadd.f32 %v144, %v150
    %154 = vst [vmem:[%s3] sm:$0xff] %v152
    %155 = vst [vmem:[%s3 + $0x8] sm:$0xff] %v153
  $region21: #{custom_decoder_forward.5} parent=0 // pred_fallthru
    _
  // Predicated region
  $region22: #{custom_decoder_forward.5} parent=0 // pred_check
    _
  $region23: #{custom_decoder_forward.5} parent=0 // pred_check_branch
    %157 = sbr.rel (0) target = $region25
  $region24: #{custom_decoder_forward.5} parent=0 // pred_region
    _
  $region25: #{custom_decoder_forward.5} parent=0 // pred_fallthru
    _
  // Predicated region
  $region26: #{custom_decoder_forward.5} parent=0 // pred_check
    _
  $region27: #{custom_decoder_forward.5} parent=0 // pred_check_branch
    %159 = sbr.rel (0) target = $region29
  $region28: #{custom_decoder_forward.5} parent=0 // pred_region
    _
  $region29: #{custom_decoder_forward.5} parent=0 // pred_fallthru
    _

// kernel: custom_decoder_forward.3
$region0: #{custom_decoder_forward.3}
  #allocation0 [shape = 'u32[]', space=smem, size = 0x4, offset = 0x4, fixed_abs, tag = 'smem constant byte address 0x4 - core index']
  #allocation1 [shape = 'u32[144,128]{1,0:T(1,128)}', space=vmem, size = 0x12000, scoped, tag = 'internal scratch']
  %s0 = inlined_call_operand.vmem [shape: f32[8,2,32], index: 0, kind: input, shape index: {}]
  %s1 = inlined_call_operand.vmem [shape: f32[8,6,32], index: 1, kind: input, shape index: {}]
  %s2 = inlined_call_operand.vmem [shape: bf16[32,96], index: 2, kind: input, shape index: {}]
  %s3 = inlined_call_operand.vmem [shape: f32[1,96], index: 3, kind: input, shape index: {}]
  %s4 = inlined_call_operand.vmem [shape: bf16[32,32], index: 4, kind: input, shape index: {}]
  %s5 = inlined_call_operand.vmem [shape: f32[1,32], index: 5, kind: input, shape index: {}]
  %s6 = inlined_call_operand.vmem [shape: f32[1,32], index: 6, kind: input, shape index: {}]
  %s7 = inlined_call_operand.vmem [shape: f32[1,32], index: 7, kind: input, shape index: {}]
  %s8 = inlined_call_operand.vmem [shape: bf16[32,96], index: 8, kind: input, shape index: {}]
  %s9 = inlined_call_operand.vmem [shape: f32[1,96], index: 9, kind: input, shape index: {}]
  %s10 = inlined_call_operand.vmem [shape: bf16[32,32], index: 10, kind: input, shape index: {}]
  %s11 = inlined_call_operand.vmem [shape: f32[1,32], index: 11, kind: input, shape index: {}]
  %s12 = inlined_call_operand.vmem [shape: f32[1,32], index: 12, kind: input, shape index: {}]
  %s13 = inlined_call_operand.vmem [shape: f32[1,32], index: 13, kind: input, shape index: {}]
  %s14 = inlined_call_operand.vmem [shape: bf16[32,128], index: 14, kind: input, shape index: {}]
  %s15 = inlined_call_operand.vmem [shape: f32[1,128], index: 15, kind: input, shape index: {}]
  %s16 = inlined_call_operand.vmem [shape: bf16[128,32], index: 16, kind: input, shape index: {}]
  %s17 = inlined_call_operand.vmem [shape: f32[1,32], index: 17, kind: input, shape index: {}]
  %s18 = inlined_call_operand.vmem [shape: f32[1,32], index: 18, kind: input, shape index: {}]
  %s19 = inlined_call_operand.vmem [shape: f32[1,32], index: 19, kind: input, shape index: {}]
  %s20 = inlined_call_operand.vmem [shape: f32[8,2,32], index: 20, kind: output, shape index: {}]
  %s21 = sld [smem:[#allocation0]]
  $region113: #{custom_decoder_forward.3} parent=0
    _
  %s23 = ssub.s32 1, %s21
  %s24 = scalar_select 0, %s23, %s21
  loop: start=0, step=1, limit=10
  $region2: #{custom_decoder_forward.3} parent=0 // loop_pre_header
    _
  $region3: #{custom_decoder_forward.3} parent=0 // loop_header
    %s26 = sphi 0, %s30
    %p27 = scmp.ge.s32.totalorder %s26, 10
    %s36 = sphi 0, %s38
    %s39 = sphi 0, %s36
    %s40 = sphi 0, %s39
    %s56 = sphi 0, %s40
    %s62 = sphi 0, %s64
    %s65 = sphi 0, %s62
    %s66 = sphi 0, %s65
    %s82 = sphi 0, %s66
    %s86 = sphi 0, %s86
    %s88 = sphi 0, %s86
    %s89 = sphi 0, %s88
    %s103 = sphi 0, %s89
    %s107 = sphi 0, %s107
    %s109 = sphi 0, %s107
    %s110 = sphi 0, %s109
    %s124 = sphi 0, %s110
    %s128 = sphi 0, %s128
    %s130 = sphi 0, %s128
    %s131 = sphi 0, %s130
    %s145 = sphi 0, %s131
    %s149 = sphi 0, %s149
    %s151 = sphi 0, %s149
    %s152 = sphi 0, %s151
    %s166 = sphi 0, %s152
    %s170 = sphi 0, %s170
    %s172 = sphi 0, %s170
    %s173 = sphi 0, %s172
    %s187 = sphi 0, %s173
    %s191 = sphi 0, %s191
    %s193 = sphi 0, %s191
    %s194 = sphi 0, %s193
    %s208 = sphi 0, %s194
    %s212 = sphi 0, %s212
    %s214 = sphi 0, %s212
    %s215 = sphi 0, %s214
    %s229 = sphi 0, %s215
    %s233 = sphi 0, %s233
    %s235 = sphi 0, %s233
    %s236 = sphi 0, %s235
    %s250 = sphi 0, %s236
    %s254 = sphi 0, %s254
    %s256 = sphi 0, %s254
    %s257 = sphi 0, %s256
    %s271 = sphi 0, %s257
    %s275 = sphi 0, %s275
    %s277 = sphi 0, %s275
    %s278 = sphi 0, %s277
    %s292 = sphi 0, %s278
    %s296 = sphi 0, %s296
    %s298 = sphi 0, %s296
    %s299 = sphi 0, %s298
    %s313 = sphi 0, %s299
    %s317 = sphi 0, %s317
    %s319 = sphi 0, %s317
    %s320 = sphi 0, %s319
    %s334 = sphi 0, %s320
    %s338 = sphi 0, %s338
    %s340 = sphi 0, %s338
    %s341 = sphi 0, %s340
    %s355 = sphi 0, %s341
    %s359 = sphi 0, %s359
    %s361 = sphi 0, %s359
    %s362 = sphi 0, %s361
    %s376 = sphi 0, %s362
    %s380 = sphi 0, %s380
    %s382 = sphi 0, %s380
    %s383 = sphi 0, %s382
    %s397 = sphi 0, %s383
    %s401 = sphi 0, %s401
    %s403 = sphi 0, %s401
    %s404 = sphi 0, %s403
    %s418 = sphi 0, %s404
    %s422 = sphi 0, %s422
    %s424 = sphi 0, %s422
    %s425 = sphi 0, %s424
    %s439 = sphi 0, %s425
    %s443 = sphi 0, %s443
    %s445 = sphi 0, %s443
    %s446 = sphi 0, %s445
    %s460 = sphi 0, %s446
    %s466 = sphi 0, %s468
    %s469 = sphi 0, %s466
    %s470 = sphi 0, %s469
    %s486 = sphi 0, %s470
  $region4: #{custom_decoder_forward.3} parent=0 // loop_header_branch
    %29 = sbr.rel (%p27) target = $region8
  $region5: #{custom_decoder_forward.3} parent=0 // loop_body
    %s31 = ssub.s32 %s26, 1
    %s32 = ssub.s32 %s26, 2
    %s33 = sadd.s32 %s26, 1
    %s34 = ssub.s32 %s26, %s33
    %p35 = scmp.eq.s32.totalorder %s34, 0
    %s37 = sadd.s32 %s36, 1
    %s38 = scalar_select %p35, %s36, %s37
    %p41 = pneg %p35
    %p42 = scmp.eq.s32.totalorder %s26, 7
    %p43 = por %p41, %p42
    %p44 = scmp.ne.s32.totalorder %s36, %s39
    %p45 = scmp.eq.s32.totalorder %s26, 0
    %p46 = por %p44, %p45
    %p47 = scmp.ne.s32.totalorder %s36, %s39
    %p48 = scmp.eq.s32.totalorder %s31, 7
    %p49 = por %p47, %p48
    %p50 = scmp.ne.s32.totalorder %s39, %s40
    %p51 = scmp.eq.s32.totalorder %s31, 0
    %p52 = por %p50, %p51
    %p53 = scmp.ne.s32.totalorder %s39, %s40
    %p54 = scmp.eq.s32.totalorder %s32, 7
    %p55 = por %p53, %p54
    %p57 = scmp.ne.s32.totalorder %s40, %s56
    %p58 = scmp.eq.s32.totalorder %s32, 0
    %p59 = por %p57, %p58
    %s60 = ssub.s32 %s26, %s33
    %p61 = scmp.eq.s32.totalorder %s60, 0
    %s63 = sadd.s32 %s62, 1
    %s64 = scalar_select %p61, %s62, %s63
    %p67 = pneg %p61
    %p68 = scmp.eq.s32.totalorder %s26, 7
    %p69 = por %p67, %p68
    %p70 = scmp.ne.s32.totalorder %s62, %s65
    %p71 = scmp.eq.s32.totalorder %s26, 0
    %p72 = por %p70, %p71
    %p73 = scmp.ne.s32.totalorder %s62, %s65
    %p74 = scmp.eq.s32.totalorder %s31, 7
    %p75 = por %p73, %p74
    %p76 = scmp.ne.s32.totalorder %s65, %s66
    %p77 = scmp.eq.s32.totalorder %s31, 0
    %p78 = por %p76, %p77
    %p79 = scmp.ne.s32.totalorder %s65, %s66
    %p80 = scmp.eq.s32.totalorder %s32, 7
    %p81 = por %p79, %p80
    %p83 = scmp.ne.s32.totalorder %s66, %s82
    %p84 = scmp.eq.s32.totalorder %s32, 0
    %p85 = por %p83, %p84
    %s87 = sadd.s32 %s86, 1
    %p90 = scmp.eq.s32.totalorder %s26, 7
    %p91 = scmp.ne.s32.totalorder %s86, %s88
    %p92 = scmp.eq.s32.totalorder %s26, 0
    %p93 = por %p91, %p92
    %p94 = scmp.ne.s32.totalorder %s86, %s88
    %p95 = scmp.eq.s32.totalorder %s31, 7
    %p96 = por %p94, %p95
    %p97 = scmp.ne.s32.totalorder %s88, %s89
    %p98 = scmp.eq.s32.totalorder %s31, 0
    %p99 = por %p97, %p98
    %p100 = scmp.ne.s32.totalorder %s88, %s89
    %p101 = scmp.eq.s32.totalorder %s32, 7
    %p102 = por %p100, %p101
    %p104 = scmp.ne.s32.totalorder %s89, %s103
    %p105 = scmp.eq.s32.totalorder %s32, 0
    %p106 = por %p104, %p105
    %s108 = sadd.s32 %s107, 1
    %p111 = scmp.eq.s32.totalorder %s26, 7
    %p112 = scmp.ne.s32.totalorder %s107, %s109
    %p113 = scmp.eq.s32.totalorder %s26, 0
    %p114 = por %p112, %p113
    %p115 = scmp.ne.s32.totalorder %s107, %s109
    %p116 = scmp.eq.s32.totalorder %s31, 7
    %p117 = por %p115, %p116
    %p118 = scmp.ne.s32.totalorder %s109, %s110
    %p119 = scmp.eq.s32.totalorder %s31, 0
    %p120 = por %p118, %p119
    %p121 = scmp.ne.s32.totalorder %s109, %s110
    %p122 = scmp.eq.s32.totalorder %s32, 7
    %p123 = por %p121, %p122
    %p125 = scmp.ne.s32.totalorder %s110, %s124
    %p126 = scmp.eq.s32.totalorder %s32, 0
    %p127 = por %p125, %p126
    %s129 = sadd.s32 %s128, 1
    %p132 = scmp.eq.s32.totalorder %s26, 7
    %p133 = scmp.ne.s32.totalorder %s128, %s130
    %p134 = scmp.eq.s32.totalorder %s26, 0
    %p135 = por %p133, %p134
    %p136 = scmp.ne.s32.totalorder %s128, %s130
    %p137 = scmp.eq.s32.totalorder %s31, 7
    %p138 = por %p136, %p137
    %p139 = scmp.ne.s32.totalorder %s130, %s131
    %p140 = scmp.eq.s32.totalorder %s31, 0
    %p141 = por %p139, %p140
    %p142 = scmp.ne.s32.totalorder %s130, %s131
    %p143 = scmp.eq.s32.totalorder %s32, 7
    %p144 = por %p142, %p143
    %p146 = scmp.ne.s32.totalorder %s131, %s145
    %p147 = scmp.eq.s32.totalorder %s32, 0
    %p148 = por %p146, %p147
    %s150 = sadd.s32 %s149, 1
    %p153 = scmp.eq.s32.totalorder %s26, 7
    %p154 = scmp.ne.s32.totalorder %s149, %s151
    %p155 = scmp.eq.s32.totalorder %s26, 0
    %p156 = por %p154, %p155
    %p157 = scmp.ne.s32.totalorder %s149, %s151
    %p158 = scmp.eq.s32.totalorder %s31, 7
    %p159 = por %p157, %p158
    %p160 = scmp.ne.s32.totalorder %s151, %s152
    %p161 = scmp.eq.s32.totalorder %s31, 0
    %p162 = por %p160, %p161
    %p163 = scmp.ne.s32.totalorder %s151, %s152
    %p164 = scmp.eq.s32.totalorder %s32, 7
    %p165 = por %p163, %p164
    %p167 = scmp.ne.s32.totalorder %s152, %s166
    %p168 = scmp.eq.s32.totalorder %s32, 0
    %p169 = por %p167, %p168
    %s171 = sadd.s32 %s170, 1
    %p174 = scmp.eq.s32.totalorder %s26, 7
    %p175 = scmp.ne.s32.totalorder %s170, %s172
    %p176 = scmp.eq.s32.totalorder %s26, 0
    %p177 = por %p175, %p176
    %p178 = scmp.ne.s32.totalorder %s170, %s172
    %p179 = scmp.eq.s32.totalorder %s31, 7
    %p180 = por %p178, %p179
    %p181 = scmp.ne.s32.totalorder %s172, %s173
    %p182 = scmp.eq.s32.totalorder %s31, 0
    %p183 = por %p181, %p182
    %p184 = scmp.ne.s32.totalorder %s172, %s173
    %p185 = scmp.eq.s32.totalorder %s32, 7
    %p186 = por %p184, %p185
    %p188 = scmp.ne.s32.totalorder %s173, %s187
    %p189 = scmp.eq.s32.totalorder %s32, 0
    %p190 = por %p188, %p189
    %s192 = sadd.s32 %s191, 1
    %p195 = scmp.eq.s32.totalorder %s26, 7
    %p196 = scmp.ne.s32.totalorder %s191, %s193
    %p197 = scmp.eq.s32.totalorder %s26, 0
    %p198 = por %p196, %p197
    %p199 = scmp.ne.s32.totalorder %s191, %s193
    %p200 = scmp.eq.s32.totalorder %s31, 7
    %p201 = por %p199, %p200
    %p202 = scmp.ne.s32.totalorder %s193, %s194
    %p203 = scmp.eq.s32.totalorder %s31, 0
    %p204 = por %p202, %p203
    %p205 = scmp.ne.s32.totalorder %s193, %s194
    %p206 = scmp.eq.s32.totalorder %s32, 7
    %p207 = por %p205, %p206
    %p209 = scmp.ne.s32.totalorder %s194, %s208
    %p210 = scmp.eq.s32.totalorder %s32, 0
    %p211 = por %p209, %p210
    %s213 = sadd.s32 %s212, 1
    %p216 = scmp.eq.s32.totalorder %s26, 7
    %p217 = scmp.ne.s32.totalorder %s212, %s214
    %p218 = scmp.eq.s32.totalorder %s26, 0
    %p219 = por %p217, %p218
    %p220 = scmp.ne.s32.totalorder %s212, %s214
    %p221 = scmp.eq.s32.totalorder %s31, 7
    %p222 = por %p220, %p221
    %p223 = scmp.ne.s32.totalorder %s214, %s215
    %p224 = scmp.eq.s32.totalorder %s31, 0
    %p225 = por %p223, %p224
    %p226 = scmp.ne.s32.totalorder %s214, %s215
    %p227 = scmp.eq.s32.totalorder %s32, 7
    %p228 = por %p226, %p227
    %p230 = scmp.ne.s32.totalorder %s215, %s229
    %p231 = scmp.eq.s32.totalorder %s32, 0
    %p232 = por %p230, %p231
    %s234 = sadd.s32 %s233, 1
    %p237 = scmp.eq.s32.totalorder %s26, 7
    %p238 = scmp.ne.s32.totalorder %s233, %s235
    %p239 = scmp.eq.s32.totalorder %s26, 0
    %p240 = por %p238, %p239
    %p241 = scmp.ne.s32.totalorder %s233, %s235
    %p242 = scmp.eq.s32.totalorder %s31, 7
    %p243 = por %p241, %p242
    %p244 = scmp.ne.s32.totalorder %s235, %s236
    %p245 = scmp.eq.s32.totalorder %s31, 0
    %p246 = por %p244, %p245
    %p247 = scmp.ne.s32.totalorder %s235, %s236
    %p248 = scmp.eq.s32.totalorder %s32, 7
    %p249 = por %p247, %p248
    %p251 = scmp.ne.s32.totalorder %s236, %s250
    %p252 = scmp.eq.s32.totalorder %s32, 0
    %p253 = por %p251, %p252
    %s255 = sadd.s32 %s254, 1
    %p258 = scmp.eq.s32.totalorder %s26, 7
    %p259 = scmp.ne.s32.totalorder %s254, %s256
    %p260 = scmp.eq.s32.totalorder %s26, 0
    %p261 = por %p259, %p260
    %p262 = scmp.ne.s32.totalorder %s254, %s256
    %p263 = scmp.eq.s32.totalorder %s31, 7
    %p264 = por %p262, %p263
    %p265 = scmp.ne.s32.totalorder %s256, %s257
    %p266 = scmp.eq.s32.totalorder %s31, 0
    %p267 = por %p265, %p266
    %p268 = scmp.ne.s32.totalorder %s256, %s257
    %p269 = scmp.eq.s32.totalorder %s32, 7
    %p270 = por %p268, %p269
    %p272 = scmp.ne.s32.totalorder %s257, %s271
    %p273 = scmp.eq.s32.totalorder %s32, 0
    %p274 = por %p272, %p273
    %s276 = sadd.s32 %s275, 1
    %p279 = scmp.eq.s32.totalorder %s26, 7
    %p280 = scmp.ne.s32.totalorder %s275, %s277
    %p281 = scmp.eq.s32.totalorder %s26, 0
    %p282 = por %p280, %p281
    %p283 = scmp.ne.s32.totalorder %s275, %s277
    %p284 = scmp.eq.s32.totalorder %s31, 7
    %p285 = por %p283, %p284
    %p286 = scmp.ne.s32.totalorder %s277, %s278
    %p287 = scmp.eq.s32.totalorder %s31, 0
    %p288 = por %p286, %p287
    %p289 = scmp.ne.s32.totalorder %s277, %s278
    %p290 = scmp.eq.s32.totalorder %s32, 7
    %p291 = por %p289, %p290
    %p293 = scmp.ne.s32.totalorder %s278, %s292
    %p294 = scmp.eq.s32.totalorder %s32, 0
    %p295 = por %p293, %p294
    %s297 = sadd.s32 %s296, 1
    %p300 = scmp.eq.s32.totalorder %s26, 7
    %p301 = scmp.ne.s32.totalorder %s296, %s298
    %p302 = scmp.eq.s32.totalorder %s26, 0
    %p303 = por %p301, %p302
    %p304 = scmp.ne.s32.totalorder %s296, %s298
    %p305 = scmp.eq.s32.totalorder %s31, 7
    %p306 = por %p304, %p305
    %p307 = scmp.ne.s32.totalorder %s298, %s299
    %p308 = scmp.eq.s32.totalorder %s31, 0
    %p309 = por %p307, %p308
    %p310 = scmp.ne.s32.totalorder %s298, %s299
    %p311 = scmp.eq.s32.totalorder %s32, 7
    %p312 = por %p310, %p311
    %p314 = scmp.ne.s32.totalorder %s299, %s313
    %p315 = scmp.eq.s32.totalorder %s32, 0
    %p316 = por %p314, %p315
    %s318 = sadd.s32 %s317, 1
    %p321 = scmp.eq.s32.totalorder %s26, 7
    %p322 = scmp.ne.s32.totalorder %s317, %s319
    %p323 = scmp.eq.s32.totalorder %s26, 0
    %p324 = por %p322, %p323
    %p325 = scmp.ne.s32.totalorder %s317, %s319
    %p326 = scmp.eq.s32.totalorder %s31, 7
    %p327 = por %p325, %p326
    %p328 = scmp.ne.s32.totalorder %s319, %s320
    %p329 = scmp.eq.s32.totalorder %s31, 0
    %p330 = por %p328, %p329
    %p331 = scmp.ne.s32.totalorder %s319, %s320
    %p332 = scmp.eq.s32.totalorder %s32, 7
    %p333 = por %p331, %p332
    %p335 = scmp.ne.s32.totalorder %s320, %s334
    %p336 = scmp.eq.s32.totalorder %s32, 0
    %p337 = por %p335, %p336
    %s339 = sadd.s32 %s338, 1
    %p342 = scmp.eq.s32.totalorder %s26, 7
    %p343 = scmp.ne.s32.totalorder %s338, %s340
    %p344 = scmp.eq.s32.totalorder %s26, 0
    %p345 = por %p343, %p344
    %p346 = scmp.ne.s32.totalorder %s338, %s340
    %p347 = scmp.eq.s32.totalorder %s31, 7
    %p348 = por %p346, %p347
    %p349 = scmp.ne.s32.totalorder %s340, %s341
    %p350 = scmp.eq.s32.totalorder %s31, 0
    %p351 = por %p349, %p350
    %p352 = scmp.ne.s32.totalorder %s340, %s341
    %p353 = scmp.eq.s32.totalorder %s32, 7
    %p354 = por %p352, %p353
    %p356 = scmp.ne.s32.totalorder %s341, %s355
    %p357 = scmp.eq.s32.totalorder %s32, 0
    %p358 = por %p356, %p357
    %s360 = sadd.s32 %s359, 1
    %p363 = scmp.eq.s32.totalorder %s26, 7
    %p364 = scmp.ne.s32.totalorder %s359, %s361
    %p365 = scmp.eq.s32.totalorder %s26, 0
    %p366 = por %p364, %p365
    %p367 = scmp.ne.s32.totalorder %s359, %s361
    %p368 = scmp.eq.s32.totalorder %s31, 7
    %p369 = por %p367, %p368
    %p370 = scmp.ne.s32.totalorder %s361, %s362
    %p371 = scmp.eq.s32.totalorder %s31, 0
    %p372 = por %p370, %p371
    %p373 = scmp.ne.s32.totalorder %s361, %s362
    %p374 = scmp.eq.s32.totalorder %s32, 7
    %p375 = por %p373, %p374
    %p377 = scmp.ne.s32.totalorder %s362, %s376
    %p378 = scmp.eq.s32.totalorder %s32, 0
    %p379 = por %p377, %p378
    %s381 = sadd.s32 %s380, 1
    %p384 = scmp.eq.s32.totalorder %s26, 7
    %p385 = scmp.ne.s32.totalorder %s380, %s382
    %p386 = scmp.eq.s32.totalorder %s26, 0
    %p387 = por %p385, %p386
    %p388 = scmp.ne.s32.totalorder %s380, %s382
    %p389 = scmp.eq.s32.totalorder %s31, 7
    %p390 = por %p388, %p389
    %p391 = scmp.ne.s32.totalorder %s382, %s383
    %p392 = scmp.eq.s32.totalorder %s31, 0
    %p393 = por %p391, %p392
    %p394 = scmp.ne.s32.totalorder %s382, %s383
    %p395 = scmp.eq.s32.totalorder %s32, 7
    %p396 = por %p394, %p395
    %p398 = scmp.ne.s32.totalorder %s383, %s397
    %p399 = scmp.eq.s32.totalorder %s32, 0
    %p400 = por %p398, %p399
    %s402 = sadd.s32 %s401, 1
    %p405 = scmp.eq.s32.totalorder %s26, 7
    %p406 = scmp.ne.s32.totalorder %s401, %s403
    %p407 = scmp.eq.s32.totalorder %s26, 0
    %p408 = por %p406, %p407
    %p409 = scmp.ne.s32.totalorder %s401, %s403
    %p410 = scmp.eq.s32.totalorder %s31, 7
    %p411 = por %p409, %p410
    %p412 = scmp.ne.s32.totalorder %s403, %s404
    %p413 = scmp.eq.s32.totalorder %s31, 0
    %p414 = por %p412, %p413
    %p415 = scmp.ne.s32.totalorder %s403, %s404
    %p416 = scmp.eq.s32.totalorder %s32, 7
    %p417 = por %p415, %p416
    %p419 = scmp.ne.s32.totalorder %s404, %s418
    %p420 = scmp.eq.s32.totalorder %s32, 0
    %p421 = por %p419, %p420
    %s423 = sadd.s32 %s422, 1
    %p426 = scmp.eq.s32.totalorder %s26, 7
    %p427 = scmp.ne.s32.totalorder %s422, %s424
    %p428 = scmp.eq.s32.totalorder %s26, 0
    %p429 = por %p427, %p428
    %p430 = scmp.ne.s32.totalorder %s422, %s424
    %p431 = scmp.eq.s32.totalorder %s31, 7
    %p432 = por %p430, %p431
    %p433 = scmp.ne.s32.totalorder %s424, %s425
    %p434 = scmp.eq.s32.totalorder %s31, 0
    %p435 = por %p433, %p434
    %p436 = scmp.ne.s32.totalorder %s424, %s425
    %p437 = scmp.eq.s32.totalorder %s32, 7
    %p438 = por %p436, %p437
    %p440 = scmp.ne.s32.totalorder %s425, %s439
    %p441 = scmp.eq.s32.totalorder %s32, 0
    %p442 = por %p440, %p441
    %s444 = sadd.s32 %s443, 1
    %p447 = scmp.eq.s32.totalorder %s26, 7
    %p448 = scmp.ne.s32.totalorder %s443, %s445
    %p449 = scmp.eq.s32.totalorder %s26, 0
    %p450 = por %p448, %p449
    %p451 = scmp.ne.s32.totalorder %s443, %s445
    %p452 = scmp.eq.s32.totalorder %s31, 7
    %p453 = por %p451, %p452
    %p454 = scmp.ne.s32.totalorder %s445, %s446
    %p455 = scmp.eq.s32.totalorder %s31, 0
    %p456 = por %p454, %p455
    %p457 = scmp.ne.s32.totalorder %s445, %s446
    %p458 = scmp.eq.s32.totalorder %s32, 7
    %p459 = por %p457, %p458
    %p461 = scmp.ne.s32.totalorder %s446, %s460
    %p462 = scmp.eq.s32.totalorder %s32, 0
    %p463 = por %p461, %p462
    %s464 = ssub.s32 %s26, %s33
    %p465 = scmp.eq.s32.totalorder %s464, 0
    %s467 = sadd.s32 %s466, 1
    %s468 = scalar_select %p465, %s466, %s467
    %p471 = pneg %p465
    %p472 = scmp.eq.s32.totalorder %s26, 7
    %p473 = por %p471, %p472
    %p474 = scmp.ne.s32.totalorder %s466, %s469
    %p475 = scmp.eq.s32.totalorder %s26, 0
    %p476 = por %p474, %p475
    %p477 = scmp.ne.s32.totalorder %s466, %s469
    %p478 = scmp.eq.s32.totalorder %s31, 7
    %p479 = por %p477, %p478
    %p480 = scmp.ne.s32.totalorder %s469, %s470
    %p481 = scmp.eq.s32.totalorder %s31, 0
    %p482 = por %p480, %p481
    %p483 = scmp.ne.s32.totalorder %s469, %s470
    %p484 = scmp.eq.s32.totalorder %s32, 7
    %p485 = por %p483, %p484
    %p487 = scmp.ne.s32.totalorder %s470, %s486
    %p488 = scmp.eq.s32.totalorder %s32, 0
    %p489 = por %p487, %p488
    %p490 = scmp.le.s32.totalorder 1, %s26
    %p491 = scmp.lt.s32.totalorder %s26, 9
    %p492 = pnand %p490, %p491
    %p493 = pneg %p492
    // Predicated region
    $region9: #{custom_decoder_forward.3} parent=5 // pred_check
      _
    $region10: #{custom_decoder_forward.3} parent=5 // pred_check_branch
      %495 = sbr.rel (%p492) target = $region12
    $region11: #{custom_decoder_forward.3} parent=5 // pred_region
      %s496 = ssub.s32 %s26, 1
      // Predicated region
      $region13: #{custom_decoder_forward.3} parent=11 // pred_check
        %p497 = pneg %p99
      $region14: #{custom_decoder_forward.3} parent=11 // pred_check_branch
        %499 = sbr.rel (%p497) target = $region16
      $region15: #{custom_decoder_forward.3} parent=11 // pred_region
        _
      $region16: #{custom_decoder_forward.3} parent=11 // pred_fallthru
        _
      // Predicated region
      $region17: #{custom_decoder_forward.3} parent=11 // pred_check
        %p500 = pneg %p120
      $region18: #{custom_decoder_forward.3} parent=11 // pred_check_branch
        %502 = sbr.rel (%p500) target = $region20
      $region19: #{custom_decoder_forward.3} parent=11 // pred_region
        _
      $region20: #{custom_decoder_forward.3} parent=11 // pred_fallthru
        _
      // Predicated region
      $region21: #{custom_decoder_forward.3} parent=11 // pred_check
        %p503 = pneg %p141
      $region22: #{custom_decoder_forward.3} parent=11 // pred_check_branch
        %505 = sbr.rel (%p503) target = $region24
      $region23: #{custom_decoder_forward.3} parent=11 // pred_region
        _
      $region24: #{custom_decoder_forward.3} parent=11 // pred_fallthru
        _
      // Predicated region
      $region25: #{custom_decoder_forward.3} parent=11 // pred_check
        %p506 = pneg %p162
      $region26: #{custom_decoder_forward.3} parent=11 // pred_check_branch
        %508 = sbr.rel (%p506) target = $region28
      $region27: #{custom_decoder_forward.3} parent=11 // pred_region
        _
      $region28: #{custom_decoder_forward.3} parent=11 // pred_fallthru
        _
      // Predicated region
      $region29: #{custom_decoder_forward.3} parent=11 // pred_check
        %p509 = pneg %p183
      $region30: #{custom_decoder_forward.3} parent=11 // pred_check_branch
        %511 = sbr.rel (%p509) target = $region32
      $region31: #{custom_decoder_forward.3} parent=11 // pred_region
        _
      $region32: #{custom_decoder_forward.3} parent=11 // pred_fallthru
        _
      // Predicated region
      $region33: #{custom_decoder_forward.3} parent=11 // pred_check
        %p512 = pneg %p204
      $region34: #{custom_decoder_forward.3} parent=11 // pred_check_branch
        %514 = sbr.rel (%p512) target = $region36
      $region35: #{custom_decoder_forward.3} parent=11 // pred_region
        _
      $region36: #{custom_decoder_forward.3} parent=11 // pred_fallthru
        _
      // Predicated region
      $region37: #{custom_decoder_forward.3} parent=11 // pred_check
        %p515 = pneg %p225
      $region38: #{custom_decoder_forward.3} parent=11 // pred_check_branch
        %517 = sbr.rel (%p515) target = $region40
      $region39: #{custom_decoder_forward.3} parent=11 // pred_region
        _
      $region40: #{custom_decoder_forward.3} parent=11 // pred_fallthru
        _
      // Predicated region
      $region41: #{custom_decoder_forward.3} parent=11 // pred_check
        %p518 = pneg %p246
      $region42: #{custom_decoder_forward.3} parent=11 // pred_check_branch
        %520 = sbr.rel (%p518) target = $region44
      $region43: #{custom_decoder_forward.3} parent=11 // pred_region
        _
      $region44: #{custom_decoder_forward.3} parent=11 // pred_fallthru
        _
      // Predicated region
      $region45: #{custom_decoder_forward.3} parent=11 // pred_check
        %p521 = pneg %p267
      $region46: #{custom_decoder_forward.3} parent=11 // pred_check_branch
        %523 = sbr.rel (%p521) target = $region48
      $region47: #{custom_decoder_forward.3} parent=11 // pred_region
        _
      $region48: #{custom_decoder_forward.3} parent=11 // pred_fallthru
        _
      // Predicated region
      $region49: #{custom_decoder_forward.3} parent=11 // pred_check
        %p524 = pneg %p288
      $region50: #{custom_decoder_forward.3} parent=11 // pred_check_branch
        %526 = sbr.rel (%p524) target = $region52
      $region51: #{custom_decoder_forward.3} parent=11 // pred_region
        _
      $region52: #{custom_decoder_forward.3} parent=11 // pred_fallthru
        _
      // Predicated region
      $region53: #{custom_decoder_forward.3} parent=11 // pred_check
        %p527 = pneg %p309
      $region54: #{custom_decoder_forward.3} parent=11 // pred_check_branch
        %529 = sbr.rel (%p527) target = $region56
      $region55: #{custom_decoder_forward.3} parent=11 // pred_region
        _
      $region56: #{custom_decoder_forward.3} parent=11 // pred_fallthru
        _
      // Predicated region
      $region57: #{custom_decoder_forward.3} parent=11 // pred_check
        %p530 = pneg %p330
      $region58: #{custom_decoder_forward.3} parent=11 // pred_check_branch
        %532 = sbr.rel (%p530) target = $region60
      $region59: #{custom_decoder_forward.3} parent=11 // pred_region
        _
      $region60: #{custom_decoder_forward.3} parent=11 // pred_fallthru
        _
      // Predicated region
      $region61: #{custom_decoder_forward.3} parent=11 // pred_check
        %p533 = pneg %p351
      $region62: #{custom_decoder_forward.3} parent=11 // pred_check_branch
        %535 = sbr.rel (%p533) target = $region64
      $region63: #{custom_decoder_forward.3} parent=11 // pred_region
        _
      $region64: #{custom_decoder_forward.3} parent=11 // pred_fallthru
        _
      // Predicated region
      $region65: #{custom_decoder_forward.3} parent=11 // pred_check
        %p536 = pneg %p372
      $region66: #{custom_decoder_forward.3} parent=11 // pred_check_branch
        %538 = sbr.rel (%p536) target = $region68
      $region67: #{custom_decoder_forward.3} parent=11 // pred_region
        _
      $region68: #{custom_decoder_forward.3} parent=11 // pred_fallthru
        _
      // Predicated region
      $region69: #{custom_decoder_forward.3} parent=11 // pred_check
        %p539 = pneg %p393
      $region70: #{custom_decoder_forward.3} parent=11 // pred_check_branch
        %541 = sbr.rel (%p539) target = $region72
      $region71: #{custom_decoder_forward.3} parent=11 // pred_region
        _
      $region72: #{custom_decoder_forward.3} parent=11 // pred_fallthru
        _
      // Predicated region
      $region73: #{custom_decoder_forward.3} parent=11 // pred_check
        %p542 = pneg %p414
      $region74: #{custom_decoder_forward.3} parent=11 // pred_check_branch
        %544 = sbr.rel (%p542) target = $region76
      $region75: #{custom_decoder_forward.3} parent=11 // pred_region
        _
      $region76: #{custom_decoder_forward.3} parent=11 // pred_fallthru
        _
      // Predicated region
      $region77: #{custom_decoder_forward.3} parent=11 // pred_check
        %p545 = pneg %p435
      $region78: #{custom_decoder_forward.3} parent=11 // pred_check_branch
        %547 = sbr.rel (%p545) target = $region80
      $region79: #{custom_decoder_forward.3} parent=11 // pred_region
        _
      $region80: #{custom_decoder_forward.3} parent=11 // pred_fallthru
        _
      // Predicated region
      $region81: #{custom_decoder_forward.3} parent=11 // pred_check
        %p548 = pneg %p456
      $region82: #{custom_decoder_forward.3} parent=11 // pred_check_branch
        %550 = sbr.rel (%p548) target = $region84
      $region83: #{custom_decoder_forward.3} parent=11 // pred_region
        _
      $region84: #{custom_decoder_forward.3} parent=11 // pred_fallthru
        _
    $region12: #{custom_decoder_forward.3} parent=5 // pred_fallthru
      _
    %p551 = scmp.lt.s32.totalorder %s26, 8
    // Predicated region
    $region85: #{custom_decoder_forward.3} parent=5 // pred_check
      %p552 = pneg %p551
    $region86: #{custom_decoder_forward.3} parent=5 // pred_check_branch
      %554 = sbr.rel (%p552) target = $region88
    $region87: #{custom_decoder_forward.3} parent=5 // pred_region
      // Predicated region
      $region89: #{custom_decoder_forward.3} parent=87 // pred_check
        %p555 = pneg %p46
      $region90: #{custom_decoder_forward.3} parent=87 // pred_check_branch
        %557 = sbr.rel (%p555) target = $region92
      $region91: #{custom_decoder_forward.3} parent=87 // pred_region
        %p558 = scmp.lt.s32.totalorder %s26, 7
        %s559 = scalar_select %p558, %s26, 7
        %s560 = smul.addr %s559, 2
        %s561 = scalar_lea.vmem %s0, %s560
      $region92: #{custom_decoder_forward.3} parent=87 // pred_fallthru
        _
      // Predicated region
      $region93: #{custom_decoder_forward.3} parent=87 // pred_check
        %p562 = pneg %p72
      $region94: #{custom_decoder_forward.3} parent=87 // pred_check_branch
        %564 = sbr.rel (%p562) target = $region96
      $region95: #{custom_decoder_forward.3} parent=87 // pred_region
        %p565 = scmp.lt.s32.totalorder %s26, 7
        %s566 = scalar_select %p565, %s26, 7
        %s567 = smul.addr %s566, 8
        %s568 = scalar_lea.vmem %s1, %s567
      $region96: #{custom_decoder_forward.3} parent=87 // pred_fallthru
        _
    $region88: #{custom_decoder_forward.3} parent=5 // pred_fallthru
      _
    %p569 = scmp.le.s32.totalorder 1, %s26
    %p570 = scmp.lt.s32.totalorder %s26, 9
    %p571 = pnand %p569, %p570
    %p572 = pneg %p571
    // Predicated region
    $region97: #{custom_decoder_forward.3} parent=5 // pred_check
      _
    $region98: #{custom_decoder_forward.3} parent=5 // pred_check_branch
      %574 = sbr.rel (%p571) target = $region100
    $region99: #{custom_decoder_forward.3} parent=5 // pred_region
      %s575 = ssub.s32 %s26, 1
      %p576 = scmp.lt.s32.totalorder %s31, 7
      %s577 = scalar_select %p576, %s31, 7
      %s578 = smul.addr %s577, 2
      %s579 = scalar_lea.vmem %s0, %s578
      %p580 = pneg %p52
      %p581 = pneg %p49
      %p582 = scmp.lt.s32.totalorder %s31, 7
      %s583 = scalar_select %p582, %s31, 7
      %s584 = smul.addr %s583, 8
      %s585 = scalar_lea.vmem %s1, %s584
      %p586 = pneg %p78
      %p587 = pneg %p75
      %p588 = pneg %p99
      %p589 = pneg %p96
      %p590 = pneg %p120
      %p591 = pneg %p117
      %p592 = pneg %p141
      %p593 = pneg %p138
      %p594 = pneg %p162
      %p595 = pneg %p159
      %p596 = pneg %p183
      %p597 = pneg %p180
      %p598 = pneg %p204
      %p599 = pneg %p201
      %p600 = pneg %p225
      %p601 = pneg %p222
      %p602 = pneg %p246
      %p603 = pneg %p243
      %p604 = pneg %p267
      %p605 = pneg %p264
      %p606 = pneg %p288
      %p607 = pneg %p285
      %p608 = pneg %p309
      %p609 = pneg %p306
      %p610 = pneg %p330
      %p611 = pneg %p327
      %p612 = pneg %p351
      %p613 = pneg %p348
      %p614 = pneg %p372
      %p615 = pneg %p369
      %p616 = pneg %p393
      %p617 = pneg %p390
      %p618 = pneg %p414
      %p619 = pneg %p411
      %p620 = pneg %p435
      %p621 = pneg %p432
      %p622 = pneg %p456
      %p623 = pneg %p453
      %p624 = pneg %p482
      %p625 = pneg %p479
      %p626 = scmp.lt.s32.totalorder %s31, 7
      %s627 = scalar_select %p626, %s31, 7
      %s628 = smul.addr %s627, 2
      %s629 = scalar_lea.vmem %s20, %s628
      %p630 = scmp.lt.s32.totalorder %s31, 7
      %s631 = scalar_select %p630, %s31, 7
      %s632 = smul.addr %s631, 2
      %s633 = scalar_lea.vmem %s0, %s632
      %p634 = scmp.lt.s32.totalorder %s31, 7
      %s635 = scalar_select %p634, %s31, 7
      %s636 = smul.addr %s635, 8
      %s637 = scalar_lea.vmem %s1, %s636
      %p638 = scmp.lt.s32.totalorder %s31, 7
      %s639 = scalar_select %p638, %s31, 7
      %s640 = smul.addr %s639, 2
      %s641 = scalar_lea.vmem %s20, %s640
      %v643 = vld [vmem:[%s633] sm:$0x3]
      %v644 = vld [vmem:[%s637] sm:$0x3f]
      %v645 = vld [vmem:[%s2] sm:$0xf]
      %v646 = vld [vmem:[%s2 + $0x4] sm:$0xf]
      %v647 = vld [vmem:[%s2 + $0x8] sm:$0xf]
      %v648 = vld [vmem:[%s2 + $0xc] sm:$0xf]
      %v649 = vld [vmem:[%s3] sm:$0x1]
      %v650 = vld [vmem:[%s4] sm:$0xf]
      %v651 = vld [vmem:[%s4 + $0x4] sm:$0xf]
      %v652 = vld [vmem:[%s4 + $0x8] sm:$0xf]
      %v653 = vld [vmem:[%s4 + $0xc] sm:$0xf]
      %v654 = vld [vmem:[%s5] sm:$0x1]
      %v655 = vpack.c.bf16 %v643, %v643
      %v657 = vlaneseq
      %v658 = vshrl.u32 %v657, 7
      %v659 = vsub.s32 0, %v658
      %v660 = vrot.slane %v649, %v659
      %v666 = vunpack.c.l.b16 %v645
      %v667 = vunpack.c.l.b16 %v646
      %v668 = vunpack.c.l.b16 %v647
      %v669 = vunpack.c.l.b16 %v648
      %v670 = vpack.c.b16 %v667, %v666
      %v671 = vpack.c.b16 %v669, %v668
      %vm674 = vcmask 261120
      %v676 = vsel %vm674, %v655, 0
      %678 = vmatprep.subr.bf16.mxu0 0
      %679 = vmatpush1.bf16.msra.mxu0 %v670
      %680 = vmatprep.subr.bf16.mxu0 0
      %681 = vmatpush1.bf16.msra.mxu0 %v671
      %682 = vmatprep.subr.bf16.mxu0 0
      %683 = vmatpush1.bf16.msra.mxu0 0
      %684 = vmatprep.subr.bf16.mxu0 0
      %685 = vmatpush1.bf16.msra.mxu0 0
      %686 = vmatprep.subr.bf16.mxu0 0
      %687 = vmatpush1.bf16.msra.mxu0 0
      %688 = vmatprep.subr.bf16.mxu0 0
      %689 = vmatpush1.bf16.msra.mxu0 0
      %690 = vmatprep.subr.bf16.mxu0 0
      %691 = vmatpush1.bf16.msra.mxu0 0
      %692 = vmatprep.subr.bf16.mxu0 0
      %693 = vmatpush1.bf16.msra.mxu0 0
      %694 = vmatprep.subr.bf16.mxu0 0
      %695 = vmatpush1.bf16.msra.mxu0 0
      %696 = vmatprep.subr.bf16.mxu0 0
      %697 = vmatpush1.bf16.msra.mxu0 0
      %698 = vmatprep.subr.bf16.mxu0 0
      %699 = vmatpush1.bf16.msra.mxu0 0
      %700 = vmatprep.subr.bf16.mxu0 0
      %701 = vmatpush1.bf16.msra.mxu0 0
      %702 = vmatprep.subr.bf16.mxu0 0
      %703 = vmatpush1.bf16.msra.mxu0 0
      %704 = vmatprep.subr.bf16.mxu0 0
      %705 = vmatpush1.bf16.msra.mxu0 0
      %706 = vmatprep.subr.bf16.mxu0 0
      %707 = vmatpush1.bf16.msra.mxu0 0
      %708 = vmatprep.subr.bf16.mxu0 0
      %709 = vmatpush1.bf16.msra.mxu0 0
      %710 = vmatprep.mubr.bf16.mxu0 0
      %711 = vmatmul.mubr.bf16.gmra.mrb[0].mxu0 %v676
      %v712 = vpop.f32.mrb[0].mxu0
      %v713 = vadd.f32 %v660, %v712
      %v714 = vpop.f32.mrb[0].mxu0
      %v715 = vpop.f32.mrb[0].mxu0
      %v716 = vpop.f32.mrb[0].mxu0
      %717 = vdwg.mxu0
      %719 = vrot.lane.b32.xlu0 %v713, 96
      %v720 = vpop.permute.xlu0 %719
      %vm721 = vcmask 31744
      %v722 = vsel %vm721, %v713, 0
      %v724 = vsel %vm721, %v720, 0
      %726 = vmatprep.subr.mxu0 0.0
      %727 = vmatpush1.xpose.msra.mxu0 %v724
      %728 = vmatprep.subr.mxu0 0.0
      %729 = vmatpush1.xpose.msra.mxu0 0.0
      %730 = vmatprep.subr.mxu0 0.0
      %731 = vmatpush1.xpose.msra.mxu0 0.0
      %732 = vmatprep.subr.mxu0 0.0
      %733 = vmatpush1.xpose.msra.mxu0 0.0
      %734 = vmatprep.subr.mxu0 0.0
      %735 = vmatpush1.xpose.msra.mxu0 0.0
      %736 = vmatprep.subr.mxu0 0.0
      %737 = vmatpush1.xpose.msra.mxu0 0.0
      %738 = vmatprep.subr.mxu0 0.0
      %739 = vmatpush1.xpose.msra.mxu0 0.0
      %740 = vmatprep.subr.mxu0 0.0
      %741 = vmatpush1.xpose.msra.mxu0 0.0
      %742 = vmatprep.subr.mxu0 0.0
      %743 = vmatpush1.xpose.msra.mxu0 0.0
      %744 = vmatprep.subr.mxu0 0.0
      %745 = vmatpush1.xpose.msra.mxu0 0.0
      %746 = vmatprep.subr.mxu0 0.0
      %747 = vmatpush1.xpose.msra.mxu0 0.0
      %748 = vmatprep.subr.mxu0 0.0
      %749 = vmatpush1.xpose.msra.mxu0 0.0
      %750 = vmatprep.subr.mxu0 0.0
      %751 = vmatpush1.xpose.msra.mxu0 0.0
      %752 = vmatprep.subr.mxu0 0.0
      %753 = vmatpush1.xpose.msra.mxu0 0.0
      %754 = vmatprep.subr.mxu0 0.0
      %755 = vmatpush1.xpose.msra.mxu0 0.0
      %756 = vmatprep.subr.mxu0 0.0
      %757 = vmatpush1.xpose.msra.mxu0 0.0
      %758 = vmatprep.subr.mxu0 0.0
      %759 = vmatpush1.xpose.msra.mxu0 0.0
      %760 = vmatprep.subr.mxu0 0.0
      %761 = vmatpush1.xpose.msra.mxu0 0.0
      %762 = vmatprep.subr.mxu0 0.0
      %763 = vmatpush1.xpose.msra.mxu0 0.0
      %764 = vmatprep.subr.mxu0 0.0
      %765 = vmatpush1.xpose.msra.mxu0 0.0
      %766 = vmatprep.subr.mxu0 0.0
      %767 = vmatpush1.xpose.msra.mxu0 0.0
      %768 = vmatprep.subr.mxu0 0.0
      %769 = vmatpush1.xpose.msra.mxu0 0.0
      %770 = vmatprep.subr.mxu0 0.0
      %771 = vmatpush1.xpose.msra.mxu0 0.0
      %772 = vmatprep.subr.mxu0 0.0
      %773 = vmatpush1.xpose.msra.mxu0 0.0
      %774 = vmatprep.subr.mxu0 0.0
      %775 = vmatpush1.xpose.msra.mxu0 0.0
      %776 = vmatprep.subr.mxu0 0.0
      %777 = vmatpush1.xpose.msra.mxu0 0.0
      %778 = vmatprep.subr.mxu0 0.0
      %779 = vmatpush1.xpose.msra.mxu0 0.0
      %780 = vmatprep.subr.mxu0 0.0
      %781 = vmatpush1.xpose.msra.mxu0 0.0
      %782 = vmatprep.subr.mxu0 0.0
      %783 = vmatpush1.xpose.msra.mxu0 0.0
      %784 = vmatprep.subr.mxu0 0.0
      %785 = vmatpush1.xpose.msra.mxu0 0.0
      %786 = vmatprep.subr.mxu0 0.0
      %787 = vmatpush1.xpose.msra.mxu0 0.0
      %788 = vmatprep.subr.mxu0 0.0
      %789 = vmatpush1.xpose.msra.mxu0 0.0
      %790 = vmatprep.mubr.f32.mxu0 0.0
      %791 = vmatmul.mubr.f32.gmra.mrb[0].mxu0 %v722
      %v792 = vpop.f32.mrb[0].mxu0
      %v793 = vadd.f32 0.0, %v792
      %v794 = vpop.f32.mrb[0].mxu0
      %795 = vdwg.mxu0
      %v796 = vmul.f32 %v793, 0.5
      %vm797 = vcmask 9216
      %v798 = vsel %vm797, %v796, -inf
      %799 = vmax.xlane.f32.xlu0 %v798
      %v800 = vpop.xlane.xlu0 %799
      %v801 = vsub.f32 %v796, %v800
      %v802 = vmul.f32 %v801, 1.442695
      %v803 = vpow.pop %v802
      %v804 = vsel %vm797, %v803, 0.0
      %805 = vadd.xlane.f32.xlu0 %v804
      %v806 = vpop.xlane.xlu0 %805
      %v807 = vrcp.pop %v806
      %v808 = vmul.f32 %v803, %v807
      %809 = vrot.lane.b32.xlu0 %v713, 64
      %v810 = vpop.permute.xlu0 %809
      %vm811 = vcmask 15360
      %v813 = vsel %vm811, %v808, 0
      %vm815 = vcmask 1041408
      %v816 = vsel %vm815, %v810, 0
      %818 = vmatprep.subr.mxu0 0.0
      %819 = vmatpush1.msra.mxu0 %v816
      %820 = vmatprep.subr.mxu0 0.0
      %821 = vmatpush1.msra.mxu0 0.0
      %822 = vmatprep.subr.mxu0 0.0
      %823 = vmatpush1.msra.mxu0 0.0
      %824 = vmatprep.subr.mxu0 0.0
      %825 = vmatpush1.msra.mxu0 0.0
      %826 = vmatprep.subr.mxu0 0.0
      %827 = vmatpush1.msra.mxu0 0.0
      %828 = vmatprep.subr.mxu0 0.0
      %829 = vmatpush1.msra.mxu0 0.0
      %830 = vmatprep.subr.mxu0 0.0
      %831 = vmatpush1.msra.mxu0 0.0
      %832 = vmatprep.subr.mxu0 0.0
      %833 = vmatpush1.msra.mxu0 0.0
      %834 = vmatprep.subr.mxu0 0.0
      %835 = vmatpush1.msra.mxu0 0.0
      %836 = vmatprep.subr.mxu0 0.0
      %837 = vmatpush1.msra.mxu0 0.0
      %838 = vmatprep.subr.mxu0 0.0
      %839 = vmatpush1.msra.mxu0 0.0
      %840 = vmatprep.subr.mxu0 0.0
      %841 = vmatpush1.msra.mxu0 0.0
      %842 = vmatprep.subr.mxu0 0.0
      %843 = vmatpush1.msra.mxu0 0.0
      %844 = vmatprep.subr.mxu0 0.0
      %845 = vmatpush1.msra.mxu0 0.0
      %846 = vmatprep.subr.mxu0 0.0
      %847 = vmatpush1.msra.mxu0 0.0
      %848 = vmatprep.subr.mxu0 0.0
      %849 = vmatpush1.msra.mxu0 0.0
      %850 = vmatprep.subr.mxu0 0.0
      %851 = vmatpush1.msra.mxu0 0.0
      %852 = vmatprep.subr.mxu0 0.0
      %853 = vmatpush1.msra.mxu0 0.0
      %854 = vmatprep.subr.mxu0 0.0
      %855 = vmatpush1.msra.mxu0 0.0
      %856 = vmatprep.subr.mxu0 0.0
      %857 = vmatpush1.msra.mxu0 0.0
      %858 = vmatprep.subr.mxu0 0.0
      %859 = vmatpush1.msra.mxu0 0.0
      %860 = vmatprep.subr.mxu0 0.0
      %861 = vmatpush1.msra.mxu0 0.0
      %862 = vmatprep.subr.mxu0 0.0
      %863 = vmatpush1.msra.mxu0 0.0
      %864 = vmatprep.subr.mxu0 0.0
      %865 = vmatpush1.msra.mxu0 0.0
      %866 = vmatprep.subr.mxu0 0.0
      %867 = vmatpush1.msra.mxu0 0.0
      %868 = vmatprep.subr.mxu0 0.0
      %869 = vmatpush1.msra.mxu0 0.0
      %870 = vmatprep.subr.mxu0 0.0
      %871 = vmatpush1.msra.mxu0 0.0
      %872 = vmatprep.subr.mxu0 0.0
      %873 = vmatpush1.msra.mxu0 0.0
      %874 = vmatprep.subr.mxu0 0.0
      %875 = vmatpush1.msra.mxu0 0.0
      %876 = vmatprep.subr.mxu0 0.0
      %877 = vmatpush1.msra.mxu0 0.0
      %878 = vmatprep.subr.mxu0 0.0
      %879 = vmatpush1.msra.mxu0 0.0
      %880 = vmatprep.subr.mxu0 0.0
      %881 = vmatpush1.msra.mxu0 0.0
      %882 = vmatprep.mubr.f32.mxu0 0.0
      %883 = vmatmul.mubr.f32.gmra.mrb[0].mxu0 %v813
      %v884 = vpop.f32.mrb[0].mxu0
      %v885 = vadd.f32 0.0, %v884
      %v886 = vpop.f32.mrb[0].mxu0
      %887 = vdwg.mxu0
      %888 = vrot.lane.b32.xlu0 %v713, 124
      %v889 = vpop.permute.xlu0 %888
      %890 = vrot.lane.b32.xlu0 %v713, 92
      %v891 = vpop.permute.xlu0 %890
      %v892 = vsel %vm721, %v889, 0
      %v894 = vsel %vm721, %v891, 0
      %896 = vmatprep.subr.mxu0 0.0
      %897 = vmatpush1.xpose.msra.mxu0 %v894
      %898 = vmatprep.subr.mxu0 0.0
      %899 = vmatpush1.xpose.msra.mxu0 0.0
      %900 = vmatprep.subr.mxu0 0.0
      %901 = vmatpush1.xpose.msra.mxu0 0.0
      %902 = vmatprep.subr.mxu0 0.0
      %903 = vmatpush1.xpose.msra.mxu0 0.0
      %904 = vmatprep.subr.mxu0 0.0
      %905 = vmatpush1.xpose.msra.mxu0 0.0
      %906 = vmatprep.subr.mxu0 0.0
      %907 = vmatpush1.xpose.msra.mxu0 0.0
      %908 = vmatprep.subr.mxu0 0.0
      %909 = vmatpush1.xpose.msra.mxu0 0.0
      %910 = vmatprep.subr.mxu0 0.0
      %911 = vmatpush1.xpose.msra.mxu0 0.0
      %912 = vmatprep.subr.mxu0 0.0
      %913 = vmatpush1.xpose.msra.mxu0 0.0
      %914 = vmatprep.subr.mxu0 0.0
      %915 = vmatpush1.xpose.msra.mxu0 0.0
      %916 = vmatprep.subr.mxu0 0.0
      %917 = vmatpush1.xpose.msra.mxu0 0.0
      %918 = vmatprep.subr.mxu0 0.0
      %919 = vmatpush1.xpose.msra.mxu0 0.0
      %920 = vmatprep.subr.mxu0 0.0
      %921 = vmatpush1.xpose.msra.mxu0 0.0
      %922 = vmatprep.subr.mxu0 0.0
      %923 = vmatpush1.xpose.msra.mxu0 0.0
      %924 = vmatprep.subr.mxu0 0.0
      %925 = vmatpush1.xpose.msra.mxu0 0.0
      %926 = vmatprep.subr.mxu0 0.0
      %927 = vmatpush1.xpose.msra.mxu0 0.0
      %928 = vmatprep.subr.mxu0 0.0
      %929 = vmatpush1.xpose.msra.mxu0 0.0
      %930 = vmatprep.subr.mxu0 0.0
      %931 = vmatpush1.xpose.msra.mxu0 0.0
      %932 = vmatprep.subr.mxu0 0.0
      %933 = vmatpush1.xpose.msra.mxu0 0.0
      %934 = vmatprep.subr.mxu0 0.0
      %935 = vmatpush1.xpose.msra.mxu0 0.0
      %936 = vmatprep.subr.mxu0 0.0
      %937 = vmatpush1.xpose.msra.mxu0 0.0
      %938 = vmatprep.subr.mxu0 0.0
      %939 = vmatpush1.xpose.msra.mxu0 0.0
      %940 = vmatprep.subr.mxu0 0.0
      %941 = vmatpush1.xpose.msra.mxu0 0.0
      %942 = vmatprep.subr.mxu0 0.0
      %943 = vmatpush1.xpose.msra.mxu0 0.0
      %944 = vmatprep.subr.mxu0 0.0
      %945 = vmatpush1.xpose.msra.mxu0 0.0
      %946 = vmatprep.subr.mxu0 0.0
      %947 = vmatpush1.xpose.msra.mxu0 0.0
      %948 = vmatprep.subr.mxu0 0.0
      %949 = vmatpush1.xpose.msra.mxu0 0.0
      %950 = vmatprep.subr.mxu0 0.0
      %951 = vmatpush1.xpose.msra.mxu0 0.0
      %952 = vmatprep.subr.mxu0 0.0
      %953 = vmatpush1.xpose.msra.mxu0 0.0
      %954 = vmatprep.subr.mxu0 0.0
      %955 = vmatpush1.xpose.msra.mxu0 0.0
      %956 = vmatprep.subr.mxu0 0.0
      %957 = vmatpush1.xpose.msra.mxu0 0.0
      %958 = vmatprep.subr.mxu0 0.0
      %959 = vmatpush1.xpose.msra.mxu0 0.0
      %960 = vmatprep.mubr.f32.mxu0 0.0
      %961 = vmatmul.mubr.f32.gmra.mrb[0].mxu0 %v892
      %v962 = vpop.f32.mrb[0].mxu0
      %v963 = vadd.f32 0.0, %v962
      %v964 = vpop.f32.mrb[0].mxu0
      %965 = vdwg.mxu0
      %v966 = vmul.f32 %v963, 0.5
      %v967 = vsel %vm797, %v966, -inf
      %968 = vmax.xlane.f32.xlu0 %v967
      %v969 = vpop.xlane.xlu0 %968
      %v970 = vsub.f32 %v966, %v969
      %v971 = vmul.f32 %v970, 1.442695
      %v972 = vpow.pop %v971
      %v973 = vsel %vm797, %v972, 0.0
      %974 = vadd.xlane.f32.xlu0 %v973
      %v975 = vpop.xlane.xlu0 %974
      %v976 = vrcp.pop %v975
      %v977 = vmul.f32 %v972, %v976
      %978 = vrot.lane.b32.xlu0 %v713, 60
      %v979 = vpop.permute.xlu0 %978
      %v981 = vsel %vm811, %v977, 0
      %v983 = vsel %vm815, %v979, 0
      %985 = vmatprep.subr.mxu0 0.0
      %986 = vmatpush1.msra.mxu0 %v983
      %987 = vmatprep.subr.mxu0 0.0
      %988 = vmatpush1.msra.mxu0 0.0
      %989 = vmatprep.subr.mxu0 0.0
      %990 = vmatpush1.msra.mxu0 0.0
      %991 = vmatprep.subr.mxu0 0.0
      %992 = vmatpush1.msra.mxu0 0.0
      %993 = vmatprep.subr.mxu0 0.0
      %994 = vmatpush1.msra.mxu0 0.0
      %995 = vmatprep.subr.mxu0 0.0
      %996 = vmatpush1.msra.mxu0 0.0
      %997 = vmatprep.subr.mxu0 0.0
      %998 = vmatpush1.msra.mxu0 0.0
      %999 = vmatprep.subr.mxu0 0.0
      %1000 = vmatpush1.msra.mxu0 0.0
      %1001 = vmatprep.subr.mxu0 0.0
      %1002 = vmatpush1.msra.mxu0 0.0
      %1003 = vmatprep.subr.mxu0 0.0
      %1004 = vmatpush1.msra.mxu0 0.0
      %1005 = vmatprep.subr.mxu0 0.0
      %1006 = vmatpush1.msra.mxu0 0.0
      %1007 = vmatprep.subr.mxu0 0.0
      %1008 = vmatpush1.msra.mxu0 0.0
      %1009 = vmatprep.subr.mxu0 0.0
      %1010 = vmatpush1.msra.mxu0 0.0
      %1011 = vmatprep.subr.mxu0 0.0
      %1012 = vmatpush1.msra.mxu0 0.0
      %1013 = vmatprep.subr.mxu0 0.0
      %1014 = vmatpush1.msra.mxu0 0.0
      %1015 = vmatprep.subr.mxu0 0.0
      %1016 = vmatpush1.msra.mxu0 0.0
      %1017 = vmatprep.subr.mxu0 0.0
      %1018 = vmatpush1.msra.mxu0 0.0
      %1019 = vmatprep.subr.mxu0 0.0
      %1020 = vmatpush1.msra.mxu0 0.0
      %1021 = vmatprep.subr.mxu0 0.0
      %1022 = vmatpush1.msra.mxu0 0.0
      %1023 = vmatprep.subr.mxu0 0.0
      %1024 = vmatpush1.msra.mxu0 0.0
      %1025 = vmatprep.subr.mxu0 0.0
      %1026 = vmatpush1.msra.mxu0 0.0
      %1027 = vmatprep.subr.mxu0 0.0
      %1028 = vmatpush1.msra.mxu0 0.0
      %1029 = vmatprep.subr.mxu0 0.0
      %1030 = vmatpush1.msra.mxu0 0.0
      %1031 = vmatprep.subr.mxu0 0.0
      %1032 = vmatpush1.msra.mxu0 0.0
      %1033 = vmatprep.subr.mxu0 0.0
      %1034 = vmatpush1.msra.mxu0 0.0
      %1035 = vmatprep.subr.mxu0 0.0
      %1036 = vmatpush1.msra.mxu0 0.0
      %1037 = vmatprep.subr.mxu0 0.0
      %1038 = vmatpush1.msra.mxu0 0.0
      %1039 = vmatprep.subr.mxu0 0.0
      %1040 = vmatpush1.msra.mxu0 0.0
      %1041 = vmatprep.subr.mxu0 0.0
      %1042 = vmatpush1.msra.mxu0 0.0
      %1043 = vmatprep.subr.mxu0 0.0
      %1044 = vmatpush1.msra.mxu0 0.0
      %1045 = vmatprep.subr.mxu0 0.0
      %1046 = vmatpush1.msra.mxu0 0.0
      %1047 = vmatprep.subr.mxu0 0.0
      %1048 = vmatpush1.msra.mxu0 0.0
      %1049 = vmatprep.mubr.f32.mxu0 0.0
      %1050 = vmatmul.mubr.f32.gmra.mrb[0].mxu0 %v981
      %v1051 = vpop.f32.mrb[0].mxu0
      %v1052 = vadd.f32 0.0, %v1051
      %v1053 = vpop.f32.mrb[0].mxu0
      %1054 = vdwg.mxu0
      %1055 = vrot.lane.b32.xlu0 %v713, 120
      %v1056 = vpop.permute.xlu0 %1055
      %1057 = vrot.lane.b32.xlu0 %v713, 88
      %v1058 = vpop.permute.xlu0 %1057
      %v1059 = vsel %vm721, %v1056, 0
      %v1061 = vsel %vm721, %v1058, 0
      %1063 = vmatprep.subr.mxu0 0.0
      %1064 = vmatpush1.xpose.msra.mxu0 %v1061
      %1065 = vmatprep.subr.mxu0 0.0
      %1066 = vmatpush1.xpose.msra.mxu0 0.0
      %1067 = vmatprep.subr.mxu0 0.0
      %1068 = vmatpush1.xpose.msra.mxu0 0.0
      %1069 = vmatprep.subr.mxu0 0.0
      %1070 = vmatpush1.xpose.msra.mxu0 0.0
      %1071 = vmatprep.subr.mxu0 0.0
      %1072 = vmatpush1.xpose.msra.mxu0 0.0
      %1073 = vmatprep.subr.mxu0 0.0
      %1074 = vmatpush1.xpose.msra.mxu0 0.0
      %1075 = vmatprep.subr.mxu0 0.0
      %1076 = vmatpush1.xpose.msra.mxu0 0.0
      %1077 = vmatprep.subr.mxu0 0.0
      %1078 = vmatpush1.xpose.msra.mxu0 0.0
      %1079 = vmatprep.subr.mxu0 0.0
      %1080 = vmatpush1.xpose.msra.mxu0 0.0
      %1081 = vmatprep.subr.mxu0 0.0
      %1082 = vmatpush1.xpose.msra.mxu0 0.0
      %1083 = vmatprep.subr.mxu0 0.0
      %1084 = vmatpush1.xpose.msra.mxu0 0.0
      %1085 = vmatprep.subr.mxu0 0.0
      %1086 = vmatpush1.xpose.msra.mxu0 0.0
      %1087 = vmatprep.subr.mxu0 0.0
      %1088 = vmatpush1.xpose.msra.mxu0 0.0
      %1089 = vmatprep.subr.mxu0 0.0
      %1090 = vmatpush1.xpose.msra.mxu0 0.0
      %1091 = vmatprep.subr.mxu0 0.0
      %1092 = vmatpush1.xpose.msra.mxu0 0.0
      %1093 = vmatprep.subr.mxu0 0.0
      %1094 = vmatpush1.xpose.msra.mxu0 0.0
      %1095 = vmatprep.subr.mxu0 0.0
      %1096 = vmatpush1.xpose.msra.mxu0 0.0
      %1097 = vmatprep.subr.mxu0 0.0
      %1098 = vmatpush1.xpose.msra.mxu0 0.0
      %1099 = vmatprep.subr.mxu0 0.0
      %1100 = vmatpush1.xpose.msra.mxu0 0.0
      %1101 = vmatprep.subr.mxu0 0.0
      %1102 = vmatpush1.xpose.msra.mxu0 0.0
      %1103 = vmatprep.subr.mxu0 0.0
      %1104 = vmatpush1.xpose.msra.mxu0 0.0
      %1105 = vmatprep.subr.mxu0 0.0
      %1106 = vmatpush1.xpose.msra.mxu0 0.0
      %1107 = vmatprep.subr.mxu0 0.0
      %1108 = vmatpush1.xpose.msra.mxu0 0.0
      %1109 = vmatprep.subr.mxu0 0.0
      %1110 = vmatpush1.xpose.msra.mxu0 0.0
      %1111 = vmatprep.subr.mxu0 0.0
      %1112 = vmatpush1.xpose.msra.mxu0 0.0
      %1113 = vmatprep.subr.mxu0 0.0
      %1114 = vmatpush1.xpose.msra.mxu0 0.0
      %1115 = vmatprep.subr.mxu0 0.0
      %1116 = vmatpush1.xpose.msra.mxu0 0.0
      %1117 = vmatprep.subr.mxu0 0.0
      %1118 = vmatpush1.xpose.msra.mxu0 0.0
      %1119 = vmatprep.subr.mxu0 0.0
      %1120 = vmatpush1.xpose.msra.mxu0 0.0
      %1121 = vmatprep.subr.mxu0 0.0
      %1122 = vmatpush1.xpose.msra.mxu0 0.0
      %1123 = vmatprep.subr.mxu0 0.0
      %1124 = vmatpush1.xpose.msra.mxu0 0.0
      %1125 = vmatprep.subr.mxu0 0.0
      %1126 = vmatpush1.xpose.msra.mxu0 0.0
      %1127 = vmatprep.mubr.f32.mxu0 0.0
      %1128 = vmatmul.mubr.f32.gmra.mrb[0].mxu0 %v1059
      %v1129 = vpop.f32.mrb[0].mxu0
      %v1130 = vadd.f32 0.0, %v1129
      %v1131 = vpop.f32.mrb[0].mxu0
      %1132 = vdwg.mxu0
      %v1133 = vmul.f32 %v1130, 0.5
      %v1134 = vsel %vm797, %v1133, -inf
      %1135 = vmax.xlane.f32.xlu0 %v1134
      %v1136 = vpop.xlane.xlu0 %1135
      %v1137 = vsub.f32 %v1133, %v1136
      %v1138 = vmul.f32 %v1137, 1.442695
      %v1139 = vpow.pop %v1138
      %v1140 = vsel %vm797, %v1139, 0.0
      %1141 = vadd.xlane.f32.xlu0 %v1140
      %v1142 = vpop.xlane.xlu0 %1141
      %v1143 = vrcp.pop %v1142
      %v1144 = vmul.f32 %v1139, %v1143
      %1145 = vrot.lane.b32.xlu0 %v713, 56
      %v1146 = vpop.permute.xlu0 %1145
      %v1148 = vsel %vm811, %v1144, 0
      %v1150 = vsel %vm815, %v1146, 0
      %1152 = vmatprep.subr.mxu0 0.0
      %1153 = vmatpush1.msra.mxu0 %v1150
      %1154 = vmatprep.subr.mxu0 0.0
      %1155 = vmatpush1.msra.mxu0 0.0
      %1156 = vmatprep.subr.mxu0 0.0
      %1157 = vmatpush1.msra.mxu0 0.0
      %1158 = vmatprep.subr.mxu0 0.0
      %1159 = vmatpush1.msra.mxu0 0.0
      %1160 = vmatprep.subr.mxu0 0.0
      %1161 = vmatpush1.msra.mxu0 0.0
      %1162 = vmatprep.subr.mxu0 0.0
      %1163 = vmatpush1.msra.mxu0 0.0
      %1164 = vmatprep.subr.mxu0 0.0
      %1165 = vmatpush1.msra.mxu0 0.0
      %1166 = vmatprep.subr.mxu0 0.0
      %1167 = vmatpush1.msra.mxu0 0.0
      %1168 = vmatprep.subr.mxu0 0.0
      %1169 = vmatpush1.msra.mxu0 0.0
      %1170 = vmatprep.subr.mxu0 0.0
      %1171 = vmatpush1.msra.mxu0 0.0
      %1172 = vmatprep.subr.mxu0 0.0
      %1173 = vmatpush1.msra.mxu0 0.0
      %1174 = vmatprep.subr.mxu0 0.0
      %1175 = vmatpush1.msra.mxu0 0.0
      %1176 = vmatprep.subr.mxu0 0.0
      %1177 = vmatpush1.msra.mxu0 0.0
      %1178 = vmatprep.subr.mxu0 0.0
      %1179 = vmatpush1.msra.mxu0 0.0
      %1180 = vmatprep.subr.mxu0 0.0
      %1181 = vmatpush1.msra.mxu0 0.0
      %1182 = vmatprep.subr.mxu0 0.0
      %1183 = vmatpush1.msra.mxu0 0.0
      %1184 = vmatprep.subr.mxu0 0.0
      %1185 = vmatpush1.msra.mxu0 0.0
      %1186 = vmatprep.subr.mxu0 0.0
      %1187 = vmatpush1.msra.mxu0 0.0
      %1188 = vmatprep.subr.mxu0 0.0
      %1189 = vmatpush1.msra.mxu0 0.0
      %1190 = vmatprep.subr.mxu0 0.0
      %1191 = vmatpush1.msra.mxu0 0.0
      %1192 = vmatprep.subr.mxu0 0.0
      %1193 = vmatpush1.msra.mxu0 0.0
      %1194 = vmatprep.subr.mxu0 0.0
      %1195 = vmatpush1.msra.mxu0 0.0
      %1196 = vmatprep.subr.mxu0 0.0
      %1197 = vmatpush1.msra.mxu0 0.0
      %1198 = vmatprep.subr.mxu0 0.0
      %1199 = vmatpush1.msra.mxu0 0.0
      %1200 = vmatprep.subr.mxu0 0.0
      %1201 = vmatpush1.msra.mxu0 0.0
      %1202 = vmatprep.subr.mxu0 0.0
      %1203 = vmatpush1.msra.mxu0 0.0
      %1204 = vmatprep.subr.mxu0 0.0
      %1205 = vmatpush1.msra.mxu0 0.0
      %1206 = vmatprep.subr.mxu0 0.0
      %1207 = vmatpush1.msra.mxu0 0.0
      %1208 = vmatprep.subr.mxu0 0.0
      %1209 = vmatpush1.msra.mxu0 0.0
      %1210 = vmatprep.subr.mxu0 0.0
      %1211 = vmatpush1.msra.mxu0 0.0
      %1212 = vmatprep.subr.mxu0 0.0
      %1213 = vmatpush1.msra.mxu0 0.0
      %1214 = vmatprep.subr.mxu0 0.0
      %1215 = vmatpush1.msra.mxu0 0.0
      %1216 = vmatprep.mubr.f32.mxu0 0.0
      %1217 = vmatmul.mubr.f32.gmra.mrb[0].mxu0 %v1148
      %v1218 = vpop.f32.mrb[0].mxu0
      %v1219 = vadd.f32 0.0, %v1218
      %v1220 = vpop.f32.mrb[0].mxu0
      %1221 = vdwg.mxu0
      %1222 = vrot.lane.b32.xlu0 %v713, 116
      %v1223 = vpop.permute.xlu0 %1222
      %1224 = vrot.lane.b32.xlu0 %v713, 84
      %v1225 = vpop.permute.xlu0 %1224
      %v1226 = vsel %vm721, %v1223, 0
      %v1228 = vsel %vm721, %v1225, 0
      %1230 = vmatprep.subr.mxu0 0.0
      %1231 = vmatpush1.xpose.msra.mxu0 %v1228
      %1232 = vmatprep.subr.mxu0 0.0
      %1233 = vmatpush1.xpose.msra.mxu0 0.0
      %1234 = vmatprep.subr.mxu0 0.0
      %1235 = vmatpush1.xpose.msra.mxu0 0.0
      %1236 = vmatprep.subr.mxu0 0.0
      %1237 = vmatpush1.xpose.msra.mxu0 0.0
      %1238 = vmatprep.subr.mxu0 0.0
      %1239 = vmatpush1.xpose.msra.mxu0 0.0
      %1240 = vmatprep.subr.mxu0 0.0
      %1241 = vmatpush1.xpose.msra.mxu0 0.0
      %1242 = vmatprep.subr.mxu0 0.0
      %1243 = vmatpush1.xpose.msra.mxu0 0.0
      %1244 = vmatprep.subr.mxu0 0.0
      %1245 = vmatpush1.xpose.msra.mxu0 0.0
      %1246 = vmatprep.subr.mxu0 0.0
      %1247 = vmatpush1.xpose.msra.mxu0 0.0
      %1248 = vmatprep.subr.mxu0 0.0
      %1249 = vmatpush1.xpose.msra.mxu0 0.0
      %1250 = vmatprep.subr.mxu0 0.0
      %1251 = vmatpush1.xpose.msra.mxu0 0.0
      %1252 = vmatprep.subr.mxu0 0.0
      %1253 = vmatpush1.xpose.msra.mxu0 0.0
      %1254 = vmatprep.subr.mxu0 0.0
      %1255 = vmatpush1.xpose.msra.mxu0 0.0
      %1256 = vmatprep.subr.mxu0 0.0
      %1257 = vmatpush1.xpose.msra.mxu0 0.0
      %1258 = vmatprep.subr.mxu0 0.0
      %1259 = vmatpush1.xpose.msra.mxu0 0.0
      %1260 = vmatprep.subr.mxu0 0.0
      %1261 = vmatpush1.xpose.msra.mxu0 0.0
      %1262 = vmatprep.subr.mxu0 0.0
      %1263 = vmatpush1.xpose.msra.mxu0 0.0
      %1264 = vmatprep.subr.mxu0 0.0
      %1265 = vmatpush1.xpose.msra.mxu0 0.0
      %1266 = vmatprep.subr.mxu0 0.0
      %1267 = vmatpush1.xpose.msra.mxu0 0.0
      %1268 = vmatprep.subr.mxu0 0.0
      %1269 = vmatpush1.xpose.msra.mxu0 0.0
      %1270 = vmatprep.subr.mxu0 0.0
      %1271 = vmatpush1.xpose.msra.mxu0 0.0
      %1272 = vmatprep.subr.mxu0 0.0
      %1273 = vmatpush1.xpose.msra.mxu0 0.0
      %1274 = vmatprep.subr.mxu0 0.0
      %1275 = vmatpush1.xpose.msra.mxu0 0.0
      %1276 = vmatprep.subr.mxu0 0.0
      %1277 = vmatpush1.xpose.msra.mxu0 0.0
      %1278 = vmatprep.subr.mxu0 0.0
      %1279 = vmatpush1.xpose.msra.mxu0 0.0
      %1280 = vmatprep.subr.mxu0 0.0
      %1281 = vmatpush1.xpose.msra.mxu0 0.0
      %1282 = vmatprep.subr.mxu0 0.0
      %1283 = vmatpush1.xpose.msra.mxu0 0.0
      %1284 = vmatprep.subr.mxu0 0.0
      %1285 = vmatpush1.xpose.msra.mxu0 0.0
      %1286 = vmatprep.subr.mxu0 0.0
      %1287 = vmatpush1.xpose.msra.mxu0 0.0
      %1288 = vmatprep.subr.mxu0 0.0
      %1289 = vmatpush1.xpose.msra.mxu0 0.0
      %1290 = vmatprep.subr.mxu0 0.0
      %1291 = vmatpush1.xpose.msra.mxu0 0.0
      %1292 = vmatprep.subr.mxu0 0.0
      %1293 = vmatpush1.xpose.msra.mxu0 0.0
      %1294 = vmatprep.mubr.f32.mxu0 0.0
      %1295 = vmatmul.mubr.f32.gmra.mrb[0].mxu0 %v1226
      %v1296 = vpop.f32.mrb[0].mxu0
      %v1297 = vadd.f32 0.0, %v1296
      %v1298 = vpop.f32.mrb[0].mxu0
      %1299 = vdwg.mxu0
      %v1300 = vmul.f32 %v1297, 0.5
      %v1301 = vsel %vm797, %v1300, -inf
      %1302 = vmax.xlane.f32.xlu0 %v1301
      %v1303 = vpop.xlane.xlu0 %1302
      %v1304 = vsub.f32 %v1300, %v1303
      %v1305 = vmul.f32 %v1304, 1.442695
      %v1306 = vpow.pop %v1305
      %v1307 = vsel %vm797, %v1306, 0.0
      %1308 = vadd.xlane.f32.xlu0 %v1307
      %v1309 = vpop.xlane.xlu0 %1308
      %v1310 = vrcp.pop %v1309
      %v1311 = vmul.f32 %v1306, %v1310
      %1312 = vrot.lane.b32.xlu0 %v713, 52
      %v1313 = vpop.permute.xlu0 %1312
      %v1315 = vsel %vm811, %v1311, 0
      %v1317 = vsel %vm815, %v1313, 0
      %1319 = vmatprep.subr.mxu0 0.0
      %1320 = vmatpush1.msra.mxu0 %v1317
      %1321 = vmatprep.subr.mxu0 0.0
      %1322 = vmatpush1.msra.mxu0 0.0
      %1323 = vmatprep.subr.mxu0 0.0
      %1324 = vmatpush1.msra.mxu0 0.0
      %1325 = vmatprep.subr.mxu0 0.0
      %1326 = vmatpush1.msra.mxu0 0.0
      %1327 = vmatprep.subr.mxu0 0.0
      %1328 = vmatpush1.msra.mxu0 0.0
      %1329 = vmatprep.subr.mxu0 0.0
      %1330 = vmatpush1.msra.mxu0 0.0
      %1331 = vmatprep.subr.mxu0 0.0
      %1332 = vmatpush1.msra.mxu0 0.0
      %1333 = vmatprep.subr.mxu0 0.0
      %1334 = vmatpush1.msra.mxu0 0.0
      %1335 = vmatprep.subr.mxu0 0.0
      %1336 = vmatpush1.msra.mxu0 0.0
      %1337 = vmatprep.subr.mxu0 0.0
      %1338 = vmatpush1.msra.mxu0 0.0
      %1339 = vmatprep.subr.mxu0 0.0
      %1340 = vmatpush1.msra.mxu0 0.0
      %1341 = vmatprep.subr.mxu0 0.0
      %1342 = vmatpush1.msra.mxu0 0.0
      %1343 = vmatprep.subr.mxu0 0.0
      %1344 = vmatpush1.msra.mxu0 0.0
      %1345 = vmatprep.subr.mxu0 0.0
      %1346 = vmatpush1.msra.mxu0 0.0
      %1347 = vmatprep.subr.mxu0 0.0
      %1348 = vmatpush1.msra.mxu0 0.0
      %1349 = vmatprep.subr.mxu0 0.0
      %1350 = vmatpush1.msra.mxu0 0.0
      %1351 = vmatprep.subr.mxu0 0.0
      %1352 = vmatpush1.msra.mxu0 0.0
      %1353 = vmatprep.subr.mxu0 0.0
      %1354 = vmatpush1.msra.mxu0 0.0
      %1355 = vmatprep.subr.mxu0 0.0
      %1356 = vmatpush1.msra.mxu0 0.0
      %1357 = vmatprep.subr.mxu0 0.0
      %1358 = vmatpush1.msra.mxu0 0.0
      %1359 = vmatprep.subr.mxu0 0.0
      %1360 = vmatpush1.msra.mxu0 0.0
      %1361 = vmatprep.subr.mxu0 0.0
      %1362 = vmatpush1.msra.mxu0 0.0
      %1363 = vmatprep.subr.mxu0 0.0
      %1364 = vmatpush1.msra.mxu0 0.0
      %1365 = vmatprep.subr.mxu0 0.0
      %1366 = vmatpush1.msra.mxu0 0.0
      %1367 = vmatprep.subr.mxu0 0.0
      %1368 = vmatpush1.msra.mxu0 0.0
      %1369 = vmatprep.subr.mxu0 0.0
      %1370 = vmatpush1.msra.mxu0 0.0
      %1371 = vmatprep.subr.mxu0 0.0
      %1372 = vmatpush1.msra.mxu0 0.0
      %1373 = vmatprep.subr.mxu0 0.0
      %1374 = vmatpush1.msra.mxu0 0.0
      %1375 = vmatprep.subr.mxu0 0.0
      %1376 = vmatpush1.msra.mxu0 0.0
      %1377 = vmatprep.subr.mxu0 0.0
      %1378 = vmatpush1.msra.mxu0 0.0
      %1379 = vmatprep.subr.mxu0 0.0
      %1380 = vmatpush1.msra.mxu0 0.0
      %1381 = vmatprep.subr.mxu0 0.0
      %1382 = vmatpush1.msra.mxu0 0.0
      %1383 = vmatprep.mubr.f32.mxu0 0.0
      %1384 = vmatmul.mubr.f32.gmra.mrb[0].mxu0 %v1315
      %v1385 = vpop.f32.mrb[0].mxu0
      %v1386 = vadd.f32 0.0, %v1385
      %v1387 = vpop.f32.mrb[0].mxu0
      %1388 = vdwg.mxu0
      %1389 = vrot.lane.b32.xlu0 %v713, 112
      %v1390 = vpop.permute.xlu0 %1389
      %1391 = vrot.lane.b32.xlu0 %v713, 80
      %v1392 = vpop.permute.xlu0 %1391
      %v1393 = vsel %vm721, %v1390, 0
      %v1395 = vsel %vm721, %v1392, 0
      %1397 = vmatprep.subr.mxu0 0.0
      %1398 = vmatpush1.xpose.msra.mxu0 %v1395
      %1399 = vmatprep.subr.mxu0 0.0
      %1400 = vmatpush1.xpose.msra.mxu0 0.0
      %1401 = vmatprep.subr.mxu0 0.0
      %1402 = vmatpush1.xpose.msra.mxu0 0.0
      %1403 = vmatprep.subr.mxu0 0.0
      %1404 = vmatpush1.xpose.msra.mxu0 0.0
      %1405 = vmatprep.subr.mxu0 0.0
      %1406 = vmatpush1.xpose.msra.mxu0 0.0
      %1407 = vmatprep.subr.mxu0 0.0
      %1408 = vmatpush1.xpose.msra.mxu0 0.0
      %1409 = vmatprep.subr.mxu0 0.0
      %1410 = vmatpush1.xpose.msra.mxu0 0.0
      %1411 = vmatprep.subr.mxu0 0.0
      %1412 = vmatpush1.xpose.msra.mxu0 0.0
      %1413 = vmatprep.subr.mxu0 0.0
      %1414 = vmatpush1.xpose.msra.mxu0 0.0
      %1415 = vmatprep.subr.mxu0 0.0
      %1416 = vmatpush1.xpose.msra.mxu0 0.0
      %1417 = vmatprep.subr.mxu0 0.0
      %1418 = vmatpush1.xpose.msra.mxu0 0.0
      %1419 = vmatprep.subr.mxu0 0.0
      %1420 = vmatpush1.xpose.msra.mxu0 0.0
      %1421 = vmatprep.subr.mxu0 0.0
      %1422 = vmatpush1.xpose.msra.mxu0 0.0
      %1423 = vmatprep.subr.mxu0 0.0
      %1424 = vmatpush1.xpose.msra.mxu0 0.0
      %1425 = vmatprep.subr.mxu0 0.0
      %1426 = vmatpush1.xpose.msra.mxu0 0.0
      %1427 = vmatprep.subr.mxu0 0.0
      %1428 = vmatpush1.xpose.msra.mxu0 0.0
      %1429 = vmatprep.subr.mxu0 0.0
      %1430 = vmatpush1.xpose.msra.mxu0 0.0
      %1431 = vmatprep.subr.mxu0 0.0
      %1432 = vmatpush1.xpose.msra.mxu0 0.0
      %1433 = vmatprep.subr.mxu0 0.0
      %1434 = vmatpush1.xpose.msra.mxu0 0.0
      %1435 = vmatprep.subr.mxu0 0.0
      %1436 = vmatpush1.xpose.msra.mxu0 0.0
      %1437 = vmatprep.subr.mxu0 0.0
      %1438 = vmatpush1.xpose.msra.mxu0 0.0
      %1439 = vmatprep.subr.mxu0 0.0
      %1440 = vmatpush1.xpose.msra.mxu0 0.0
      %1441 = vmatprep.subr.mxu0 0.0
      %1442 = vmatpush1.xpose.msra.mxu0 0.0
      %1443 = vmatprep.subr.mxu0 0.0
      %1444 = vmatpush1.xpose.msra.mxu0 0.0
      %1445 = vmatprep.subr.mxu0 0.0
      %1446 = vmatpush1.xpose.msra.mxu0 0.0
      %1447 = vmatprep.subr.mxu0 0.0
      %1448 = vmatpush1.xpose.msra.mxu0 0.0
      %1449 = vmatprep.subr.mxu0 0.0
      %1450 = vmatpush1.xpose.msra.mxu0 0.0
      %1451 = vmatprep.subr.mxu0 0.0
      %1452 = vmatpush1.xpose.msra.mxu0 0.0
      %1453 = vmatprep.subr.mxu0 0.0
      %1454 = vmatpush1.xpose.msra.mxu0 0.0
      %1455 = vmatprep.subr.mxu0 0.0
      %1456 = vmatpush1.xpose.msra.mxu0 0.0
      %1457 = vmatprep.subr.mxu0 0.0
      %1458 = vmatpush1.xpose.msra.mxu0 0.0
      %1459 = vmatprep.subr.mxu0 0.0
      %1460 = vmatpush1.xpose.msra.mxu0 0.0
      %1461 = vmatprep.mubr.f32.mxu0 0.0
      %1462 = vmatmul.mubr.f32.gmra.mrb[0].mxu0 %v1393
      %v1463 = vpop.f32.mrb[0].mxu0
      %v1464 = vadd.f32 0.0, %v1463
      %v1465 = vpop.f32.mrb[0].mxu0
      %1466 = vdwg.mxu0
      %v1467 = vmul.f32 %v1464, 0.5
      %v1468 = vsel %vm797, %v1467, -inf
      %1469 = vmax.xlane.f32.xlu0 %v1468
      %v1470 = vpop.xlane.xlu0 %1469
      %v1471 = vsub.f32 %v1467, %v1470
      %v1472 = vmul.f32 %v1471, 1.442695
      %v1473 = vpow.pop %v1472
      %v1474 = vsel %vm797, %v1473, 0.0
      %1475 = vadd.xlane.f32.xlu0 %v1474
      %v1476 = vpop.xlane.xlu0 %1475
      %v1477 = vrcp.pop %v1476
      %v1478 = vmul.f32 %v1473, %v1477
      %1479 = vrot.lane.b32.xlu0 %v713, 48
      %v1480 = vpop.permute.xlu0 %1479
      %v1482 = vsel %vm811, %v1478, 0
      %v1484 = vsel %vm815, %v1480, 0
      %1486 = vmatprep.subr.mxu0 0.0
      %1487 = vmatpush1.msra.mxu0 %v1484
      %1488 = vmatprep.subr.mxu0 0.0
      %1489 = vmatpush1.msra.mxu0 0.0
      %1490 = vmatprep.subr.mxu0 0.0
      %1491 = vmatpush1.msra.mxu0 0.0
      %1492 = vmatprep.subr.mxu0 0.0
      %1493 = vmatpush1.msra.mxu0 0.0
      %1494 = vmatprep.subr.mxu0 0.0
      %1495 = vmatpush1.msra.mxu0 0.0
      %1496 = vmatprep.subr.mxu0 0.0
      %1497 = vmatpush1.msra.mxu0 0.0
      %1498 = vmatprep.subr.mxu0 0.0
      %1499 = vmatpush1.msra.mxu0 0.0
      %1500 = vmatprep.subr.mxu0 0.0
      %1501 = vmatpush1.msra.mxu0 0.0
      %1502 = vmatprep.subr.mxu0 0.0
      %1503 = vmatpush1.msra.mxu0 0.0
      %1504 = vmatprep.subr.mxu0 0.0
      %1505 = vmatpush1.msra.mxu0 0.0
      %1506 = vmatprep.subr.mxu0 0.0
      %1507 = vmatpush1.msra.mxu0 0.0
      %1508 = vmatprep.subr.mxu0 0.0
      %1509 = vmatpush1.msra.mxu0 0.0
      %1510 = vmatprep.subr.mxu0 0.0
      %1511 = vmatpush1.msra.mxu0 0.0
      %1512 = vmatprep.subr.mxu0 0.0
      %1513 = vmatpush1.msra.mxu0 0.0
      %1514 = vmatprep.subr.mxu0 0.0
      %1515 = vmatpush1.msra.mxu0 0.0
      %1516 = vmatprep.subr.mxu0 0.0
      %1517 = vmatpush1.msra.mxu0 0.0
      %1518 = vmatprep.subr.mxu0 0.0
      %1519 = vmatpush1.msra.mxu0 0.0
      %1520 = vmatprep.subr.mxu0 0.0
      %1521 = vmatpush1.msra.mxu0 0.0
      %1522 = vmatprep.subr.mxu0 0.0
      %1523 = vmatpush1.msra.mxu0 0.0
      %1524 = vmatprep.subr.mxu0 0.0
      %1525 = vmatpush1.msra.mxu0 0.0
      %1526 = vmatprep.subr.mxu0 0.0
      %1527 = vmatpush1.msra.mxu0 0.0
      %1528 = vmatprep.subr.mxu0 0.0
      %1529 = vmatpush1.msra.mxu0 0.0
      %1530 = vmatprep.subr.mxu0 0.0
      %1531 = vmatpush1.msra.mxu0 0.0
      %1532 = vmatprep.subr.mxu0 0.0
      %1533 = vmatpush1.msra.mxu0 0.0
      %1534 = vmatprep.subr.mxu0 0.0
      %1535 = vmatpush1.msra.mxu0 0.0
      %1536 = vmatprep.subr.mxu0 0.0
      %1537 = vmatpush1.msra.mxu0 0.0
      %1538 = vmatprep.subr.mxu0 0.0
      %1539 = vmatpush1.msra.mxu0 0.0
      %1540 = vmatprep.subr.mxu0 0.0
      %1541 = vmatpush1.msra.mxu0 0.0
      %1542 = vmatprep.subr.mxu0 0.0
      %1543 = vmatpush1.msra.mxu0 0.0
      %1544 = vmatprep.subr.mxu0 0.0
      %1545 = vmatpush1.msra.mxu0 0.0
      %1546 = vmatprep.subr.mxu0 0.0
      %1547 = vmatpush1.msra.mxu0 0.0
      %1548 = vmatprep.subr.mxu0 0.0
      %1549 = vmatpush1.msra.mxu0 0.0
      %1550 = vmatprep.mubr.f32.mxu0 0.0
      %1551 = vmatmul.mubr.f32.gmra.mrb[0].mxu0 %v1482
      %v1552 = vpop.f32.mrb[0].mxu0
      %v1553 = vadd.f32 0.0, %v1552
      %v1554 = vpop.f32.mrb[0].mxu0
      %1555 = vdwg.mxu0
      %1556 = vrot.lane.b32.xlu0 %v713, 108
      %v1557 = vpop.permute.xlu0 %1556
      %1558 = vrot.lane.b32.xlu0 %v713, 76
      %v1559 = vpop.permute.xlu0 %1558
      %v1560 = vsel %vm721, %v1557, 0
      %v1562 = vsel %vm721, %v1559, 0
      %1564 = vmatprep.subr.mxu0 0.0
      %1565 = vmatpush1.xpose.msra.mxu0 %v1562
      %1566 = vmatprep.subr.mxu0 0.0
      %1567 = vmatpush1.xpose.msra.mxu0 0.0
      %1568 = vmatprep.subr.mxu0 0.0
      %1569 = vmatpush1.xpose.msra.mxu0 0.0
      %1570 = vmatprep.subr.mxu0 0.0
      %1571 = vmatpush1.xpose.msra.mxu0 0.0
      %1572 = vmatprep.subr.mxu0 0.0
      %1573 = vmatpush1.xpose.msra.mxu0 0.0
      %1574 = vmatprep.subr.mxu0 0.0
      %1575 = vmatpush1.xpose.msra.mxu0 0.0
      %1576 = vmatprep.subr.mxu0 0.0
      %1577 = vmatpush1.xpose.msra.mxu0 0.0
      %1578 = vmatprep.subr.mxu0 0.0
      %1579 = vmatpush1.xpose.msra.mxu0 0.0
      %1580 = vmatprep.subr.mxu0 0.0
      %1581 = vmatpush1.xpose.msra.mxu0 0.0
      %1582 = vmatprep.subr.mxu0 0.0
      %1583 = vmatpush1.xpose.msra.mxu0 0.0
      %1584 = vmatprep.subr.mxu0 0.0
      %1585 = vmatpush1.xpose.msra.mxu0 0.0
      %1586 = vmatprep.subr.mxu0 0.0
      %1587 = vmatpush1.xpose.msra.mxu0 0.0
      %1588 = vmatprep.subr.mxu0 0.0
      %1589 = vmatpush1.xpose.msra.mxu0 0.0
      %1590 = vmatprep.subr.mxu0 0.0
      %1591 = vmatpush1.xpose.msra.mxu0 0.0
      %1592 = vmatprep.subr.mxu0 0.0
      %1593 = vmatpush1.xpose.msra.mxu0 0.0
      %1594 = vmatprep.subr.mxu0 0.0
      %1595 = vmatpush1.xpose.msra.mxu0 0.0
      %1596 = vmatprep.subr.mxu0 0.0
      %1597 = vmatpush1.xpose.msra.mxu0 0.0
      %1598 = vmatprep.subr.mxu0 0.0
      %1599 = vmatpush1.xpose.msra.mxu0 0.0
      %1600 = vmatprep.subr.mxu0 0.0
      %1601 = vmatpush1.xpose.msra.mxu0 0.0
      %1602 = vmatprep.subr.mxu0 0.0
      %1603 = vmatpush1.xpose.msra.mxu0 0.0
      %1604 = vmatprep.subr.mxu0 0.0
      %1605 = vmatpush1.xpose.msra.mxu0 0.0
      %1606 = vmatprep.subr.mxu0 0.0
      %1607 = vmatpush1.xpose.msra.mxu0 0.0
      %1608 = vmatprep.subr.mxu0 0.0
      %1609 = vmatpush1.xpose.msra.mxu0 0.0
      %1610 = vmatprep.subr.mxu0 0.0
      %1611 = vmatpush1.xpose.msra.mxu0 0.0
      %1612 = vmatprep.subr.mxu0 0.0
      %1613 = vmatpush1.xpose.msra.mxu0 0.0
      %1614 = vmatprep.subr.mxu0 0.0
      %1615 = vmatpush1.xpose.msra.mxu0 0.0
      %1616 = vmatprep.subr.mxu0 0.0
      %1617 = vmatpush1.xpose.msra.mxu0 0.0
      %1618 = vmatprep.subr.mxu0 0.0
      %1619 = vmatpush1.xpose.msra.mxu0 0.0
      %1620 = vmatprep.subr.mxu0 0.0
      %1621 = vmatpush1.xpose.msra.mxu0 0.0
      %1622 = vmatprep.subr.mxu0 0.0
      %1623 = vmatpush1.xpose.msra.mxu0 0.0
      %1624 = vmatprep.subr.mxu0 0.0
      %1625 = vmatpush1.xpose.msra.mxu0 0.0
      %1626 = vmatprep.subr.mxu0 0.0
      %1627 = vmatpush1.xpose.msra.mxu0 0.0
      %1628 = vmatprep.mubr.f32.mxu0 0.0
      %1629 = vmatmul.mubr.f32.gmra.mrb[0].mxu0 %v1560
      %v1630 = vpop.f32.mrb[0].mxu0
      %v1631 = vadd.f32 0.0, %v1630
      %v1632 = vpop.f32.mrb[0].mxu0
      %1633 = vdwg.mxu0
      %v1634 = vmul.f32 %v1631, 0.5
      %v1635 = vsel %vm797, %v1634, -inf
      %1636 = vmax.xlane.f32.xlu0 %v1635
      %v1637 = vpop.xlane.xlu0 %1636
      %v1638 = vsub.f32 %v1634, %v1637
      %v1639 = vmul.f32 %v1638, 1.442695
      %v1640 = vpow.pop %v1639
      %v1641 = vsel %vm797, %v1640, 0.0
      %1642 = vadd.xlane.f32.xlu0 %v1641
      %v1643 = vpop.xlane.xlu0 %1642
      %v1644 = vrcp.pop %v1643
      %v1645 = vmul.f32 %v1640, %v1644
      %1646 = vrot.lane.b32.xlu0 %v713, 44
      %v1647 = vpop.permute.xlu0 %1646
      %v1649 = vsel %vm811, %v1645, 0
      %v1651 = vsel %vm815, %v1647, 0
      %1653 = vmatprep.subr.mxu0 0.0
      %1654 = vmatpush1.msra.mxu0 %v1651
      %1655 = vmatprep.subr.mxu0 0.0
      %1656 = vmatpush1.msra.mxu0 0.0
      %1657 = vmatprep.subr.mxu0 0.0
      %1658 = vmatpush1.msra.mxu0 0.0
      %1659 = vmatprep.subr.mxu0 0.0
      %1660 = vmatpush1.msra.mxu0 0.0
      %1661 = vmatprep.subr.mxu0 0.0
      %1662 = vmatpush1.msra.mxu0 0.0
      %1663 = vmatprep.subr.mxu0 0.0
      %1664 = vmatpush1.msra.mxu0 0.0
      %1665 = vmatprep.subr.mxu0 0.0
      %1666 = vmatpush1.msra.mxu0 0.0
      %1667 = vmatprep.subr.mxu0 0.0
      %1668 = vmatpush1.msra.mxu0 0.0
      %1669 = vmatprep.subr.mxu0 0.0
      %1670 = vmatpush1.msra.mxu0 0.0
      %1671 = vmatprep.subr.mxu0 0.0
      %1672 = vmatpush1.msra.mxu0 0.0
      %1673 = vmatprep.subr.mxu0 0.0
      %1674 = vmatpush1.msra.mxu0 0.0
      %1675 = vmatprep.subr.mxu0 0.0
      %1676 = vmatpush1.msra.mxu0 0.0
      %1677 = vmatprep.subr.mxu0 0.0
      %1678 = vmatpush1.msra.mxu0 0.0
      %1679 = vmatprep.subr.mxu0 0.0
      %1680 = vmatpush1.msra.mxu0 0.0
      %1681 = vmatprep.subr.mxu0 0.0
      %1682 = vmatpush1.msra.mxu0 0.0
      %1683 = vmatprep.subr.mxu0 0.0
      %1684 = vmatpush1.msra.mxu0 0.0
      %1685 = vmatprep.subr.mxu0 0.0
      %1686 = vmatpush1.msra.mxu0 0.0
      %1687 = vmatprep.subr.mxu0 0.0
      %1688 = vmatpush1.msra.mxu0 0.0
      %1689 = vmatprep.subr.mxu0 0.0
      %1690 = vmatpush1.msra.mxu0 0.0
      %1691 = vmatprep.subr.mxu0 0.0
      %1692 = vmatpush1.msra.mxu0 0.0
      %1693 = vmatprep.subr.mxu0 0.0
      %1694 = vmatpush1.msra.mxu0 0.0
      %1695 = vmatprep.subr.mxu0 0.0
      %1696 = vmatpush1.msra.mxu0 0.0
      %1697 = vmatprep.subr.mxu0 0.0
      %1698 = vmatpush1.msra.mxu0 0.0
      %1699 = vmatprep.subr.mxu0 0.0
      %1700 = vmatpush1.msra.mxu0 0.0
      %1701 = vmatprep.subr.mxu0 0.0
      %1702 = vmatpush1.msra.mxu0 0.0
      %1703 = vmatprep.subr.mxu0 0.0
      %1704 = vmatpush1.msra.mxu0 0.0
      %1705 = vmatprep.subr.mxu0 0.0
      %1706 = vmatpush1.msra.mxu0 0.0
      %1707 = vmatprep.subr.mxu0 0.0
      %1708 = vmatpush1.msra.mxu0 0.0
      %1709 = vmatprep.subr.mxu0 0.0
      %1710 = vmatpush1.msra.mxu0 0.0
      %1711 = vmatprep.subr.mxu0 0.0
      %1712 = vmatpush1.msra.mxu0 0.0
      %1713 = vmatprep.subr.mxu0 0.0
      %1714 = vmatpush1.msra.mxu0 0.0
      %1715 = vmatprep.subr.mxu0 0.0
      %1716 = vmatpush1.msra.mxu0 0.0
      %1717 = vmatprep.mubr.f32.mxu0 0.0
      %1718 = vmatmul.mubr.f32.gmra.mrb[0].mxu0 %v1649
      %v1719 = vpop.f32.mrb[0].mxu0
      %v1720 = vadd.f32 0.0, %v1719
      %v1721 = vpop.f32.mrb[0].mxu0
      %1722 = vdwg.mxu0
      %1723 = vrot.lane.b32.xlu0 %v713, 104
      %v1724 = vpop.permute.xlu0 %1723
      %1725 = vrot.lane.b32.xlu0 %v713, 72
      %v1726 = vpop.permute.xlu0 %1725
      %v1727 = vsel %vm721, %v1724, 0
      %v1729 = vsel %vm721, %v1726, 0
      %1731 = vmatprep.subr.mxu0 0.0
      %1732 = vmatpush1.xpose.msra.mxu0 %v1729
      %1733 = vmatprep.subr.mxu0 0.0
      %1734 = vmatpush1.xpose.msra.mxu0 0.0
      %1735 = vmatprep.subr.mxu0 0.0
      %1736 = vmatpush1.xpose.msra.mxu0 0.0
      %1737 = vmatprep.subr.mxu0 0.0
      %1738 = vmatpush1.xpose.msra.mxu0 0.0
      %1739 = vmatprep.subr.mxu0 0.0
      %1740 = vmatpush1.xpose.msra.mxu0 0.0
      %1741 = vmatprep.subr.mxu0 0.0
      %1742 = vmatpush1.xpose.msra.mxu0 0.0
      %1743 = vmatprep.subr.mxu0 0.0
      %1744 = vmatpush1.xpose.msra.mxu0 0.0
      %1745 = vmatprep.subr.mxu0 0.0
      %1746 = vmatpush1.xpose.msra.mxu0 0.0
      %1747 = vmatprep.subr.mxu0 0.0
      %1748 = vmatpush1.xpose.msra.mxu0 0.0
      %1749 = vmatprep.subr.mxu0 0.0
      %1750 = vmatpush1.xpose.msra.mxu0 0.0
      %1751 = vmatprep.subr.mxu0 0.0
      %1752 = vmatpush1.xpose.msra.mxu0 0.0
      %1753 = vmatprep.subr.mxu0 0.0
      %1754 = vmatpush1.xpose.msra.mxu0 0.0
      %1755 = vmatprep.subr.mxu0 0.0
      %1756 = vmatpush1.xpose.msra.mxu0 0.0
      %1757 = vmatprep.subr.mxu0 0.0
      %1758 = vmatpush1.xpose.msra.mxu0 0.0
      %1759 = vmatprep.subr.mxu0 0.0
      %1760 = vmatpush1.xpose.msra.mxu0 0.0
      %1761 = vmatprep.subr.mxu0 0.0
      %1762 = vmatpush1.xpose.msra.mxu0 0.0
      %1763 = vmatprep.subr.mxu0 0.0
      %1764 = vmatpush1.xpose.msra.mxu0 0.0
      %1765 = vmatprep.subr.mxu0 0.0
      %1766 = vmatpush1.xpose.msra.mxu0 0.0
      %1767 = vmatprep.subr.mxu0 0.0
      %1768 = vmatpush1.xpose.msra.mxu0 0.0
      %1769 = vmatprep.subr.mxu0 0.0
      %1770 = vmatpush1.xpose.msra.mxu0 0.0
      %1771 = vmatprep.subr.mxu0 0.0
      %1772 = vmatpush1.xpose.msra.mxu0 0.0
      %1773 = vmatprep.subr.mxu0 0.0
      %1774 = vmatpush1.xpose.msra.mxu0 0.0
      %1775 = vmatprep.subr.mxu0 0.0
      %1776 = vmatpush1.xpose.msra.mxu0 0.0
      %1777 = vmatprep.subr.mxu0 0.0
      %1778 = vmatpush1.xpose.msra.mxu0 0.0
      %1779 = vmatprep.subr.mxu0 0.0
      %1780 = vmatpush1.xpose.msra.mxu0 0.0
      %1781 = vmatprep.subr.mxu0 0.0
      %1782 = vmatpush1.xpose.msra.mxu0 0.0
      %1783 = vmatprep.subr.mxu0 0.0
      %1784 = vmatpush1.xpose.msra.mxu0 0.0
      %1785 = vmatprep.subr.mxu0 0.0
      %1786 = vmatpush1.xpose.msra.mxu0 0.0
      %1787 = vmatprep.subr.mxu0 0.0
      %1788 = vmatpush1.xpose.msra.mxu0 0.0
      %1789 = vmatprep.subr.mxu0 0.0
      %1790 = vmatpush1.xpose.msra.mxu0 0.0
      %1791 = vmatprep.subr.mxu0 0.0
      %1792 = vmatpush1.xpose.msra.mxu0 0.0
      %1793 = vmatprep.subr.mxu0 0.0
      %1794 = vmatpush1.xpose.msra.mxu0 0.0
      %1795 = vmatprep.mubr.f32.mxu0 0.0
      %1796 = vmatmul.mubr.f32.gmra.mrb[0].mxu0 %v1727
      %v1797 = vpop.f32.mrb[0].mxu0
      %v1798 = vadd.f32 0.0, %v1797
      %v1799 = vpop.f32.mrb[0].mxu0
      %1800 = vdwg.mxu0
      %v1801 = vmul.f32 %v1798, 0.5
      %v1802 = vsel %vm797, %v1801, -inf
      %1803 = vmax.xlane.f32.xlu0 %v1802
      %v1804 = vpop.xlane.xlu0 %1803
      %v1805 = vsub.f32 %v1801, %v1804
      %v1806 = vmul.f32 %v1805, 1.442695
      %v1807 = vpow.pop %v1806
      %v1808 = vsel %vm797, %v1807, 0.0
      %1809 = vadd.xlane.f32.xlu0 %v1808
      %v1810 = vpop.xlane.xlu0 %1809
      %v1811 = vrcp.pop %v1810
      %v1812 = vmul.f32 %v1807, %v1811
      %1813 = vrot.lane.b32.xlu0 %v713, 40
      %v1814 = vpop.permute.xlu0 %1813
      %v1816 = vsel %vm811, %v1812, 0
      %v1818 = vsel %vm815, %v1814, 0
      %1820 = vmatprep.subr.mxu0 0.0
      %1821 = vmatpush1.msra.mxu0 %v1818
      %1822 = vmatprep.subr.mxu0 0.0
      %1823 = vmatpush1.msra.mxu0 0.0
      %1824 = vmatprep.subr.mxu0 0.0
      %1825 = vmatpush1.msra.mxu0 0.0
      %1826 = vmatprep.subr.mxu0 0.0
      %1827 = vmatpush1.msra.mxu0 0.0
      %1828 = vmatprep.subr.mxu0 0.0
      %1829 = vmatpush1.msra.mxu0 0.0
      %1830 = vmatprep.subr.mxu0 0.0
      %1831 = vmatpush1.msra.mxu0 0.0
      %1832 = vmatprep.subr.mxu0 0.0
      %1833 = vmatpush1.msra.mxu0 0.0
      %1834 = vmatprep.subr.mxu0 0.0
      %1835 = vmatpush1.msra.mxu0 0.0
      %1836 = vmatprep.subr.mxu0 0.0
      %1837 = vmatpush1.msra.mxu0 0.0
      %1838 = vmatprep.subr.mxu0 0.0
      %1839 = vmatpush1.msra.mxu0 0.0
      %1840 = vmatprep.subr.mxu0 0.0
      %1841 = vmatpush1.msra.mxu0 0.0
      %1842 = vmatprep.subr.mxu0 0.0
      %1843 = vmatpush1.msra.mxu0 0.0
      %1844 = vmatprep.subr.mxu0 0.0
      %1845 = vmatpush1.msra.mxu0 0.0
      %1846 = vmatprep.subr.mxu0 0.0
      %1847 = vmatpush1.msra.mxu0 0.0
      %1848 = vmatprep.subr.mxu0 0.0
      %1849 = vmatpush1.msra.mxu0 0.0
      %1850 = vmatprep.subr.mxu0 0.0
      %1851 = vmatpush1.msra.mxu0 0.0
      %1852 = vmatprep.subr.mxu0 0.0
      %1853 = vmatpush1.msra.mxu0 0.0
      %1854 = vmatprep.subr.mxu0 0.0
      %1855 = vmatpush1.msra.mxu0 0.0
      %1856 = vmatprep.subr.mxu0 0.0
      %1857 = vmatpush1.msra.mxu0 0.0
      %1858 = vmatprep.subr.mxu0 0.0
      %1859 = vmatpush1.msra.mxu0 0.0
      %1860 = vmatprep.subr.mxu0 0.0
      %1861 = vmatpush1.msra.mxu0 0.0
      %1862 = vmatprep.subr.mxu0 0.0
      %1863 = vmatpush1.msra.mxu0 0.0
      %1864 = vmatprep.subr.mxu0 0.0
      %1865 = vmatpush1.msra.mxu0 0.0
      %1866 = vmatprep.subr.mxu0 0.0
      %1867 = vmatpush1.msra.mxu0 0.0
      %1868 = vmatprep.subr.mxu0 0.0
      %1869 = vmatpush1.msra.mxu0 0.0
      %1870 = vmatprep.subr.mxu0 0.0
      %1871 = vmatpush1.msra.mxu0 0.0
      %1872 = vmatprep.subr.mxu0 0.0
      %1873 = vmatpush1.msra.mxu0 0.0
      %1874 = vmatprep.subr.mxu0 0.0
      %1875 = vmatpush1.msra.mxu0 0.0
      %1876 = vmatprep.subr.mxu0 0.0
      %1877 = vmatpush1.msra.mxu0 0.0
      %1878 = vmatprep.subr.mxu0 0.0
      %1879 = vmatpush1.msra.mxu0 0.0
      %1880 = vmatprep.subr.mxu0 0.0
      %1881 = vmatpush1.msra.mxu0 0.0
      %1882 = vmatprep.subr.mxu0 0.0
      %1883 = vmatpush1.msra.mxu0 0.0
      %1884 = vmatprep.mubr.f32.mxu0 0.0
      %1885 = vmatmul.mubr.f32.gmra.mrb[0].mxu0 %v1816
      %v1886 = vpop.f32.mrb[0].mxu0
      %v1887 = vadd.f32 0.0, %v1886
      %v1888 = vpop.f32.mrb[0].mxu0
      %1889 = vdwg.mxu0
      %1890 = vrot.lane.b32.xlu0 %v713, 100
      %v1891 = vpop.permute.xlu0 %1890
      %1892 = vrot.lane.b32.xlu0 %v713, 68
      %v1893 = vpop.permute.xlu0 %1892
      %v1894 = vsel %vm721, %v1891, 0
      %v1896 = vsel %vm721, %v1893, 0
      %1898 = vmatprep.subr.mxu0 0.0
      %1899 = vmatpush1.xpose.msra.mxu0 %v1896
      %1900 = vmatprep.subr.mxu0 0.0
      %1901 = vmatpush1.xpose.msra.mxu0 0.0
      %1902 = vmatprep.subr.mxu0 0.0
      %1903 = vmatpush1.xpose.msra.mxu0 0.0
      %1904 = vmatprep.subr.mxu0 0.0
      %1905 = vmatpush1.xpose.msra.mxu0 0.0
      %1906 = vmatprep.subr.mxu0 0.0
      %1907 = vmatpush1.xpose.msra.mxu0 0.0
      %1908 = vmatprep.subr.mxu0 0.0
      %1909 = vmatpush1.xpose.msra.mxu0 0.0
      %1910 = vmatprep.subr.mxu0 0.0
      %1911 = vmatpush1.xpose.msra.mxu0 0.0
      %1912 = vmatprep.subr.mxu0 0.0
      %1913 = vmatpush1.xpose.msra.mxu0 0.0
      %1914 = vmatprep.subr.mxu0 0.0
      %1915 = vmatpush1.xpose.msra.mxu0 0.0
      %1916 = vmatprep.subr.mxu0 0.0
      %1917 = vmatpush1.xpose.msra.mxu0 0.0
      %1918 = vmatprep.subr.mxu0 0.0
      %1919 = vmatpush1.xpose.msra.mxu0 0.0
      %1920 = vmatprep.subr.mxu0 0.0
      %1921 = vmatpush1.xpose.msra.mxu0 0.0
      %1922 = vmatprep.subr.mxu0 0.0
      %1923 = vmatpush1.xpose.msra.mxu0 0.0
      %1924 = vmatprep.subr.mxu0 0.0
      %1925 = vmatpush1.xpose.msra.mxu0 0.0
      %1926 = vmatprep.subr.mxu0 0.0
      %1927 = vmatpush1.xpose.msra.mxu0 0.0
      %1928 = vmatprep.subr.mxu0 0.0
      %1929 = vmatpush1.xpose.msra.mxu0 0.0
      %1930 = vmatprep.subr.mxu0 0.0
      %1931 = vmatpush1.xpose.msra.mxu0 0.0
      %1932 = vmatprep.subr.mxu0 0.0
      %1933 = vmatpush1.xpose.msra.mxu0 0.0
      %1934 = vmatprep.subr.mxu0 0.0
      %1935 = vmatpush1.xpose.msra.mxu0 0.0
      %1936 = vmatprep.subr.mxu0 0.0
      %1937 = vmatpush1.xpose.msra.mxu0 0.0
      %1938 = vmatprep.subr.mxu0 0.0
      %1939 = vmatpush1.xpose.msra.mxu0 0.0
      %1940 = vmatprep.subr.mxu0 0.0
      %1941 = vmatpush1.xpose.msra.mxu0 0.0
      %1942 = vmatprep.subr.mxu0 0.0
      %1943 = vmatpush1.xpose.msra.mxu0 0.0
      %1944 = vmatprep.subr.mxu0 0.0
      %1945 = vmatpush1.xpose.msra.mxu0 0.0
      %1946 = vmatprep.subr.mxu0 0.0
      %1947 = vmatpush1.xpose.msra.mxu0 0.0
      %1948 = vmatprep.subr.mxu0 0.0
      %1949 = vmatpush1.xpose.msra.mxu0 0.0
      %1950 = vmatprep.subr.mxu0 0.0
      %1951 = vmatpush1.xpose.msra.mxu0 0.0
      %1952 = vmatprep.subr.mxu0 0.0
      %1953 = vmatpush1.xpose.msra.mxu0 0.0
      %1954 = vmatprep.subr.mxu0 0.0
      %1955 = vmatpush1.xpose.msra.mxu0 0.0
      %1956 = vmatprep.subr.mxu0 0.0
      %1957 = vmatpush1.xpose.msra.mxu0 0.0
      %1958 = vmatprep.subr.mxu0 0.0
      %1959 = vmatpush1.xpose.msra.mxu0 0.0
      %1960 = vmatprep.subr.mxu0 0.0
      %1961 = vmatpush1.xpose.msra.mxu0 0.0
      %1962 = vmatprep.mubr.f32.mxu0 0.0
      %1963 = vmatmul.mubr.f32.gmra.mrb[0].mxu0 %v1894
      %v1964 = vpop.f32.mrb[0].mxu0
      %v1965 = vadd.f32 0.0, %v1964
      %v1966 = vpop.f32.mrb[0].mxu0
      %1967 = vdwg.mxu0
      %v1968 = vmul.f32 %v1965, 0.5
      %v1969 = vsel %vm797, %v1968, -inf
      %1970 = vmax.xlane.f32.xlu0 %v1969
      %v1971 = vpop.xlane.xlu0 %1970
      %v1972 = vsub.f32 %v1968, %v1971
      %v1973 = vmul.f32 %v1972, 1.442695
      %v1974 = vpow.pop %v1973
      %v1975 = vsel %vm797, %v1974, 0.0
      %1976 = vadd.xlane.f32.xlu0 %v1975
      %v1977 = vpop.xlane.xlu0 %1976
      %v1978 = vrcp.pop %v1977
      %v1979 = vmul.f32 %v1974, %v1978
      %1980 = vrot.lane.b32.xlu0 %v713, 36
      %v1981 = vpop.permute.xlu0 %1980
      %v1983 = vsel %vm811, %v1979, 0
      %v1985 = vsel %vm815, %v1981, 0
      %1987 = vmatprep.subr.mxu0 0.0
      %1988 = vmatpush1.msra.mxu0 %v1985
      %1989 = vmatprep.subr.mxu0 0.0
      %1990 = vmatpush1.msra.mxu0 0.0
      %1991 = vmatprep.subr.mxu0 0.0
      %1992 = vmatpush1.msra.mxu0 0.0
      %1993 = vmatprep.subr.mxu0 0.0
      %1994 = vmatpush1.msra.mxu0 0.0
      %1995 = vmatprep.subr.mxu0 0.0
      %1996 = vmatpush1.msra.mxu0 0.0
      %1997 = vmatprep.subr.mxu0 0.0
      %1998 = vmatpush1.msra.mxu0 0.0
      %1999 = vmatprep.subr.mxu0 0.0
      %2000 = vmatpush1.msra.mxu0 0.0
      %2001 = vmatprep.subr.mxu0 0.0
      %2002 = vmatpush1.msra.mxu0 0.0
      %2003 = vmatprep.subr.mxu0 0.0
      %2004 = vmatpush1.msra.mxu0 0.0
      %2005 = vmatprep.subr.mxu0 0.0
      %2006 = vmatpush1.msra.mxu0 0.0
      %2007 = vmatprep.subr.mxu0 0.0
      %2008 = vmatpush1.msra.mxu0 0.0
      %2009 = vmatprep.subr.mxu0 0.0
      %2010 = vmatpush1.msra.mxu0 0.0
      %2011 = vmatprep.subr.mxu0 0.0
      %2012 = vmatpush1.msra.mxu0 0.0
      %2013 = vmatprep.subr.mxu0 0.0
      %2014 = vmatpush1.msra.mxu0 0.0
      %2015 = vmatprep.subr.mxu0 0.0
      %2016 = vmatpush1.msra.mxu0 0.0
      %2017 = vmatprep.subr.mxu0 0.0
      %2018 = vmatpush1.msra.mxu0 0.0
      %2019 = vmatprep.subr.mxu0 0.0
      %2020 = vmatpush1.msra.mxu0 0.0
      %2021 = vmatprep.subr.mxu0 0.0
      %2022 = vmatpush1.msra.mxu0 0.0
      %2023 = vmatprep.subr.mxu0 0.0
      %2024 = vmatpush1.msra.mxu0 0.0
      %2025 = vmatprep.subr.mxu0 0.0
      %2026 = vmatpush1.msra.mxu0 0.0
      %2027 = vmatprep.subr.mxu0 0.0
      %2028 = vmatpush1.msra.mxu0 0.0
      %2029 = vmatprep.subr.mxu0 0.0
      %2030 = vmatpush1.msra.mxu0 0.0
      %2031 = vmatprep.subr.mxu0 0.0
      %2032 = vmatpush1.msra.mxu0 0.0
      %2033 = vmatprep.subr.mxu0 0.0
      %2034 = vmatpush1.msra.mxu0 0.0
      %2035 = vmatprep.subr.mxu0 0.0
      %2036 = vmatpush1.msra.mxu0 0.0
      %2037 = vmatprep.subr.mxu0 0.0
      %2038 = vmatpush1.msra.mxu0 0.0
      %2039 = vmatprep.subr.mxu0 0.0
      %2040 = vmatpush1.msra.mxu0 0.0
      %2041 = vmatprep.subr.mxu0 0.0
      %2042 = vmatpush1.msra.mxu0 0.0
      %2043 = vmatprep.subr.mxu0 0.0
      %2044 = vmatpush1.msra.mxu0 0.0
      %2045 = vmatprep.subr.mxu0 0.0
      %2046 = vmatpush1.msra.mxu0 0.0
      %2047 = vmatprep.subr.mxu0 0.0
      %2048 = vmatpush1.msra.mxu0 0.0
      %2049 = vmatprep.subr.mxu0 0.0
      %2050 = vmatpush1.msra.mxu0 0.0
      %2051 = vmatprep.mubr.f32.mxu0 0.0
      %2052 = vmatmul.mubr.f32.gmra.mrb[0].mxu0 %v1983
      %v2053 = vpop.f32.mrb[0].mxu0
      %v2054 = vadd.f32 0.0, %v2053
      %v2055 = vpop.f32.mrb[0].mxu0
      %2056 = vdwg.mxu0
      %2058 = vrot.lane.b32.xlu0 %v1052, 4
      %v2059 = vpop.permute.xlu0 %2058
      %2062 = vrot.lane.b32.xlu0 %v1219, 8
      %v2063 = vpop.permute.xlu0 %2062
      %2066 = vrot.lane.b32.xlu0 %v1386, 12
      %v2067 = vpop.permute.xlu0 %2066
      %2070 = vrot.lane.b32.xlu0 %v1553, 16
      %v2071 = vpop.permute.xlu0 %2070
      %2074 = vrot.lane.b32.xlu0 %v1720, 20
      %v2075 = vpop.permute.xlu0 %2074
      %2078 = vrot.lane.b32.xlu0 %v1887, 24
      %v2079 = vpop.permute.xlu0 %2078
      %2082 = vrot.lane.b32.xlu0 %v2054, 28
      %v2083 = vpop.permute.xlu0 %2082
      %v2085 = vsel %vm721, %v885, %v2059
      %vm2086 = vcmask 64512
      %v2087 = vsel %vm2086, %v2085, %v2063
      %vm2088 = vcmask 97280
      %v2089 = vsel %vm2088, %v2087, %v2067
      %vm2090 = vcmask 130048
      %v2091 = vsel %vm2090, %v2089, %v2071
      %vm2092 = vcmask 162816
      %v2093 = vsel %vm2092, %v2091, %v2075
      %vm2094 = vcmask 195584
      %v2095 = vsel %vm2094, %v2093, %v2079
      %vm2096 = vcmask 228352
      %v2097 = vsel %vm2096, %v2095, %v2083
      %v2098 = vpack.c.bf16 %v2097, %v2097
      %v2100 = vlaneseq
      %v2101 = vshrl.u32 %v2100, 7
      %v2102 = vsub.s32 0, %v2101
      %v2103 = vrot.slane %v654, %v2102
      %v2109 = vunpack.c.l.b16 %v650
      %v2110 = vunpack.c.l.b16 %v651
      %v2111 = vunpack.c.l.b16 %v652
      %v2112 = vunpack.c.l.b16 %v653
      %v2113 = vpack.c.b16 %v2110, %v2109
      %v2114 = vpack.c.b16 %v2112, %v2111
      %v2118 = vsel %vm674, %v2098, 0
      %2120 = vmatprep.subr.bf16.mxu0 0
      %2121 = vmatpush1.bf16.msra.mxu0 %v2113
      %2122 = vmatprep.subr.bf16.mxu0 0
      %2123 = vmatpush1.bf16.msra.mxu0 %v2114
      %2124 = vmatprep.subr.bf16.mxu0 0
      %2125 = vmatpush1.bf16.msra.mxu0 0
      %2126 = vmatprep.subr.bf16.mxu0 0
      %2127 = vmatpush1.bf16.msra.mxu0 0
      %2128 = vmatprep.subr.bf16.mxu0 0
      %2129 = vmatpush1.bf16.msra.mxu0 0
      %2130 = vmatprep.subr.bf16.mxu0 0
      %2131 = vmatpush1.bf16.msra.mxu0 0
      %2132 = vmatprep.subr.bf16.mxu0 0
      %2133 = vmatpush1.bf16.msra.mxu0 0
      %2134 = vmatprep.subr.bf16.mxu0 0
      %2135 = vmatpush1.bf16.msra.mxu0 0
      %2136 = vmatprep.subr.bf16.mxu0 0
      %2137 = vmatpush1.bf16.msra.mxu0 0
      %2138 = vmatprep.subr.bf16.mxu0 0
      %2139 = vmatpush1.bf16.msra.mxu0 0
      %2140 = vmatprep.subr.bf16.mxu0 0
      %2141 = vmatpush1.bf16.msra.mxu0 0
      %2142 = vmatprep.subr.bf16.mxu0 0
      %2143 = vmatpush1.bf16.msra.mxu0 0
      %2144 = vmatprep.subr.bf16.mxu0 0
      %2145 = vmatpush1.bf16.msra.mxu0 0
      %2146 = vmatprep.subr.bf16.mxu0 0
      %2147 = vmatpush1.bf16.msra.mxu0 0
      %2148 = vmatprep.subr.bf16.mxu0 0
      %2149 = vmatpush1.bf16.msra.mxu0 0
      %2150 = vmatprep.subr.bf16.mxu0 0
      %2151 = vmatpush1.bf16.msra.mxu0 0
      %2152 = vmatprep.mubr.bf16.mxu0 0
      %2153 = vmatmul.mubr.bf16.gmra.mrb[0].mxu0 %v2118
      %v2154 = vpop.f32.mrb[0].mxu0
      %v2155 = vadd.f32 %v2103, %v2154
      %v2156 = vpop.f32.mrb[0].mxu0
      %v2157 = vpop.f32.mrb[0].mxu0
      %v2158 = vpop.f32.mrb[0].mxu0
      %2159 = vdwg.mxu0
      %v2160 = vadd.f32 %v643, %v2155
      %v2161 = vld [vmem:[%s6] sm:$0x1]
      %v2162 = vld [vmem:[%s7] sm:$0x1]
      %vm2163 = vcmask 254976
      %v2164 = vsel %vm2163, %v2160, 0.0
      %2165 = vadd.xlane.f32.xlu0 %v2164
      %v2166 = vpop.xlane.xlu0 %2165
      %v2167 = vrcp.pop 32.0
      %v2168 = vmul.f32 %v2166, %v2167
      %v2169 = vsub.f32 %v2160, %v2168
      %v2170 = vmul.f32 %v2169, %v2169
      %v2171 = vsel %vm2163, %v2170, 0.0
      %2172 = vadd.xlane.f32.xlu0 %v2171
      %v2173 = vpop.xlane.xlu0 %2172
      %v2174 = vmul.f32 %v2173, %v2167
      %v2175 = vadd.f32 %v2174, 1e-05
      %v2176 = vrsqrt.pop %v2175
      %v2177 = vmul.f32 %v2169, %v2176
      %v2179 = vlaneseq
      %v2180 = vshrl.u32 %v2179, 7
      %v2181 = vsub.s32 0, %v2180
      %v2182 = vrot.slane %v2161, %v2181
      %v2184 = vmul.f32 %v2177, %v2182
      %v2186 = vlaneseq
      %v2187 = vshrl.u32 %v2186, 7
      %v2188 = vsub.s32 0, %v2187
      %v2189 = vrot.slane %v2162, %v2188
      %v2191 = vadd.f32 %v2184, %v2189
      %v2192 = vld [vmem:[%s8] sm:$0xf]
      %v2193 = vld [vmem:[%s8 + $0x4] sm:$0xf]
      %v2194 = vld [vmem:[%s8 + $0x8] sm:$0xf]
      %v2195 = vld [vmem:[%s8 + $0xc] sm:$0xf]
      %v2196 = vld [vmem:[%s9] sm:$0x1]
      %v2197 = vld [vmem:[%s10] sm:$0xf]
      %v2198 = vld [vmem:[%s10 + $0x4] sm:$0xf]
      %v2199 = vld [vmem:[%s10 + $0x8] sm:$0xf]
      %v2200 = vld [vmem:[%s10 + $0xc] sm:$0xf]
      %v2201 = vld [vmem:[%s11] sm:$0x1]
      %v2202 = vpack.c.bf16 %v2191, %v2191
      %v2204 = vlaneseq
      %v2205 = vshrl.u32 %v2204, 7
      %v2206 = vsub.s32 0, %v2205
      %v2207 = vrot.slane %v2196, %v2206
      %v2213 = vunpack.c.l.b16 %v2192
      %v2214 = vunpack.c.l.b16 %v2193
      %v2215 = vunpack.c.l.b16 %v2194
      %v2216 = vunpack.c.l.b16 %v2195
      %v2217 = vpack.c.b16 %v2214, %v2213
      %v2218 = vpack.c.b16 %v2216, %v2215
      %v2222 = vsel %vm674, %v2202, 0
      %2224 = vmatprep.subr.bf16.mxu0 0
      %2225 = vmatpush1.bf16.msra.mxu0 %v2217
      %2226 = vmatprep.subr.bf16.mxu0 0
      %2227 = vmatpush1.bf16.msra.mxu0 %v2218
      %2228 = vmatprep.subr.bf16.mxu0 0
      %2229 = vmatpush1.bf16.msra.mxu0 0
      %2230 = vmatprep.subr.bf16.mxu0 0
      %2231 = vmatpush1.bf16.msra.mxu0 0
      %2232 = vmatprep.subr.bf16.mxu0 0
      %2233 = vmatpush1.bf16.msra.mxu0 0
      %2234 = vmatprep.subr.bf16.mxu0 0
      %2235 = vmatpush1.bf16.msra.mxu0 0
      %2236 = vmatprep.subr.bf16.mxu0 0
      %2237 = vmatpush1.bf16.msra.mxu0 0
      %2238 = vmatprep.subr.bf16.mxu0 0
      %2239 = vmatpush1.bf16.msra.mxu0 0
      %2240 = vmatprep.subr.bf16.mxu0 0
      %2241 = vmatpush1.bf16.msra.mxu0 0
      %2242 = vmatprep.subr.bf16.mxu0 0
      %2243 = vmatpush1.bf16.msra.mxu0 0
      %2244 = vmatprep.subr.bf16.mxu0 0
      %2245 = vmatpush1.bf16.msra.mxu0 0
      %2246 = vmatprep.subr.bf16.mxu0 0
      %2247 = vmatpush1.bf16.msra.mxu0 0
      %2248 = vmatprep.subr.bf16.mxu0 0
      %2249 = vmatpush1.bf16.msra.mxu0 0
      %2250 = vmatprep.subr.bf16.mxu0 0
      %2251 = vmatpush1.bf16.msra.mxu0 0
      %2252 = vmatprep.subr.bf16.mxu0 0
      %2253 = vmatpush1.bf16.msra.mxu0 0
      %2254 = vmatprep.subr.bf16.mxu0 0
      %2255 = vmatpush1.bf16.msra.mxu0 0
      %2256 = vmatprep.mubr.bf16.mxu0 0
      %2257 = vmatmul.mubr.bf16.gmra.mrb[0].mxu0 %v2222
      %v2258 = vpop.f32.mrb[0].mxu0
      %v2259 = vadd.f32 %v2207, %v2258
      %v2260 = vpop.f32.mrb[0].mxu0
      %v2261 = vpop.f32.mrb[0].mxu0
      %v2262 = vpop.f32.mrb[0].mxu0
      %2263 = vdwg.mxu0
      %v2264 = vpack.c.bf16 %v644, %v644
      %2265 = vrot.lane.b32.xlu0 %v2217, 96
      %v2266 = vpop.permute.xlu0 %2265
      %2267 = vrot.lane.b32.xlu0 %v2218, 96
      %v2268 = vpop.permute.xlu0 %2267
      %2271 = vrot.lane.b32.xlu0 %v2207, 96
      %v2272 = vpop.permute.xlu0 %2271
      %v2275 = vsel %vm674, %v2264, 0
      %2277 = vmatprep.subr.bf16.mxu0 0
      %2278 = vmatpush1.bf16.msra.mxu0 %v2266
      %2279 = vmatprep.subr.bf16.mxu0 0
      %2280 = vmatpush1.bf16.msra.mxu0 %v2268
      %2281 = vmatprep.subr.bf16.mxu0 0
      %2282 = vmatpush1.bf16.msra.mxu0 0
      %2283 = vmatprep.subr.bf16.mxu0 0
      %2284 = vmatpush1.bf16.msra.mxu0 0
      %2285 = vmatprep.subr.bf16.mxu0 0
      %2286 = vmatpush1.bf16.msra.mxu0 0
      %2287 = vmatprep.subr.bf16.mxu0 0
      %2288 = vmatpush1.bf16.msra.mxu0 0
      %2289 = vmatprep.subr.bf16.mxu0 0
      %2290 = vmatpush1.bf16.msra.mxu0 0
      %2291 = vmatprep.subr.bf16.mxu0 0
      %2292 = vmatpush1.bf16.msra.mxu0 0
      %2293 = vmatprep.subr.bf16.mxu0 0
      %2294 = vmatpush1.bf16.msra.mxu0 0
      %2295 = vmatprep.subr.bf16.mxu0 0
      %2296 = vmatpush1.bf16.msra.mxu0 0
      %2297 = vmatprep.subr.bf16.mxu0 0
      %2298 = vmatpush1.bf16.msra.mxu0 0
      %2299 = vmatprep.subr.bf16.mxu0 0
      %2300 = vmatpush1.bf16.msra.mxu0 0
      %2301 = vmatprep.subr.bf16.mxu0 0
      %2302 = vmatpush1.bf16.msra.mxu0 0
      %2303 = vmatprep.subr.bf16.mxu0 0
      %2304 = vmatpush1.bf16.msra.mxu0 0
      %2305 = vmatprep.subr.bf16.mxu0 0
      %2306 = vmatpush1.bf16.msra.mxu0 0
      %2307 = vmatprep.subr.bf16.mxu0 0
      %2308 = vmatpush1.bf16.msra.mxu0 0
      %2309 = vmatprep.mubr.bf16.mxu0 0
      %2310 = vmatmul.mubr.bf16.gmra.mrb[0].mxu0 %v2275
      %v2311 = vpop.f32.mrb[0].mxu0
      %v2312 = vadd.f32 %v2272, %v2311
      %v2313 = vpop.f32.mrb[0].mxu0
      %v2314 = vpop.f32.mrb[0].mxu0
      %v2315 = vpop.f32.mrb[0].mxu0
      %2316 = vdwg.mxu0
      %v2318 = vsel %vm721, %v2259, 0
      %v2321 = vsel %vm721, %v2312, 0
      %2323 = vmatprep.subr.mxu0 0.0
      %2324 = vmatpush1.xpose.msra.mxu0 %v2321
      %2325 = vmatprep.subr.mxu0 0.0
      %2326 = vmatpush1.xpose.msra.mxu0 0.0
      %2327 = vmatprep.subr.mxu0 0.0
      %2328 = vmatpush1.xpose.msra.mxu0 0.0
      %2329 = vmatprep.subr.mxu0 0.0
      %2330 = vmatpush1.xpose.msra.mxu0 0.0
      %2331 = vmatprep.subr.mxu0 0.0
      %2332 = vmatpush1.xpose.msra.mxu0 0.0
      %2333 = vmatprep.subr.mxu0 0.0
      %2334 = vmatpush1.xpose.msra.mxu0 0.0
      %2335 = vmatprep.subr.mxu0 0.0
      %2336 = vmatpush1.xpose.msra.mxu0 0.0
      %2337 = vmatprep.subr.mxu0 0.0
      %2338 = vmatpush1.xpose.msra.mxu0 0.0
      %2339 = vmatprep.subr.mxu0 0.0
      %2340 = vmatpush1.xpose.msra.mxu0 0.0
      %2341 = vmatprep.subr.mxu0 0.0
      %2342 = vmatpush1.xpose.msra.mxu0 0.0
      %2343 = vmatprep.subr.mxu0 0.0
      %2344 = vmatpush1.xpose.msra.mxu0 0.0
      %2345 = vmatprep.subr.mxu0 0.0
      %2346 = vmatpush1.xpose.msra.mxu0 0.0
      %2347 = vmatprep.subr.mxu0 0.0
      %2348 = vmatpush1.xpose.msra.mxu0 0.0
      %2349 = vmatprep.subr.mxu0 0.0
      %2350 = vmatpush1.xpose.msra.mxu0 0.0
      %2351 = vmatprep.subr.mxu0 0.0
      %2352 = vmatpush1.xpose.msra.mxu0 0.0
      %2353 = vmatprep.subr.mxu0 0.0
      %2354 = vmatpush1.xpose.msra.mxu0 0.0
      %2355 = vmatprep.subr.mxu0 0.0
      %2356 = vmatpush1.xpose.msra.mxu0 0.0
      %2357 = vmatprep.subr.mxu0 0.0
      %2358 = vmatpush1.xpose.msra.mxu0 0.0
      %2359 = vmatprep.subr.mxu0 0.0
      %2360 = vmatpush1.xpose.msra.mxu0 0.0
      %2361 = vmatprep.subr.mxu0 0.0
      %2362 = vmatpush1.xpose.msra.mxu0 0.0
      %2363 = vmatprep.subr.mxu0 0.0
      %2364 = vmatpush1.xpose.msra.mxu0 0.0
      %2365 = vmatprep.subr.mxu0 0.0
      %2366 = vmatpush1.xpose.msra.mxu0 0.0
      %2367 = vmatprep.subr.mxu0 0.0
      %2368 = vmatpush1.xpose.msra.mxu0 0.0
      %2369 = vmatprep.subr.mxu0 0.0
      %2370 = vmatpush1.xpose.msra.mxu0 0.0
      %2371 = vmatprep.subr.mxu0 0.0
      %2372 = vmatpush1.xpose.msra.mxu0 0.0
      %2373 = vmatprep.subr.mxu0 0.0
      %2374 = vmatpush1.xpose.msra.mxu0 0.0
      %2375 = vmatprep.subr.mxu0 0.0
      %2376 = vmatpush1.xpose.msra.mxu0 0.0
      %2377 = vmatprep.subr.mxu0 0.0
      %2378 = vmatpush1.xpose.msra.mxu0 0.0
      %2379 = vmatprep.subr.mxu0 0.0
      %2380 = vmatpush1.xpose.msra.mxu0 0.0
      %2381 = vmatprep.subr.mxu0 0.0
      %2382 = vmatpush1.xpose.msra.mxu0 0.0
      %2383 = vmatprep.subr.mxu0 0.0
      %2384 = vmatpush1.xpose.msra.mxu0 0.0
      %2385 = vmatprep.subr.mxu0 0.0
      %2386 = vmatpush1.xpose.msra.mxu0 0.0
      %2387 = vmatprep.mubr.f32.mxu0 0.0
      %2388 = vmatmul.mubr.f32.gmra.mrb[0].mxu0 %v2318
      %v2389 = vpop.f32.mrb[0].mxu0
      %v2390 = vadd.f32 0.0, %v2389
      %v2391 = vpop.f32.mrb[0].mxu0
      %2392 = vdwg.mxu0
      %v2393 = vmul.f32 %v2390, 0.5
      %vm2394 = vcmask 41984
      %v2395 = vsel %vm2394, %v2393, -inf
      %2396 = vmax.xlane.f32.xlu0 %v2395
      %v2397 = vpop.xlane.xlu0 %2396
      %v2398 = vsub.f32 %v2393, %v2397
      %v2399 = vmul.f32 %v2398, 1.442695
      %v2400 = vpow.pop %v2399
      %v2401 = vsel %vm2394, %v2400, 0.0
      %2402 = vadd.xlane.f32.xlu0 %v2401
      %v2403 = vpop.xlane.xlu0 %2402
      %v2404 = vrcp.pop %v2403
      %v2405 = vmul.f32 %v2400, %v2404
      %2406 = vrot.lane.b32.xlu0 %v2312, 96
      %v2407 = vpop.permute.xlu0 %2406
      %vm2408 = vcmask 48128
      %v2410 = vsel %vm2408, %v2405, 0
      %vm2412 = vcmask 1045504
      %v2413 = vsel %vm2412, %v2407, 0
      %2415 = vmatprep.subr.mxu0 0.0
      %2416 = vmatpush1.msra.mxu0 %v2413
      %2417 = vmatprep.subr.mxu0 0.0
      %2418 = vmatpush1.msra.mxu0 0.0
      %2419 = vmatprep.subr.mxu0 0.0
      %2420 = vmatpush1.msra.mxu0 0.0
      %2421 = vmatprep.subr.mxu0 0.0
      %2422 = vmatpush1.msra.mxu0 0.0
      %2423 = vmatprep.subr.mxu0 0.0
      %2424 = vmatpush1.msra.mxu0 0.0
      %2425 = vmatprep.subr.mxu0 0.0
      %2426 = vmatpush1.msra.mxu0 0.0
      %2427 = vmatprep.subr.mxu0 0.0
      %2428 = vmatpush1.msra.mxu0 0.0
      %2429 = vmatprep.subr.mxu0 0.0
      %2430 = vmatpush1.msra.mxu0 0.0
      %2431 = vmatprep.subr.mxu0 0.0
      %2432 = vmatpush1.msra.mxu0 0.0
      %2433 = vmatprep.subr.mxu0 0.0
      %2434 = vmatpush1.msra.mxu0 0.0
      %2435 = vmatprep.subr.mxu0 0.0
      %2436 = vmatpush1.msra.mxu0 0.0
      %2437 = vmatprep.subr.mxu0 0.0
      %2438 = vmatpush1.msra.mxu0 0.0
      %2439 = vmatprep.subr.mxu0 0.0
      %2440 = vmatpush1.msra.mxu0 0.0
      %2441 = vmatprep.subr.mxu0 0.0
      %2442 = vmatpush1.msra.mxu0 0.0
      %2443 = vmatprep.subr.mxu0 0.0
      %2444 = vmatpush1.msra.mxu0 0.0
      %2445 = vmatprep.subr.mxu0 0.0
      %2446 = vmatpush1.msra.mxu0 0.0
      %2447 = vmatprep.subr.mxu0 0.0
      %2448 = vmatpush1.msra.mxu0 0.0
      %2449 = vmatprep.subr.mxu0 0.0
      %2450 = vmatpush1.msra.mxu0 0.0
      %2451 = vmatprep.subr.mxu0 0.0
      %2452 = vmatpush1.msra.mxu0 0.0
      %2453 = vmatprep.subr.mxu0 0.0
      %2454 = vmatpush1.msra.mxu0 0.0
      %2455 = vmatprep.subr.mxu0 0.0
      %2456 = vmatpush1.msra.mxu0 0.0
      %2457 = vmatprep.subr.mxu0 0.0
      %2458 = vmatpush1.msra.mxu0 0.0
      %2459 = vmatprep.subr.mxu0 0.0
      %2460 = vmatpush1.msra.mxu0 0.0
      %2461 = vmatprep.subr.mxu0 0.0
      %2462 = vmatpush1.msra.mxu0 0.0
      %2463 = vmatprep.subr.mxu0 0.0
      %2464 = vmatpush1.msra.mxu0 0.0
      %2465 = vmatprep.subr.mxu0 0.0
      %2466 = vmatpush1.msra.mxu0 0.0
      %2467 = vmatprep.subr.mxu0 0.0
      %2468 = vmatpush1.msra.mxu0 0.0
      %2469 = vmatprep.subr.mxu0 0.0
      %2470 = vmatpush1.msra.mxu0 0.0
      %2471 = vmatprep.subr.mxu0 0.0
      %2472 = vmatpush1.msra.mxu0 0.0
      %2473 = vmatprep.subr.mxu0 0.0
      %2474 = vmatpush1.msra.mxu0 0.0
      %2475 = vmatprep.subr.mxu0 0.0
      %2476 = vmatpush1.msra.mxu0 0.0
      %2477 = vmatprep.subr.mxu0 0.0
      %2478 = vmatpush1.msra.mxu0 0.0
      %2479 = vmatprep.mubr.f32.mxu0 0.0
      %2480 = vmatmul.mubr.f32.gmra.mrb[0].mxu0 %v2410
      %v2481 = vpop.f32.mrb[0].mxu0
      %v2482 = vadd.f32 0.0, %v2481
      %v2483 = vpop.f32.mrb[0].mxu0
      %2484 = vdwg.mxu0
      %2485 = vrot.lane.b32.xlu0 %v2259, 124
      %v2486 = vpop.permute.xlu0 %2485
      %2487 = vrot.lane.b32.xlu0 %v2312, 124
      %v2488 = vpop.permute.xlu0 %2487
      %v2489 = vsel %vm721, %v2486, 0
      %v2491 = vsel %vm721, %v2488, 0
      %2493 = vmatprep.subr.mxu0 0.0
      %2494 = vmatpush1.xpose.msra.mxu0 %v2491
      %2495 = vmatprep.subr.mxu0 0.0
      %2496 = vmatpush1.xpose.msra.mxu0 0.0
      %2497 = vmatprep.subr.mxu0 0.0
      %2498 = vmatpush1.xpose.msra.mxu0 0.0
      %2499 = vmatprep.subr.mxu0 0.0
      %2500 = vmatpush1.xpose.msra.mxu0 0.0
      %2501 = vmatprep.subr.mxu0 0.0
      %2502 = vmatpush1.xpose.msra.mxu0 0.0
      %2503 = vmatprep.subr.mxu0 0.0
      %2504 = vmatpush1.xpose.msra.mxu0 0.0
      %2505 = vmatprep.subr.mxu0 0.0
      %2506 = vmatpush1.xpose.msra.mxu0 0.0
      %2507 = vmatprep.subr.mxu0 0.0
      %2508 = vmatpush1.xpose.msra.mxu0 0.0
      %2509 = vmatprep.subr.mxu0 0.0
      %2510 = vmatpush1.xpose.msra.mxu0 0.0
      %2511 = vmatprep.subr.mxu0 0.0
      %2512 = vmatpush1.xpose.msra.mxu0 0.0
      %2513 = vmatprep.subr.mxu0 0.0
      %2514 = vmatpush1.xpose.msra.mxu0 0.0
      %2515 = vmatprep.subr.mxu0 0.0
      %2516 = vmatpush1.xpose.msra.mxu0 0.0
      %2517 = vmatprep.subr.mxu0 0.0
      %2518 = vmatpush1.xpose.msra.mxu0 0.0
      %2519 = vmatprep.subr.mxu0 0.0
      %2520 = vmatpush1.xpose.msra.mxu0 0.0
      %2521 = vmatprep.subr.mxu0 0.0
      %2522 = vmatpush1.xpose.msra.mxu0 0.0
      %2523 = vmatprep.subr.mxu0 0.0
      %2524 = vmatpush1.xpose.msra.mxu0 0.0
      %2525 = vmatprep.subr.mxu0 0.0
      %2526 = vmatpush1.xpose.msra.mxu0 0.0
      %2527 = vmatprep.subr.mxu0 0.0
      %2528 = vmatpush1.xpose.msra.mxu0 0.0
      %2529 = vmatprep.subr.mxu0 0.0
      %2530 = vmatpush1.xpose.msra.mxu0 0.0
      %2531 = vmatprep.subr.mxu0 0.0
      %2532 = vmatpush1.xpose.msra.mxu0 0.0
      %2533 = vmatprep.subr.mxu0 0.0
      %2534 = vmatpush1.xpose.msra.mxu0 0.0
      %2535 = vmatprep.subr.mxu0 0.0
      %2536 = vmatpush1.xpose.msra.mxu0 0.0
      %2537 = vmatprep.subr.mxu0 0.0
      %2538 = vmatpush1.xpose.msra.mxu0 0.0
      %2539 = vmatprep.subr.mxu0 0.0
      %2540 = vmatpush1.xpose.msra.mxu0 0.0
      %2541 = vmatprep.subr.mxu0 0.0
      %2542 = vmatpush1.xpose.msra.mxu0 0.0
      %2543 = vmatprep.subr.mxu0 0.0
      %2544 = vmatpush1.xpose.msra.mxu0 0.0
      %2545 = vmatprep.subr.mxu0 0.0
      %2546 = vmatpush1.xpose.msra.mxu0 0.0
      %2547 = vmatprep.subr.mxu0 0.0
      %2548 = vmatpush1.xpose.msra.mxu0 0.0
      %2549 = vmatprep.subr.mxu0 0.0
      %2550 = vmatpush1.xpose.msra.mxu0 0.0
      %2551 = vmatprep.subr.mxu0 0.0
      %2552 = vmatpush1.xpose.msra.mxu0 0.0
      %2553 = vmatprep.subr.mxu0 0.0
      %2554 = vmatpush1.xpose.msra.mxu0 0.0
      %2555 = vmatprep.subr.mxu0 0.0
      %2556 = vmatpush1.xpose.msra.mxu0 0.0
      %2557 = vmatprep.mubr.f32.mxu0 0.0
      %2558 = vmatmul.mubr.f32.gmra.mrb[0].mxu0 %v2489
      %v2559 = vpop.f32.mrb[0].mxu0
      %v2560 = vadd.f32 0.0, %v2559
      %v2561 = vpop.f32.mrb[0].mxu0
      %2562 = vdwg.mxu0
      %v2563 = vmul.f32 %v2560, 0.5
      %v2564 = vsel %vm2394, %v2563, -inf
      %2565 = vmax.xlane.f32.xlu0 %v2564
      %v2566 = vpop.xlane.xlu0 %2565
      %v2567 = vsub.f32 %v2563, %v2566
      %v2568 = vmul.f32 %v2567, 1.442695
      %v2569 = vpow.pop %v2568
      %v2570 = vsel %vm2394, %v2569, 0.0
      %2571 = vadd.xlane.f32.xlu0 %v2570
      %v2572 = vpop.xlane.xlu0 %2571
      %v2573 = vrcp.pop %v2572
      %v2574 = vmul.f32 %v2569, %v2573
      %2575 = vrot.lane.b32.xlu0 %v2312, 92
      %v2576 = vpop.permute.xlu0 %2575
      %v2578 = vsel %vm2408, %v2574, 0
      %v2580 = vsel %vm2412, %v2576, 0
      %2582 = vmatprep.subr.mxu0 0.0
      %2583 = vmatpush1.msra.mxu0 %v2580
      %2584 = vmatprep.subr.mxu0 0.0
      %2585 = vmatpush1.msra.mxu0 0.0
      %2586 = vmatprep.subr.mxu0 0.0
      %2587 = vmatpush1.msra.mxu0 0.0
      %2588 = vmatprep.subr.mxu0 0.0
      %2589 = vmatpush1.msra.mxu0 0.0
      %2590 = vmatprep.subr.mxu0 0.0
      %2591 = vmatpush1.msra.mxu0 0.0
      %2592 = vmatprep.subr.mxu0 0.0
      %2593 = vmatpush1.msra.mxu0 0.0
      %2594 = vmatprep.subr.mxu0 0.0
      %2595 = vmatpush1.msra.mxu0 0.0
      %2596 = vmatprep.subr.mxu0 0.0
      %2597 = vmatpush1.msra.mxu0 0.0
      %2598 = vmatprep.subr.mxu0 0.0
      %2599 = vmatpush1.msra.mxu0 0.0
      %2600 = vmatprep.subr.mxu0 0.0
      %2601 = vmatpush1.msra.mxu0 0.0
      %2602 = vmatprep.subr.mxu0 0.0
      %2603 = vmatpush1.msra.mxu0 0.0
      %2604 = vmatprep.subr.mxu0 0.0
      %2605 = vmatpush1.msra.mxu0 0.0
      %2606 = vmatprep.subr.mxu0 0.0
      %2607 = vmatpush1.msra.mxu0 0.0
      %2608 = vmatprep.subr.mxu0 0.0
      %2609 = vmatpush1.msra.mxu0 0.0
      %2610 = vmatprep.subr.mxu0 0.0
      %2611 = vmatpush1.msra.mxu0 0.0
      %2612 = vmatprep.subr.mxu0 0.0
      %2613 = vmatpush1.msra.mxu0 0.0
      %2614 = vmatprep.subr.mxu0 0.0
      %2615 = vmatpush1.msra.mxu0 0.0
      %2616 = vmatprep.subr.mxu0 0.0
      %2617 = vmatpush1.msra.mxu0 0.0
      %2618 = vmatprep.subr.mxu0 0.0
      %2619 = vmatpush1.msra.mxu0 0.0
      %2620 = vmatprep.subr.mxu0 0.0
      %2621 = vmatpush1.msra.mxu0 0.0
      %2622 = vmatprep.subr.mxu0 0.0
      %2623 = vmatpush1.msra.mxu0 0.0
      %2624 = vmatprep.subr.mxu0 0.0
      %2625 = vmatpush1.msra.mxu0 0.0
      %2626 = vmatprep.subr.mxu0 0.0
      %2627 = vmatpush1.msra.mxu0 0.0
      %2628 = vmatprep.subr.mxu0 0.0
      %2629 = vmatpush1.msra.mxu0 0.0
      %2630 = vmatprep.subr.mxu0 0.0
      %2631 = vmatpush1.msra.mxu0 0.0
      %2632 = vmatprep.subr.mxu0 0.0
      %2633 = vmatpush1.msra.mxu0 0.0
      %2634 = vmatprep.subr.mxu0 0.0
      %2635 = vmatpush1.msra.mxu0 0.0
      %2636 = vmatprep.subr.mxu0 0.0
      %2637 = vmatpush1.msra.mxu0 0.0
      %2638 = vmatprep.subr.mxu0 0.0
      %2639 = vmatpush1.msra.mxu0 0.0
      %2640 = vmatprep.subr.mxu0 0.0
      %2641 = vmatpush1.msra.mxu0 0.0
      %2642 = vmatprep.subr.mxu0 0.0
      %2643 = vmatpush1.msra.mxu0 0.0
      %2644 = vmatprep.subr.mxu0 0.0
      %2645 = vmatpush1.msra.mxu0 0.0
      %2646 = vmatprep.mubr.f32.mxu0 0.0
      %2647 = vmatmul.mubr.f32.gmra.mrb[0].mxu0 %v2578
      %v2648 = vpop.f32.mrb[0].mxu0
      %v2649 = vadd.f32 0.0, %v2648
      %v2650 = vpop.f32.mrb[0].mxu0
      %2651 = vdwg.mxu0
      %2652 = vrot.lane.b32.xlu0 %v2259, 120
      %v2653 = vpop.permute.xlu0 %2652
      %2654 = vrot.lane.b32.xlu0 %v2312, 120
      %v2655 = vpop.permute.xlu0 %2654
      %v2656 = vsel %vm721, %v2653, 0
      %v2658 = vsel %vm721, %v2655, 0
      %2660 = vmatprep.subr.mxu0 0.0
      %2661 = vmatpush1.xpose.msra.mxu0 %v2658
      %2662 = vmatprep.subr.mxu0 0.0
      %2663 = vmatpush1.xpose.msra.mxu0 0.0
      %2664 = vmatprep.subr.mxu0 0.0
      %2665 = vmatpush1.xpose.msra.mxu0 0.0
      %2666 = vmatprep.subr.mxu0 0.0
      %2667 = vmatpush1.xpose.msra.mxu0 0.0
      %2668 = vmatprep.subr.mxu0 0.0
      %2669 = vmatpush1.xpose.msra.mxu0 0.0
      %2670 = vmatprep.subr.mxu0 0.0
      %2671 = vmatpush1.xpose.msra.mxu0 0.0
      %2672 = vmatprep.subr.mxu0 0.0
      %2673 = vmatpush1.xpose.msra.mxu0 0.0
      %2674 = vmatprep.subr.mxu0 0.0
      %2675 = vmatpush1.xpose.msra.mxu0 0.0
      %2676 = vmatprep.subr.mxu0 0.0
      %2677 = vmatpush1.xpose.msra.mxu0 0.0
      %2678 = vmatprep.subr.mxu0 0.0
      %2679 = vmatpush1.xpose.msra.mxu0 0.0
      %2680 = vmatprep.subr.mxu0 0.0
      %2681 = vmatpush1.xpose.msra.mxu0 0.0
      %2682 = vmatprep.subr.mxu0 0.0
      %2683 = vmatpush1.xpose.msra.mxu0 0.0
      %2684 = vmatprep.subr.mxu0 0.0
      %2685 = vmatpush1.xpose.msra.mxu0 0.0
      %2686 = vmatprep.subr.mxu0 0.0
      %2687 = vmatpush1.xpose.msra.mxu0 0.0
      %2688 = vmatprep.subr.mxu0 0.0
      %2689 = vmatpush1.xpose.msra.mxu0 0.0
      %2690 = vmatprep.subr.mxu0 0.0
      %2691 = vmatpush1.xpose.msra.mxu0 0.0
      %2692 = vmatprep.subr.mxu0 0.0
      %2693 = vmatpush1.xpose.msra.mxu0 0.0
      %2694 = vmatprep.subr.mxu0 0.0
      %2695 = vmatpush1.xpose.msra.mxu0 0.0
      %2696 = vmatprep.subr.mxu0 0.0
      %2697 = vmatpush1.xpose.msra.mxu0 0.0
      %2698 = vmatprep.subr.mxu0 0.0
      %2699 = vmatpush1.xpose.msra.mxu0 0.0
      %2700 = vmatprep.subr.mxu0 0.0
      %2701 = vmatpush1.xpose.msra.mxu0 0.0
      %2702 = vmatprep.subr.mxu0 0.0
      %2703 = vmatpush1.xpose.msra.mxu0 0.0
      %2704 = vmatprep.subr.mxu0 0.0
      %2705 = vmatpush1.xpose.msra.mxu0 0.0
      %2706 = vmatprep.subr.mxu0 0.0
      %2707 = vmatpush1.xpose.msra.mxu0 0.0
      %2708 = vmatprep.subr.mxu0 0.0
      %2709 = vmatpush1.xpose.msra.mxu0 0.0
      %2710 = vmatprep.subr.mxu0 0.0
      %2711 = vmatpush1.xpose.msra.mxu0 0.0
      %2712 = vmatprep.subr.mxu0 0.0
      %2713 = vmatpush1.xpose.msra.mxu0 0.0
      %2714 = vmatprep.subr.mxu0 0.0
      %2715 = vmatpush1.xpose.msra.mxu0 0.0
      %2716 = vmatprep.subr.mxu0 0.0
      %2717 = vmatpush1.xpose.msra.mxu0 0.0
      %2718 = vmatprep.subr.mxu0 0.0
      %2719 = vmatpush1.xpose.msra.mxu0 0.0
      %2720 = vmatprep.subr.mxu0 0.0
      %2721 = vmatpush1.xpose.msra.mxu0 0.0
      %2722 = vmatprep.subr.mxu0 0.0
      %2723 = vmatpush1.xpose.msra.mxu0 0.0
      %2724 = vmatprep.mubr.f32.mxu0 0.0
      %2725 = vmatmul.mubr.f32.gmra.mrb[0].mxu0 %v2656
      %v2726 = vpop.f32.mrb[0].mxu0
      %v2727 = vadd.f32 0.0, %v2726
      %v2728 = vpop.f32.mrb[0].mxu0
      %2729 = vdwg.mxu0
      %v2730 = vmul.f32 %v2727, 0.5
      %v2731 = vsel %vm2394, %v2730, -inf
      %2732 = vmax.xlane.f32.xlu0 %v2731
      %v2733 = vpop.xlane.xlu0 %2732
      %v2734 = vsub.f32 %v2730, %v2733
      %v2735 = vmul.f32 %v2734, 1.442695
      %v2736 = vpow.pop %v2735
      %v2737 = vsel %vm2394, %v2736, 0.0
      %2738 = vadd.xlane.f32.xlu0 %v2737
      %v2739 = vpop.xlane.xlu0 %2738
      %v2740 = vrcp.pop %v2739
      %v2741 = vmul.f32 %v2736, %v2740
      %2742 = vrot.lane.b32.xlu0 %v2312, 88
      %v2743 = vpop.permute.xlu0 %2742
      %v2745 = vsel %vm2408, %v2741, 0
      %v2747 = vsel %vm2412, %v2743, 0
      %2749 = vmatprep.subr.mxu0 0.0
      %2750 = vmatpush1.msra.mxu0 %v2747
      %2751 = vmatprep.subr.mxu0 0.0
      %2752 = vmatpush1.msra.mxu0 0.0
      %2753 = vmatprep.subr.mxu0 0.0
      %2754 = vmatpush1.msra.mxu0 0.0
      %2755 = vmatprep.subr.mxu0 0.0
      %2756 = vmatpush1.msra.mxu0 0.0
      %2757 = vmatprep.subr.mxu0 0.0
      %2758 = vmatpush1.msra.mxu0 0.0
      %2759 = vmatprep.subr.mxu0 0.0
      %2760 = vmatpush1.msra.mxu0 0.0
      %2761 = vmatprep.subr.mxu0 0.0
      %2762 = vmatpush1.msra.mxu0 0.0
      %2763 = vmatprep.subr.mxu0 0.0
      %2764 = vmatpush1.msra.mxu0 0.0
      %2765 = vmatprep.subr.mxu0 0.0
      %2766 = vmatpush1.msra.mxu0 0.0
      %2767 = vmatprep.subr.mxu0 0.0
      %2768 = vmatpush1.msra.mxu0 0.0
      %2769 = vmatprep.subr.mxu0 0.0
      %2770 = vmatpush1.msra.mxu0 0.0
      %2771 = vmatprep.subr.mxu0 0.0
      %2772 = vmatpush1.msra.mxu0 0.0
      %2773 = vmatprep.subr.mxu0 0.0
      %2774 = vmatpush1.msra.mxu0 0.0
      %2775 = vmatprep.subr.mxu0 0.0
      %2776 = vmatpush1.msra.mxu0 0.0
      %2777 = vmatprep.subr.mxu0 0.0
      %2778 = vmatpush1.msra.mxu0 0.0
      %2779 = vmatprep.subr.mxu0 0.0
      %2780 = vmatpush1.msra.mxu0 0.0
      %2781 = vmatprep.subr.mxu0 0.0
      %2782 = vmatpush1.msra.mxu0 0.0
      %2783 = vmatprep.subr.mxu0 0.0
      %2784 = vmatpush1.msra.mxu0 0.0
      %2785 = vmatprep.subr.mxu0 0.0
      %2786 = vmatpush1.msra.mxu0 0.0
      %2787 = vmatprep.subr.mxu0 0.0
      %2788 = vmatpush1.msra.mxu0 0.0
      %2789 = vmatprep.subr.mxu0 0.0
      %2790 = vmatpush1.msra.mxu0 0.0
      %2791 = vmatprep.subr.mxu0 0.0
      %2792 = vmatpush1.msra.mxu0 0.0
      %2793 = vmatprep.subr.mxu0 0.0
      %2794 = vmatpush1.msra.mxu0 0.0
      %2795 = vmatprep.subr.mxu0 0.0
      %2796 = vmatpush1.msra.mxu0 0.0
      %2797 = vmatprep.subr.mxu0 0.0
      %2798 = vmatpush1.msra.mxu0 0.0
      %2799 = vmatprep.subr.mxu0 0.0
      %2800 = vmatpush1.msra.mxu0 0.0
      %2801 = vmatprep.subr.mxu0 0.0
      %2802 = vmatpush1.msra.mxu0 0.0
      %2803 = vmatprep.subr.mxu0 0.0
      %2804 = vmatpush1.msra.mxu0 0.0
      %2805 = vmatprep.subr.mxu0 0.0
      %2806 = vmatpush1.msra.mxu0 0.0
      %2807 = vmatprep.subr.mxu0 0.0
      %2808 = vmatpush1.msra.mxu0 0.0
      %2809 = vmatprep.subr.mxu0 0.0
      %2810 = vmatpush1.msra.mxu0 0.0
      %2811 = vmatprep.subr.mxu0 0.0
      %2812 = vmatpush1.msra.mxu0 0.0
      %2813 = vmatprep.mubr.f32.mxu0 0.0
      %2814 = vmatmul.mubr.f32.gmra.mrb[0].mxu0 %v2745
      %v2815 = vpop.f32.mrb[0].mxu0
      %v2816 = vadd.f32 0.0, %v2815
      %v2817 = vpop.f32.mrb[0].mxu0
      %2818 = vdwg.mxu0
      %2819 = vrot.lane.b32.xlu0 %v2259, 116
      %v2820 = vpop.permute.xlu0 %2819
      %2821 = vrot.lane.b32.xlu0 %v2312, 116
      %v2822 = vpop.permute.xlu0 %2821
      %v2823 = vsel %vm721, %v2820, 0
      %v2825 = vsel %vm721, %v2822, 0
      %2827 = vmatprep.subr.mxu0 0.0
      %2828 = vmatpush1.xpose.msra.mxu0 %v2825
      %2829 = vmatprep.subr.mxu0 0.0
      %2830 = vmatpush1.xpose.msra.mxu0 0.0
      %2831 = vmatprep.subr.mxu0 0.0
      %2832 = vmatpush1.xpose.msra.mxu0 0.0
      %2833 = vmatprep.subr.mxu0 0.0
      %2834 = vmatpush1.xpose.msra.mxu0 0.0
      %2835 = vmatprep.subr.mxu0 0.0
      %2836 = vmatpush1.xpose.msra.mxu0 0.0
      %2837 = vmatprep.subr.mxu0 0.0
      %2838 = vmatpush1.xpose.msra.mxu0 0.0
      %2839 = vmatprep.subr.mxu0 0.0
      %2840 = vmatpush1.xpose.msra.mxu0 0.0
      %2841 = vmatprep.subr.mxu0 0.0
      %2842 = vmatpush1.xpose.msra.mxu0 0.0
      %2843 = vmatprep.subr.mxu0 0.0
      %2844 = vmatpush1.xpose.msra.mxu0 0.0
      %2845 = vmatprep.subr.mxu0 0.0
      %2846 = vmatpush1.xpose.msra.mxu0 0.0
      %2847 = vmatprep.subr.mxu0 0.0
      %2848 = vmatpush1.xpose.msra.mxu0 0.0
      %2849 = vmatprep.subr.mxu0 0.0
      %2850 = vmatpush1.xpose.msra.mxu0 0.0
      %2851 = vmatprep.subr.mxu0 0.0
      %2852 = vmatpush1.xpose.msra.mxu0 0.0
      %2853 = vmatprep.subr.mxu0 0.0
      %2854 = vmatpush1.xpose.msra.mxu0 0.0
      %2855 = vmatprep.subr.mxu0 0.0
      %2856 = vmatpush1.xpose.msra.mxu0 0.0
      %2857 = vmatprep.subr.mxu0 0.0
      %2858 = vmatpush1.xpose.msra.mxu0 0.0
      %2859 = vmatprep.subr.mxu0 0.0
      %2860 = vmatpush1.xpose.msra.mxu0 0.0
      %2861 = vmatprep.subr.mxu0 0.0
      %2862 = vmatpush1.xpose.msra.mxu0 0.0
      %2863 = vmatprep.subr.mxu0 0.0
      %2864 = vmatpush1.xpose.msra.mxu0 0.0
      %2865 = vmatprep.subr.mxu0 0.0
      %2866 = vmatpush1.xpose.msra.mxu0 0.0
      %2867 = vmatprep.subr.mxu0 0.0
      %2868 = vmatpush1.xpose.msra.mxu0 0.0
      %2869 = vmatprep.subr.mxu0 0.0
      %2870 = vmatpush1.xpose.msra.mxu0 0.0
      %2871 = vmatprep.subr.mxu0 0.0
      %2872 = vmatpush1.xpose.msra.mxu0 0.0
      %2873 = vmatprep.subr.mxu0 0.0
      %2874 = vmatpush1.xpose.msra.mxu0 0.0
      %2875 = vmatprep.subr.mxu0 0.0
      %2876 = vmatpush1.xpose.msra.mxu0 0.0
      %2877 = vmatprep.subr.mxu0 0.0
      %2878 = vmatpush1.xpose.msra.mxu0 0.0
      %2879 = vmatprep.subr.mxu0 0.0
      %2880 = vmatpush1.xpose.msra.mxu0 0.0
      %2881 = vmatprep.subr.mxu0 0.0
      %2882 = vmatpush1.xpose.msra.mxu0 0.0
      %2883 = vmatprep.subr.mxu0 0.0
      %2884 = vmatpush1.xpose.msra.mxu0 0.0
      %2885 = vmatprep.subr.mxu0 0.0
      %2886 = vmatpush1.xpose.msra.mxu0 0.0
      %2887 = vmatprep.subr.mxu0 0.0
      %2888 = vmatpush1.xpose.msra.mxu0 0.0
      %2889 = vmatprep.subr.mxu0 0.0
      %2890 = vmatpush1.xpose.msra.mxu0 0.0
      %2891 = vmatprep.mubr.f32.mxu0 0.0
      %2892 = vmatmul.mubr.f32.gmra.mrb[0].mxu0 %v2823
      %v2893 = vpop.f32.mrb[0].mxu0
      %v2894 = vadd.f32 0.0, %v2893
      %v2895 = vpop.f32.mrb[0].mxu0
      %2896 = vdwg.mxu0
      %v2897 = vmul.f32 %v2894, 0.5
      %v2898 = vsel %vm2394, %v2897, -inf
      %2899 = vmax.xlane.f32.xlu0 %v2898
      %v2900 = vpop.xlane.xlu0 %2899
      %v2901 = vsub.f32 %v2897, %v2900
      %v2902 = vmul.f32 %v2901, 1.442695
      %v2903 = vpow.pop %v2902
      %v2904 = vsel %vm2394, %v2903, 0.0
      %2905 = vadd.xlane.f32.xlu0 %v2904
      %v2906 = vpop.xlane.xlu0 %2905
      %v2907 = vrcp.pop %v2906
      %v2908 = vmul.f32 %v2903, %v2907
      %2909 = vrot.lane.b32.xlu0 %v2312, 84
      %v2910 = vpop.permute.xlu0 %2909
      %v2912 = vsel %vm2408, %v2908, 0
      %v2914 = vsel %vm2412, %v2910, 0
      %2916 = vmatprep.subr.mxu0 0.0
      %2917 = vmatpush1.msra.mxu0 %v2914
      %2918 = vmatprep.subr.mxu0 0.0
      %2919 = vmatpush1.msra.mxu0 0.0
      %2920 = vmatprep.subr.mxu0 0.0
      %2921 = vmatpush1.msra.mxu0 0.0
      %2922 = vmatprep.subr.mxu0 0.0
      %2923 = vmatpush1.msra.mxu0 0.0
      %2924 = vmatprep.subr.mxu0 0.0
      %2925 = vmatpush1.msra.mxu0 0.0
      %2926 = vmatprep.subr.mxu0 0.0
      %2927 = vmatpush1.msra.mxu0 0.0
      %2928 = vmatprep.subr.mxu0 0.0
      %2929 = vmatpush1.msra.mxu0 0.0
      %2930 = vmatprep.subr.mxu0 0.0
      %2931 = vmatpush1.msra.mxu0 0.0
      %2932 = vmatprep.subr.mxu0 0.0
      %2933 = vmatpush1.msra.mxu0 0.0
      %2934 = vmatprep.subr.mxu0 0.0
      %2935 = vmatpush1.msra.mxu0 0.0
      %2936 = vmatprep.subr.mxu0 0.0
      %2937 = vmatpush1.msra.mxu0 0.0
      %2938 = vmatprep.subr.mxu0 0.0
      %2939 = vmatpush1.msra.mxu0 0.0
      %2940 = vmatprep.subr.mxu0 0.0
      %2941 = vmatpush1.msra.mxu0 0.0
      %2942 = vmatprep.subr.mxu0 0.0
      %2943 = vmatpush1.msra.mxu0 0.0
      %2944 = vmatprep.subr.mxu0 0.0
      %2945 = vmatpush1.msra.mxu0 0.0
      %2946 = vmatprep.subr.mxu0 0.0
      %2947 = vmatpush1.msra.mxu0 0.0
      %2948 = vmatprep.subr.mxu0 0.0
      %2949 = vmatpush1.msra.mxu0 0.0
      %2950 = vmatprep.subr.mxu0 0.0
      %2951 = vmatpush1.msra.mxu0 0.0
      %2952 = vmatprep.subr.mxu0 0.0
      %2953 = vmatpush1.msra.mxu0 0.0
      %2954 = vmatprep.subr.mxu0 0.0
      %2955 = vmatpush1.msra.mxu0 0.0
      %2956 = vmatprep.subr.mxu0 0.0
      %2957 = vmatpush1.msra.mxu0 0.0
      %2958 = vmatprep.subr.mxu0 0.0
      %2959 = vmatpush1.msra.mxu0 0.0
      %2960 = vmatprep.subr.mxu0 0.0
      %2961 = vmatpush1.msra.mxu0 0.0
      %2962 = vmatprep.subr.mxu0 0.0
      %2963 = vmatpush1.msra.mxu0 0.0
      %2964 = vmatprep.subr.mxu0 0.0
      %2965 = vmatpush1.msra.mxu0 0.0
      %2966 = vmatprep.subr.mxu0 0.0
      %2967 = vmatpush1.msra.mxu0 0.0
      %2968 = vmatprep.subr.mxu0 0.0
      %2969 = vmatpush1.msra.mxu0 0.0
      %2970 = vmatprep.subr.mxu0 0.0
      %2971 = vmatpush1.msra.mxu0 0.0
      %2972 = vmatprep.subr.mxu0 0.0
      %2973 = vmatpush1.msra.mxu0 0.0
      %2974 = vmatprep.subr.mxu0 0.0
      %2975 = vmatpush1.msra.mxu0 0.0
      %2976 = vmatprep.subr.mxu0 0.0
      %2977 = vmatpush1.msra.mxu0 0.0
      %2978 = vmatprep.subr.mxu0 0.0
      %2979 = vmatpush1.msra.mxu0 0.0
      %2980 = vmatprep.mubr.f32.mxu0 0.0
      %2981 = vmatmul.mubr.f32.gmra.mrb[0].mxu0 %v2912
      %v2982 = vpop.f32.mrb[0].mxu0
      %v2983 = vadd.f32 0.0, %v2982
      %v2984 = vpop.f32.mrb[0].mxu0
      %2985 = vdwg.mxu0
      %2986 = vrot.lane.b32.xlu0 %v2259, 112
      %v2987 = vpop.permute.xlu0 %2986
      %2988 = vrot.lane.b32.xlu0 %v2312, 112
      %v2989 = vpop.permute.xlu0 %2988
      %v2990 = vsel %vm721, %v2987, 0
      %v2992 = vsel %vm721, %v2989, 0
      %2994 = vmatprep.subr.mxu0 0.0
      %2995 = vmatpush1.xpose.msra.mxu0 %v2992
      %2996 = vmatprep.subr.mxu0 0.0
      %2997 = vmatpush1.xpose.msra.mxu0 0.0
      %2998 = vmatprep.subr.mxu0 0.0
      %2999 = vmatpush1.xpose.msra.mxu0 0.0
      %3000 = vmatprep.subr.mxu0 0.0
      %3001 = vmatpush1.xpose.msra.mxu0 0.0
      %3002 = vmatprep.subr.mxu0 0.0
      %3003 = vmatpush1.xpose.msra.mxu0 0.0
      %3004 = vmatprep.subr.mxu0 0.0
      %3005 = vmatpush1.xpose.msra.mxu0 0.0
      %3006 = vmatprep.subr.mxu0 0.0
      %3007 = vmatpush1.xpose.msra.mxu0 0.0
      %3008 = vmatprep.subr.mxu0 0.0
      %3009 = vmatpush1.xpose.msra.mxu0 0.0
      %3010 = vmatprep.subr.mxu0 0.0
      %3011 = vmatpush1.xpose.msra.mxu0 0.0
      %3012 = vmatprep.subr.mxu0 0.0
      %3013 = vmatpush1.xpose.msra.mxu0 0.0
      %3014 = vmatprep.subr.mxu0 0.0
      %3015 = vmatpush1.xpose.msra.mxu0 0.0
      %3016 = vmatprep.subr.mxu0 0.0
      %3017 = vmatpush1.xpose.msra.mxu0 0.0
      %3018 = vmatprep.subr.mxu0 0.0
      %3019 = vmatpush1.xpose.msra.mxu0 0.0
      %3020 = vmatprep.subr.mxu0 0.0
      %3021 = vmatpush1.xpose.msra.mxu0 0.0
      %3022 = vmatprep.subr.mxu0 0.0
      %3023 = vmatpush1.xpose.msra.mxu0 0.0
      %3024 = vmatprep.subr.mxu0 0.0
      %3025 = vmatpush1.xpose.msra.mxu0 0.0
      %3026 = vmatprep.subr.mxu0 0.0
      %3027 = vmatpush1.xpose.msra.mxu0 0.0
      %3028 = vmatprep.subr.mxu0 0.0
      %3029 = vmatpush1.xpose.msra.mxu0 0.0
      %3030 = vmatprep.subr.mxu0 0.0
      %3031 = vmatpush1.xpose.msra.mxu0 0.0
      %3032 = vmatprep.subr.mxu0 0.0
      %3033 = vmatpush1.xpose.msra.mxu0 0.0
      %3034 = vmatprep.subr.mxu0 0.0
      %3035 = vmatpush1.xpose.msra.mxu0 0.0
      %3036 = vmatprep.subr.mxu0 0.0
      %3037 = vmatpush1.xpose.msra.mxu0 0.0
      %3038 = vmatprep.subr.mxu0 0.0
      %3039 = vmatpush1.xpose.msra.mxu0 0.0
      %3040 = vmatprep.subr.mxu0 0.0
      %3041 = vmatpush1.xpose.msra.mxu0 0.0
      %3042 = vmatprep.subr.mxu0 0.0
      %3043 = vmatpush1.xpose.msra.mxu0 0.0
      %3044 = vmatprep.subr.mxu0 0.0
      %3045 = vmatpush1.xpose.msra.mxu0 0.0
      %3046 = vmatprep.subr.mxu0 0.0
      %3047 = vmatpush1.xpose.msra.mxu0 0.0
      %3048 = vmatprep.subr.mxu0 0.0
      %3049 = vmatpush1.xpose.msra.mxu0 0.0
      %3050 = vmatprep.subr.mxu0 0.0
      %3051 = vmatpush1.xpose.msra.mxu0 0.0
      %3052 = vmatprep.subr.mxu0 0.0
      %3053 = vmatpush1.xpose.msra.mxu0 0.0
      %3054 = vmatprep.subr.mxu0 0.0
      %3055 = vmatpush1.xpose.msra.mxu0 0.0
      %3056 = vmatprep.subr.mxu0 0.0
      %3057 = vmatpush1.xpose.msra.mxu0 0.0
      %3058 = vmatprep.mubr.f32.mxu0 0.0
      %3059 = vmatmul.mubr.f32.gmra.mrb[0].mxu0 %v2990
      %v3060 = vpop.f32.mrb[0].mxu0
      %v3061 = vadd.f32 0.0, %v3060
      %v3062 = vpop.f32.mrb[0].mxu0
      %3063 = vdwg.mxu0
      %v3064 = vmul.f32 %v3061, 0.5
      %v3065 = vsel %vm2394, %v3064, -inf
      %3066 = vmax.xlane.f32.xlu0 %v3065
      %v3067 = vpop.xlane.xlu0 %3066
      %v3068 = vsub.f32 %v3064, %v3067
      %v3069 = vmul.f32 %v3068, 1.442695
      %v3070 = vpow.pop %v3069
      %v3071 = vsel %vm2394, %v3070, 0.0
      %3072 = vadd.xlane.f32.xlu0 %v3071
      %v3073 = vpop.xlane.xlu0 %3072
      %v3074 = vrcp.pop %v3073
      %v3075 = vmul.f32 %v3070, %v3074
      %3076 = vrot.lane.b32.xlu0 %v2312, 80
      %v3077 = vpop.permute.xlu0 %3076
      %v3079 = vsel %vm2408, %v3075, 0
      %v3081 = vsel %vm2412, %v3077, 0
      %3083 = vmatprep.subr.mxu0 0.0
      %3084 = vmatpush1.msra.mxu0 %v3081
      %3085 = vmatprep.subr.mxu0 0.0
      %3086 = vmatpush1.msra.mxu0 0.0
      %3087 = vmatprep.subr.mxu0 0.0
      %3088 = vmatpush1.msra.mxu0 0.0
      %3089 = vmatprep.subr.mxu0 0.0
      %3090 = vmatpush1.msra.mxu0 0.0
      %3091 = vmatprep.subr.mxu0 0.0
      %3092 = vmatpush1.msra.mxu0 0.0
      %3093 = vmatprep.subr.mxu0 0.0
      %3094 = vmatpush1.msra.mxu0 0.0
      %3095 = vmatprep.subr.mxu0 0.0
      %3096 = vmatpush1.msra.mxu0 0.0
      %3097 = vmatprep.subr.mxu0 0.0
      %3098 = vmatpush1.msra.mxu0 0.0
      %3099 = vmatprep.subr.mxu0 0.0
      %3100 = vmatpush1.msra.mxu0 0.0
      %3101 = vmatprep.subr.mxu0 0.0
      %3102 = vmatpush1.msra.mxu0 0.0
      %3103 = vmatprep.subr.mxu0 0.0
      %3104 = vmatpush1.msra.mxu0 0.0
      %3105 = vmatprep.subr.mxu0 0.0
      %3106 = vmatpush1.msra.mxu0 0.0
      %3107 = vmatprep.subr.mxu0 0.0
      %3108 = vmatpush1.msra.mxu0 0.0
      %3109 = vmatprep.subr.mxu0 0.0
      %3110 = vmatpush1.msra.mxu0 0.0
      %3111 = vmatprep.subr.mxu0 0.0
      %3112 = vmatpush1.msra.mxu0 0.0
      %3113 = vmatprep.subr.mxu0 0.0
      %3114 = vmatpush1.msra.mxu0 0.0
      %3115 = vmatprep.subr.mxu0 0.0
      %3116 = vmatpush1.msra.mxu0 0.0
      %3117 = vmatprep.subr.mxu0 0.0
      %3118 = vmatpush1.msra.mxu0 0.0
      %3119 = vmatprep.subr.mxu0 0.0
      %3120 = vmatpush1.msra.mxu0 0.0
      %3121 = vmatprep.subr.mxu0 0.0
      %3122 = vmatpush1.msra.mxu0 0.0
      %3123 = vmatprep.subr.mxu0 0.0
      %3124 = vmatpush1.msra.mxu0 0.0
      %3125 = vmatprep.subr.mxu0 0.0
      %3126 = vmatpush1.msra.mxu0 0.0
      %3127 = vmatprep.subr.mxu0 0.0
      %3128 = vmatpush1.msra.mxu0 0.0
      %3129 = vmatprep.subr.mxu0 0.0
      %3130 = vmatpush1.msra.mxu0 0.0
      %3131 = vmatprep.subr.mxu0 0.0
      %3132 = vmatpush1.msra.mxu0 0.0
      %3133 = vmatprep.subr.mxu0 0.0
      %3134 = vmatpush1.msra.mxu0 0.0
      %3135 = vmatprep.subr.mxu0 0.0
      %3136 = vmatpush1.msra.mxu0 0.0
      %3137 = vmatprep.subr.mxu0 0.0
      %3138 = vmatpush1.msra.mxu0 0.0
      %3139 = vmatprep.subr.mxu0 0.0
      %3140 = vmatpush1.msra.mxu0 0.0
      %3141 = vmatprep.subr.mxu0 0.0
      %3142 = vmatpush1.msra.mxu0 0.0
      %3143 = vmatprep.subr.mxu0 0.0
      %3144 = vmatpush1.msra.mxu0 0.0
      %3145 = vmatprep.subr.mxu0 0.0
      %3146 = vmatpush1.msra.mxu0 0.0
      %3147 = vmatprep.mubr.f32.mxu0 0.0
      %3148 = vmatmul.mubr.f32.gmra.mrb[0].mxu0 %v3079
      %v3149 = vpop.f32.mrb[0].mxu0
      %v3150 = vadd.f32 0.0, %v3149
      %v3151 = vpop.f32.mrb[0].mxu0
      %3152 = vdwg.mxu0
      %3153 = vrot.lane.b32.xlu0 %v2259, 108
      %v3154 = vpop.permute.xlu0 %3153
      %3155 = vrot.lane.b32.xlu0 %v2312, 108
      %v3156 = vpop.permute.xlu0 %3155
      %v3157 = vsel %vm721, %v3154, 0
      %v3159 = vsel %vm721, %v3156, 0
      %3161 = vmatprep.subr.mxu0 0.0
      %3162 = vmatpush1.xpose.msra.mxu0 %v3159
      %3163 = vmatprep.subr.mxu0 0.0
      %3164 = vmatpush1.xpose.msra.mxu0 0.0
      %3165 = vmatprep.subr.mxu0 0.0
      %3166 = vmatpush1.xpose.msra.mxu0 0.0
      %3167 = vmatprep.subr.mxu0 0.0
      %3168 = vmatpush1.xpose.msra.mxu0 0.0
      %3169 = vmatprep.subr.mxu0 0.0
      %3170 = vmatpush1.xpose.msra.mxu0 0.0
      %3171 = vmatprep.subr.mxu0 0.0
      %3172 = vmatpush1.xpose.msra.mxu0 0.0
      %3173 = vmatprep.subr.mxu0 0.0
      %3174 = vmatpush1.xpose.msra.mxu0 0.0
      %3175 = vmatprep.subr.mxu0 0.0
      %3176 = vmatpush1.xpose.msra.mxu0 0.0
      %3177 = vmatprep.subr.mxu0 0.0
      %3178 = vmatpush1.xpose.msra.mxu0 0.0
      %3179 = vmatprep.subr.mxu0 0.0
      %3180 = vmatpush1.xpose.msra.mxu0 0.0
      %3181 = vmatprep.subr.mxu0 0.0
      %3182 = vmatpush1.xpose.msra.mxu0 0.0
      %3183 = vmatprep.subr.mxu0 0.0
      %3184 = vmatpush1.xpose.msra.mxu0 0.0
      %3185 = vmatprep.subr.mxu0 0.0
      %3186 = vmatpush1.xpose.msra.mxu0 0.0
      %3187 = vmatprep.subr.mxu0 0.0
      %3188 = vmatpush1.xpose.msra.mxu0 0.0
      %3189 = vmatprep.subr.mxu0 0.0
      %3190 = vmatpush1.xpose.msra.mxu0 0.0
      %3191 = vmatprep.subr.mxu0 0.0
      %3192 = vmatpush1.xpose.msra.mxu0 0.0
      %3193 = vmatprep.subr.mxu0 0.0
      %3194 = vmatpush1.xpose.msra.mxu0 0.0
      %3195 = vmatprep.subr.mxu0 0.0
      %3196 = vmatpush1.xpose.msra.mxu0 0.0
      %3197 = vmatprep.subr.mxu0 0.0
      %3198 = vmatpush1.xpose.msra.mxu0 0.0
      %3199 = vmatprep.subr.mxu0 0.0
      %3200 = vmatpush1.xpose.msra.mxu0 0.0
      %3201 = vmatprep.subr.mxu0 0.0
      %3202 = vmatpush1.xpose.msra.mxu0 0.0
      %3203 = vmatprep.subr.mxu0 0.0
      %3204 = vmatpush1.xpose.msra.mxu0 0.0
      %3205 = vmatprep.subr.mxu0 0.0
      %3206 = vmatpush1.xpose.msra.mxu0 0.0
      %3207 = vmatprep.subr.mxu0 0.0
      %3208 = vmatpush1.xpose.msra.mxu0 0.0
      %3209 = vmatprep.subr.mxu0 0.0
      %3210 = vmatpush1.xpose.msra.mxu0 0.0
      %3211 = vmatprep.subr.mxu0 0.0
      %3212 = vmatpush1.xpose.msra.mxu0 0.0
      %3213 = vmatprep.subr.mxu0 0.0
      %3214 = vmatpush1.xpose.msra.mxu0 0.0
      %3215 = vmatprep.subr.mxu0 0.0
      %3216 = vmatpush1.xpose.msra.mxu0 0.0
      %3217 = vmatprep.subr.mxu0 0.0
      %3218 = vmatpush1.xpose.msra.mxu0 0.0
      %3219 = vmatprep.subr.mxu0 0.0
      %3220 = vmatpush1.xpose.msra.mxu0 0.0
      %3221 = vmatprep.subr.mxu0 0.0
      %3222 = vmatpush1.xpose.msra.mxu0 0.0
      %3223 = vmatprep.subr.mxu0 0.0
      %3224 = vmatpush1.xpose.msra.mxu0 0.0
      %3225 = vmatprep.mubr.f32.mxu0 0.0
      %3226 = vmatmul.mubr.f32.gmra.mrb[0].mxu0 %v3157
      %v3227 = vpop.f32.mrb[0].mxu0
      %v3228 = vadd.f32 0.0, %v3227
      %v3229 = vpop.f32.mrb[0].mxu0
      %3230 = vdwg.mxu0
      %v3231 = vmul.f32 %v3228, 0.5
      %v3232 = vsel %vm2394, %v3231, -inf
      %3233 = vmax.xlane.f32.xlu0 %v3232
      %v3234 = vpop.xlane.xlu0 %3233
      %v3235 = vsub.f32 %v3231, %v3234
      %v3236 = vmul.f32 %v3235, 1.442695
      %v3237 = vpow.pop %v3236
      %v3238 = vsel %vm2394, %v3237, 0.0
      %3239 = vadd.xlane.f32.xlu0 %v3238
      %v3240 = vpop.xlane.xlu0 %3239
      %v3241 = vrcp.pop %v3240
      %v3242 = vmul.f32 %v3237, %v3241
      %3243 = vrot.lane.b32.xlu0 %v2312, 76
      %v3244 = vpop.permute.xlu0 %3243
      %v3246 = vsel %vm2408, %v3242, 0
      %v3248 = vsel %vm2412, %v3244, 0
      %3250 = vmatprep.subr.mxu0 0.0
      %3251 = vmatpush1.msra.mxu0 %v3248
      %3252 = vmatprep.subr.mxu0 0.0
      %3253 = vmatpush1.msra.mxu0 0.0
      %3254 = vmatprep.subr.mxu0 0.0
      %3255 = vmatpush1.msra.mxu0 0.0
      %3256 = vmatprep.subr.mxu0 0.0
      %3257 = vmatpush1.msra.mxu0 0.0
      %3258 = vmatprep.subr.mxu0 0.0
      %3259 = vmatpush1.msra.mxu0 0.0
      %3260 = vmatprep.subr.mxu0 0.0
      %3261 = vmatpush1.msra.mxu0 0.0
      %3262 = vmatprep.subr.mxu0 0.0
      %3263 = vmatpush1.msra.mxu0 0.0
      %3264 = vmatprep.subr.mxu0 0.0
      %3265 = vmatpush1.msra.mxu0 0.0
      %3266 = vmatprep.subr.mxu0 0.0
      %3267 = vmatpush1.msra.mxu0 0.0
      %3268 = vmatprep.subr.mxu0 0.0
      %3269 = vmatpush1.msra.mxu0 0.0
      %3270 = vmatprep.subr.mxu0 0.0
      %3271 = vmatpush1.msra.mxu0 0.0
      %3272 = vmatprep.subr.mxu0 0.0
      %3273 = vmatpush1.msra.mxu0 0.0
      %3274 = vmatprep.subr.mxu0 0.0
      %3275 = vmatpush1.msra.mxu0 0.0
      %3276 = vmatprep.subr.mxu0 0.0
      %3277 = vmatpush1.msra.mxu0 0.0
      %3278 = vmatprep.subr.mxu0 0.0
      %3279 = vmatpush1.msra.mxu0 0.0
      %3280 = vmatprep.subr.mxu0 0.0
      %3281 = vmatpush1.msra.mxu0 0.0
      %3282 = vmatprep.subr.mxu0 0.0
      %3283 = vmatpush1.msra.mxu0 0.0
      %3284 = vmatprep.subr.mxu0 0.0
      %3285 = vmatpush1.msra.mxu0 0.0
      %3286 = vmatprep.subr.mxu0 0.0
      %3287 = vmatpush1.msra.mxu0 0.0
      %3288 = vmatprep.subr.mxu0 0.0
      %3289 = vmatpush1.msra.mxu0 0.0
      %3290 = vmatprep.subr.mxu0 0.0
      %3291 = vmatpush1.msra.mxu0 0.0
      %3292 = vmatprep.subr.mxu0 0.0
      %3293 = vmatpush1.msra.mxu0 0.0
      %3294 = vmatprep.subr.mxu0 0.0
      %3295 = vmatpush1.msra.mxu0 0.0
      %3296 = vmatprep.subr.mxu0 0.0
      %3297 = vmatpush1.msra.mxu0 0.0
      %3298 = vmatprep.subr.mxu0 0.0
      %3299 = vmatpush1.msra.mxu0 0.0
      %3300 = vmatprep.subr.mxu0 0.0
      %3301 = vmatpush1.msra.mxu0 0.0
      %3302 = vmatprep.subr.mxu0 0.0
      %3303 = vmatpush1.msra.mxu0 0.0
      %3304 = vmatprep.subr.mxu0 0.0
      %3305 = vmatpush1.msra.mxu0 0.0
      %3306 = vmatprep.subr.mxu0 0.0
      %3307 = vmatpush1.msra.mxu0 0.0
      %3308 = vmatprep.subr.mxu0 0.0
      %3309 = vmatpush1.msra.mxu0 0.0
      %3310 = vmatprep.subr.mxu0 0.0
      %3311 = vmatpush1.msra.mxu0 0.0
      %3312 = vmatprep.subr.mxu0 0.0
      %3313 = vmatpush1.msra.mxu0 0.0
      %3314 = vmatprep.mubr.f32.mxu0 0.0
      %3315 = vmatmul.mubr.f32.gmra.mrb[0].mxu0 %v3246
      %v3316 = vpop.f32.mrb[0].mxu0
      %v3317 = vadd.f32 0.0, %v3316
      %v3318 = vpop.f32.mrb[0].mxu0
      %3319 = vdwg.mxu0
      %3320 = vrot.lane.b32.xlu0 %v2259, 104
      %v3321 = vpop.permute.xlu0 %3320
      %3322 = vrot.lane.b32.xlu0 %v2312, 104
      %v3323 = vpop.permute.xlu0 %3322
      %v3324 = vsel %vm721, %v3321, 0
      %v3326 = vsel %vm721, %v3323, 0
      %3328 = vmatprep.subr.mxu0 0.0
      %3329 = vmatpush1.xpose.msra.mxu0 %v3326
      %3330 = vmatprep.subr.mxu0 0.0
      %3331 = vmatpush1.xpose.msra.mxu0 0.0
      %3332 = vmatprep.subr.mxu0 0.0
      %3333 = vmatpush1.xpose.msra.mxu0 0.0
      %3334 = vmatprep.subr.mxu0 0.0
      %3335 = vmatpush1.xpose.msra.mxu0 0.0
      %3336 = vmatprep.subr.mxu0 0.0
      %3337 = vmatpush1.xpose.msra.mxu0 0.0
      %3338 = vmatprep.subr.mxu0 0.0
      %3339 = vmatpush1.xpose.msra.mxu0 0.0
      %3340 = vmatprep.subr.mxu0 0.0
      %3341 = vmatpush1.xpose.msra.mxu0 0.0
      %3342 = vmatprep.subr.mxu0 0.0
      %3343 = vmatpush1.xpose.msra.mxu0 0.0
      %3344 = vmatprep.subr.mxu0 0.0
      %3345 = vmatpush1.xpose.msra.mxu0 0.0
      %3346 = vmatprep.subr.mxu0 0.0
      %3347 = vmatpush1.xpose.msra.mxu0 0.0
      %3348 = vmatprep.subr.mxu0 0.0
      %3349 = vmatpush1.xpose.msra.mxu0 0.0
      %3350 = vmatprep.subr.mxu0 0.0
      %3351 = vmatpush1.xpose.msra.mxu0 0.0
      %3352 = vmatprep.subr.mxu0 0.0
      %3353 = vmatpush1.xpose.msra.mxu0 0.0
      %3354 = vmatprep.subr.mxu0 0.0
      %3355 = vmatpush1.xpose.msra.mxu0 0.0
      %3356 = vmatprep.subr.mxu0 0.0
      %3357 = vmatpush1.xpose.msra.mxu0 0.0
      %3358 = vmatprep.subr.mxu0 0.0
      %3359 = vmatpush1.xpose.msra.mxu0 0.0
      %3360 = vmatprep.subr.mxu0 0.0
      %3361 = vmatpush1.xpose.msra.mxu0 0.0
      %3362 = vmatprep.subr.mxu0 0.0
      %3363 = vmatpush1.xpose.msra.mxu0 0.0
      %3364 = vmatprep.subr.mxu0 0.0
      %3365 = vmatpush1.xpose.msra.mxu0 0.0
      %3366 = vmatprep.subr.mxu0 0.0
      %3367 = vmatpush1.xpose.msra.mxu0 0.0
      %3368 = vmatprep.subr.mxu0 0.0
      %3369 = vmatpush1.xpose.msra.mxu0 0.0
      %3370 = vmatprep.subr.mxu0 0.0
      %3371 = vmatpush1.xpose.msra.mxu0 0.0
      %3372 = vmatprep.subr.mxu0 0.0
      %3373 = vmatpush1.xpose.msra.mxu0 0.0
      %3374 = vmatprep.subr.mxu0 0.0
      %3375 = vmatpush1.xpose.msra.mxu0 0.0
      %3376 = vmatprep.subr.mxu0 0.0
      %3377 = vmatpush1.xpose.msra.mxu0 0.0
      %3378 = vmatprep.subr.mxu0 0.0
      %3379 = vmatpush1.xpose.msra.mxu0 0.0
      %3380 = vmatprep.subr.mxu0 0.0
      %3381 = vmatpush1.xpose.msra.mxu0 0.0
      %3382 = vmatprep.subr.mxu0 0.0
      %3383 = vmatpush1.xpose.msra.mxu0 0.0
      %3384 = vmatprep.subr.mxu0 0.0
      %3385 = vmatpush1.xpose.msra.mxu0 0.0
      %3386 = vmatprep.subr.mxu0 0.0
      %3387 = vmatpush1.xpose.msra.mxu0 0.0
      %3388 = vmatprep.subr.mxu0 0.0
      %3389 = vmatpush1.xpose.msra.mxu0 0.0
      %3390 = vmatprep.subr.mxu0 0.0
      %3391 = vmatpush1.xpose.msra.mxu0 0.0
      %3392 = vmatprep.mubr.f32.mxu0 0.0
      %3393 = vmatmul.mubr.f32.gmra.mrb[0].mxu0 %v3324
      %v3394 = vpop.f32.mrb[0].mxu0
      %v3395 = vadd.f32 0.0, %v3394
      %v3396 = vpop.f32.mrb[0].mxu0
      %3397 = vdwg.mxu0
      %v3398 = vmul.f32 %v3395, 0.5
      %v3399 = vsel %vm2394, %v3398, -inf
      %3400 = vmax.xlane.f32.xlu0 %v3399
      %v3401 = vpop.xlane.xlu0 %3400
      %v3402 = vsub.f32 %v3398, %v3401
      %v3403 = vmul.f32 %v3402, 1.442695
      %v3404 = vpow.pop %v3403
      %v3405 = vsel %vm2394, %v3404, 0.0
      %3406 = vadd.xlane.f32.xlu0 %v3405
      %v3407 = vpop.xlane.xlu0 %3406
      %v3408 = vrcp.pop %v3407
      %v3409 = vmul.f32 %v3404, %v3408
      %3410 = vrot.lane.b32.xlu0 %v2312, 72
      %v3411 = vpop.permute.xlu0 %3410
      %v3413 = vsel %vm2408, %v3409, 0
      %v3415 = vsel %vm2412, %v3411, 0
      %3417 = vmatprep.subr.mxu0 0.0
      %3418 = vmatpush1.msra.mxu0 %v3415
      %3419 = vmatprep.subr.mxu0 0.0
      %3420 = vmatpush1.msra.mxu0 0.0
      %3421 = vmatprep.subr.mxu0 0.0
      %3422 = vmatpush1.msra.mxu0 0.0
      %3423 = vmatprep.subr.mxu0 0.0
      %3424 = vmatpush1.msra.mxu0 0.0
      %3425 = vmatprep.subr.mxu0 0.0
      %3426 = vmatpush1.msra.mxu0 0.0
      %3427 = vmatprep.subr.mxu0 0.0
      %3428 = vmatpush1.msra.mxu0 0.0
      %3429 = vmatprep.subr.mxu0 0.0
      %3430 = vmatpush1.msra.mxu0 0.0
      %3431 = vmatprep.subr.mxu0 0.0
      %3432 = vmatpush1.msra.mxu0 0.0
      %3433 = vmatprep.subr.mxu0 0.0
      %3434 = vmatpush1.msra.mxu0 0.0
      %3435 = vmatprep.subr.mxu0 0.0
      %3436 = vmatpush1.msra.mxu0 0.0
      %3437 = vmatprep.subr.mxu0 0.0
      %3438 = vmatpush1.msra.mxu0 0.0
      %3439 = vmatprep.subr.mxu0 0.0
      %3440 = vmatpush1.msra.mxu0 0.0
      %3441 = vmatprep.subr.mxu0 0.0
      %3442 = vmatpush1.msra.mxu0 0.0
      %3443 = vmatprep.subr.mxu0 0.0
      %3444 = vmatpush1.msra.mxu0 0.0
      %3445 = vmatprep.subr.mxu0 0.0
      %3446 = vmatpush1.msra.mxu0 0.0
      %3447 = vmatprep.subr.mxu0 0.0
      %3448 = vmatpush1.msra.mxu0 0.0
      %3449 = vmatprep.subr.mxu0 0.0
      %3450 = vmatpush1.msra.mxu0 0.0
      %3451 = vmatprep.subr.mxu0 0.0
      %3452 = vmatpush1.msra.mxu0 0.0
      %3453 = vmatprep.subr.mxu0 0.0
      %3454 = vmatpush1.msra.mxu0 0.0
      %3455 = vmatprep.subr.mxu0 0.0
      %3456 = vmatpush1.msra.mxu0 0.0
      %3457 = vmatprep.subr.mxu0 0.0
      %3458 = vmatpush1.msra.mxu0 0.0
      %3459 = vmatprep.subr.mxu0 0.0
      %3460 = vmatpush1.msra.mxu0 0.0
      %3461 = vmatprep.subr.mxu0 0.0
      %3462 = vmatpush1.msra.mxu0 0.0
      %3463 = vmatprep.subr.mxu0 0.0
      %3464 = vmatpush1.msra.mxu0 0.0
      %3465 = vmatprep.subr.mxu0 0.0
      %3466 = vmatpush1.msra.mxu0 0.0
      %3467 = vmatprep.subr.mxu0 0.0
      %3468 = vmatpush1.msra.mxu0 0.0
      %3469 = vmatprep.subr.mxu0 0.0
      %3470 = vmatpush1.msra.mxu0 0.0
      %3471 = vmatprep.subr.mxu0 0.0
      %3472 = vmatpush1.msra.mxu0 0.0
      %3473 = vmatprep.subr.mxu0 0.0
      %3474 = vmatpush1.msra.mxu0 0.0
      %3475 = vmatprep.subr.mxu0 0.0
      %3476 = vmatpush1.msra.mxu0 0.0
      %3477 = vmatprep.subr.mxu0 0.0
      %3478 = vmatpush1.msra.mxu0 0.0
      %3479 = vmatprep.subr.mxu0 0.0
      %3480 = vmatpush1.msra.mxu0 0.0
      %3481 = vmatprep.mubr.f32.mxu0 0.0
      %3482 = vmatmul.mubr.f32.gmra.mrb[0].mxu0 %v3413
      %v3483 = vpop.f32.mrb[0].mxu0
      %v3484 = vadd.f32 0.0, %v3483
      %v3485 = vpop.f32.mrb[0].mxu0
      %3486 = vdwg.mxu0
      %3487 = vrot.lane.b32.xlu0 %v2259, 100
      %v3488 = vpop.permute.xlu0 %3487
      %3489 = vrot.lane.b32.xlu0 %v2312, 100
      %v3490 = vpop.permute.xlu0 %3489
      %v3491 = vsel %vm721, %v3488, 0
      %v3493 = vsel %vm721, %v3490, 0
      %3495 = vmatprep.subr.mxu0 0.0
      %3496 = vmatpush1.xpose.msra.mxu0 %v3493
      %3497 = vmatprep.subr.mxu0 0.0
      %3498 = vmatpush1.xpose.msra.mxu0 0.0
      %3499 = vmatprep.subr.mxu0 0.0
      %3500 = vmatpush1.xpose.msra.mxu0 0.0
      %3501 = vmatprep.subr.mxu0 0.0
      %3502 = vmatpush1.xpose.msra.mxu0 0.0
      %3503 = vmatprep.subr.mxu0 0.0
      %3504 = vmatpush1.xpose.msra.mxu0 0.0
      %3505 = vmatprep.subr.mxu0 0.0
      %3506 = vmatpush1.xpose.msra.mxu0 0.0
      %3507 = vmatprep.subr.mxu0 0.0
      %3508 = vmatpush1.xpose.msra.mxu0 0.0
      %3509 = vmatprep.subr.mxu0 0.0
      %3510 = vmatpush1.xpose.msra.mxu0 0.0
      %3511 = vmatprep.subr.mxu0 0.0
      %3512 = vmatpush1.xpose.msra.mxu0 0.0
      %3513 = vmatprep.subr.mxu0 0.0
      %3514 = vmatpush1.xpose.msra.mxu0 0.0
      %3515 = vmatprep.subr.mxu0 0.0
      %3516 = vmatpush1.xpose.msra.mxu0 0.0
      %3517 = vmatprep.subr.mxu0 0.0
      %3518 = vmatpush1.xpose.msra.mxu0 0.0
      %3519 = vmatprep.subr.mxu0 0.0
      %3520 = vmatpush1.xpose.msra.mxu0 0.0
      %3521 = vmatprep.subr.mxu0 0.0
      %3522 = vmatpush1.xpose.msra.mxu0 0.0
      %3523 = vmatprep.subr.mxu0 0.0
      %3524 = vmatpush1.xpose.msra.mxu0 0.0
      %3525 = vmatprep.subr.mxu0 0.0
      %3526 = vmatpush1.xpose.msra.mxu0 0.0
      %3527 = vmatprep.subr.mxu0 0.0
      %3528 = vmatpush1.xpose.msra.mxu0 0.0
      %3529 = vmatprep.subr.mxu0 0.0
      %3530 = vmatpush1.xpose.msra.mxu0 0.0
      %3531 = vmatprep.subr.mxu0 0.0
      %3532 = vmatpush1.xpose.msra.mxu0 0.0
      %3533 = vmatprep.subr.mxu0 0.0
      %3534 = vmatpush1.xpose.msra.mxu0 0.0
      %3535 = vmatprep.subr.mxu0 0.0
      %3536 = vmatpush1.xpose.msra.mxu0 0.0
      %3537 = vmatprep.subr.mxu0 0.0
      %3538 = vmatpush1.xpose.msra.mxu0 0.0
      %3539 = vmatprep.subr.mxu0 0.0
      %3540 = vmatpush1.xpose.msra.mxu0 0.0
      %3541 = vmatprep.subr.mxu0 0.0
      %3542 = vmatpush1.xpose.msra.mxu0 0.0
      %3543 = vmatprep.subr.mxu0 0.0
      %3544 = vmatpush1.xpose.msra.mxu0 0.0
      %3545 = vmatprep.subr.mxu0 0.0
      %3546 = vmatpush1.xpose.msra.mxu0 0.0
      %3547 = vmatprep.subr.mxu0 0.0
      %3548 = vmatpush1.xpose.msra.mxu0 0.0
      %3549 = vmatprep.subr.mxu0 0.0
      %3550 = vmatpush1.xpose.msra.mxu0 0.0
      %3551 = vmatprep.subr.mxu0 0.0
      %3552 = vmatpush1.xpose.msra.mxu0 0.0
      %3553 = vmatprep.subr.mxu0 0.0
      %3554 = vmatpush1.xpose.msra.mxu0 0.0
      %3555 = vmatprep.subr.mxu0 0.0
      %3556 = vmatpush1.xpose.msra.mxu0 0.0
      %3557 = vmatprep.subr.mxu0 0.0
      %3558 = vmatpush1.xpose.msra.mxu0 0.0
      %3559 = vmatprep.mubr.f32.mxu0 0.0
      %3560 = vmatmul.mubr.f32.gmra.mrb[0].mxu0 %v3491
      %v3561 = vpop.f32.mrb[0].mxu0
      %v3562 = vadd.f32 0.0, %v3561
      %v3563 = vpop.f32.mrb[0].mxu0
      %3564 = vdwg.mxu0
      %v3565 = vmul.f32 %v3562, 0.5
      %v3566 = vsel %vm2394, %v3565, -inf
      %3567 = vmax.xlane.f32.xlu0 %v3566
      %v3568 = vpop.xlane.xlu0 %3567
      %v3569 = vsub.f32 %v3565, %v3568
      %v3570 = vmul.f32 %v3569, 1.442695
      %v3571 = vpow.pop %v3570
      %v3572 = vsel %vm2394, %v3571, 0.0
      %3573 = vadd.xlane.f32.xlu0 %v3572
      %v3574 = vpop.xlane.xlu0 %3573
      %v3575 = vrcp.pop %v3574
      %v3576 = vmul.f32 %v3571, %v3575
      %3577 = vrot.lane.b32.xlu0 %v2312, 68
      %v3578 = vpop.permute.xlu0 %3577
      %v3580 = vsel %vm2408, %v3576, 0
      %v3582 = vsel %vm2412, %v3578, 0
      %3584 = vmatprep.subr.mxu0 0.0
      %3585 = vmatpush1.msra.mxu0 %v3582
      %3586 = vmatprep.subr.mxu0 0.0
      %3587 = vmatpush1.msra.mxu0 0.0
      %3588 = vmatprep.subr.mxu0 0.0
      %3589 = vmatpush1.msra.mxu0 0.0
      %3590 = vmatprep.subr.mxu0 0.0
      %3591 = vmatpush1.msra.mxu0 0.0
      %3592 = vmatprep.subr.mxu0 0.0
      %3593 = vmatpush1.msra.mxu0 0.0
      %3594 = vmatprep.subr.mxu0 0.0
      %3595 = vmatpush1.msra.mxu0 0.0
      %3596 = vmatprep.subr.mxu0 0.0
      %3597 = vmatpush1.msra.mxu0 0.0
      %3598 = vmatprep.subr.mxu0 0.0
      %3599 = vmatpush1.msra.mxu0 0.0
      %3600 = vmatprep.subr.mxu0 0.0
      %3601 = vmatpush1.msra.mxu0 0.0
      %3602 = vmatprep.subr.mxu0 0.0
      %3603 = vmatpush1.msra.mxu0 0.0
      %3604 = vmatprep.subr.mxu0 0.0
      %3605 = vmatpush1.msra.mxu0 0.0
      %3606 = vmatprep.subr.mxu0 0.0
      %3607 = vmatpush1.msra.mxu0 0.0
      %3608 = vmatprep.subr.mxu0 0.0
      %3609 = vmatpush1.msra.mxu0 0.0
      %3610 = vmatprep.subr.mxu0 0.0
      %3611 = vmatpush1.msra.mxu0 0.0
      %3612 = vmatprep.subr.mxu0 0.0
      %3613 = vmatpush1.msra.mxu0 0.0
      %3614 = vmatprep.subr.mxu0 0.0
      %3615 = vmatpush1.msra.mxu0 0.0
      %3616 = vmatprep.subr.mxu0 0.0
      %3617 = vmatpush1.msra.mxu0 0.0
      %3618 = vmatprep.subr.mxu0 0.0
      %3619 = vmatpush1.msra.mxu0 0.0
      %3620 = vmatprep.subr.mxu0 0.0
      %3621 = vmatpush1.msra.mxu0 0.0
      %3622 = vmatprep.subr.mxu0 0.0
      %3623 = vmatpush1.msra.mxu0 0.0
      %3624 = vmatprep.subr.mxu0 0.0
      %3625 = vmatpush1.msra.mxu0 0.0
      %3626 = vmatprep.subr.mxu0 0.0
      %3627 = vmatpush1.msra.mxu0 0.0
      %3628 = vmatprep.subr.mxu0 0.0
      %3629 = vmatpush1.msra.mxu0 0.0
      %3630 = vmatprep.subr.mxu0 0.0
      %3631 = vmatpush1.msra.mxu0 0.0
      %3632 = vmatprep.subr.mxu0 0.0
      %3633 = vmatpush1.msra.mxu0 0.0
      %3634 = vmatprep.subr.mxu0 0.0
      %3635 = vmatpush1.msra.mxu0 0.0
      %3636 = vmatprep.subr.mxu0 0.0
      %3637 = vmatpush1.msra.mxu0 0.0
      %3638 = vmatprep.subr.mxu0 0.0
      %3639 = vmatpush1.msra.mxu0 0.0
      %3640 = vmatprep.subr.mxu0 0.0
      %3641 = vmatpush1.msra.mxu0 0.0
      %3642 = vmatprep.subr.mxu0 0.0
      %3643 = vmatpush1.msra.mxu0 0.0
      %3644 = vmatprep.subr.mxu0 0.0
      %3645 = vmatpush1.msra.mxu0 0.0
      %3646 = vmatprep.subr.mxu0 0.0
      %3647 = vmatpush1.msra.mxu0 0.0
      %3648 = vmatprep.mubr.f32.mxu0 0.0
      %3649 = vmatmul.mubr.f32.gmra.mrb[0].mxu0 %v3580
      %v3650 = vpop.f32.mrb[0].mxu0
      %v3651 = vadd.f32 0.0, %v3650
      %v3652 = vpop.f32.mrb[0].mxu0
      %3653 = vdwg.mxu0
      %3655 = vrot.lane.b32.xlu0 %v2649, 4
      %v3656 = vpop.permute.xlu0 %3655
      %3659 = vrot.lane.b32.xlu0 %v2816, 8
      %v3660 = vpop.permute.xlu0 %3659
      %3663 = vrot.lane.b32.xlu0 %v2983, 12
      %v3664 = vpop.permute.xlu0 %3663
      %3667 = vrot.lane.b32.xlu0 %v3150, 16
      %v3668 = vpop.permute.xlu0 %3667
      %3671 = vrot.lane.b32.xlu0 %v3317, 20
      %v3672 = vpop.permute.xlu0 %3671
      %3675 = vrot.lane.b32.xlu0 %v3484, 24
      %v3676 = vpop.permute.xlu0 %3675
      %3679 = vrot.lane.b32.xlu0 %v3651, 28
      %v3680 = vpop.permute.xlu0 %3679
      %v3682 = vsel %vm721, %v2482, %v3656
      %v3683 = vsel %vm2086, %v3682, %v3660
      %v3684 = vsel %vm2088, %v3683, %v3664
      %v3685 = vsel %vm2090, %v3684, %v3668
      %v3686 = vsel %vm2092, %v3685, %v3672
      %v3687 = vsel %vm2094, %v3686, %v3676
      %v3688 = vsel %vm2096, %v3687, %v3680
      %v3689 = vpack.c.bf16 %v3688, %v3688
      %v3691 = vlaneseq
      %v3692 = vshrl.u32 %v3691, 7
      %v3693 = vsub.s32 0, %v3692
      %v3694 = vrot.slane %v2201, %v3693
      %v3700 = vunpack.c.l.b16 %v2197
      %v3701 = vunpack.c.l.b16 %v2198
      %v3702 = vunpack.c.l.b16 %v2199
      %v3703 = vunpack.c.l.b16 %v2200
      %v3704 = vpack.c.b16 %v3701, %v3700
      %v3705 = vpack.c.b16 %v3703, %v3702
      %v3709 = vsel %vm674, %v3689, 0
      %3711 = vmatprep.subr.bf16.mxu0 0
      %3712 = vmatpush1.bf16.msra.mxu0 %v3704
      %3713 = vmatprep.subr.bf16.mxu0 0
      %3714 = vmatpush1.bf16.msra.mxu0 %v3705
      %3715 = vmatprep.subr.bf16.mxu0 0
      %3716 = vmatpush1.bf16.msra.mxu0 0
      %3717 = vmatprep.subr.bf16.mxu0 0
      %3718 = vmatpush1.bf16.msra.mxu0 0
      %3719 = vmatprep.subr.bf16.mxu0 0
      %3720 = vmatpush1.bf16.msra.mxu0 0
      %3721 = vmatprep.subr.bf16.mxu0 0
      %3722 = vmatpush1.bf16.msra.mxu0 0
      %3723 = vmatprep.subr.bf16.mxu0 0
      %3724 = vmatpush1.bf16.msra.mxu0 0
      %3725 = vmatprep.subr.bf16.mxu0 0
      %3726 = vmatpush1.bf16.msra.mxu0 0
      %3727 = vmatprep.subr.bf16.mxu0 0
      %3728 = vmatpush1.bf16.msra.mxu0 0
      %3729 = vmatprep.subr.bf16.mxu0 0
      %3730 = vmatpush1.bf16.msra.mxu0 0
      %3731 = vmatprep.subr.bf16.mxu0 0
      %3732 = vmatpush1.bf16.msra.mxu0 0
      %3733 = vmatprep.subr.bf16.mxu0 0
      %3734 = vmatpush1.bf16.msra.mxu0 0
      %3735 = vmatprep.subr.bf16.mxu0 0
      %3736 = vmatpush1.bf16.msra.mxu0 0
      %3737 = vmatprep.subr.bf16.mxu0 0
      %3738 = vmatpush1.bf16.msra.mxu0 0
      %3739 = vmatprep.subr.bf16.mxu0 0
      %3740 = vmatpush1.bf16.msra.mxu0 0
      %3741 = vmatprep.subr.bf16.mxu0 0
      %3742 = vmatpush1.bf16.msra.mxu0 0
      %3743 = vmatprep.mubr.bf16.mxu0 0
      %3744 = vmatmul.mubr.bf16.gmra.mrb[0].mxu0 %v3709
      %v3745 = vpop.f32.mrb[0].mxu0
      %v3746 = vadd.f32 %v3694, %v3745
      %v3747 = vpop.f32.mrb[0].mxu0
      %v3748 = vpop.f32.mrb[0].mxu0
      %v3749 = vpop.f32.mrb[0].mxu0
      %3750 = vdwg.mxu0
      %v3751 = vadd.f32 %v2191, %v3746
      %v3752 = vld [vmem:[%s12] sm:$0x1]
      %v3753 = vld [vmem:[%s13] sm:$0x1]
      %v3754 = vsel %vm2163, %v3751, 0.0
      %3755 = vadd.xlane.f32.xlu0 %v3754
      %v3756 = vpop.xlane.xlu0 %3755
      %v3757 = vmul.f32 %v3756, %v2167
      %v3758 = vsub.f32 %v3751, %v3757
      %v3759 = vmul.f32 %v3758, %v3758
      %v3760 = vsel %vm2163, %v3759, 0.0
      %3761 = vadd.xlane.f32.xlu0 %v3760
      %v3762 = vpop.xlane.xlu0 %3761
      %v3763 = vmul.f32 %v3762, %v2167
      %v3764 = vadd.f32 %v3763, 1e-05
      %v3765 = vrsqrt.pop %v3764
      %v3766 = vmul.f32 %v3758, %v3765
      %v3768 = vlaneseq
      %v3769 = vshrl.u32 %v3768, 7
      %v3770 = vsub.s32 0, %v3769
      %v3771 = vrot.slane %v3752, %v3770
      %v3773 = vmul.f32 %v3766, %v3771
      %v3775 = vlaneseq
      %v3776 = vshrl.u32 %v3775, 7
      %v3777 = vsub.s32 0, %v3776
      %v3778 = vrot.slane %v3753, %v3777
      %v3780 = vadd.f32 %v3773, %v3778
      %v3781 = vld [vmem:[%s14] sm:$0xf]
      %v3782 = vld [vmem:[%s14 + $0x4] sm:$0xf]
      %v3783 = vld [vmem:[%s14 + $0x8] sm:$0xf]
      %v3784 = vld [vmem:[%s14 + $0xc] sm:$0xf]
      %v3785 = vpack.c.bf16 %v3780, %v3780
      %v3786 = vld [vmem:[%s15] sm:$0x1]
      %v3788 = vlaneseq
      %v3789 = vshrl.u32 %v3788, 7
      %v3790 = vsub.s32 0, %v3789
      %v3791 = vrot.slane %v3786, %v3790
      %v3797 = vunpack.c.l.b16 %v3781
      %v3798 = vunpack.c.l.b16 %v3782
      %v3799 = vunpack.c.l.b16 %v3783
      %v3800 = vunpack.c.l.b16 %v3784
      %v3801 = vpack.c.b16 %v3798, %v3797
      %v3802 = vpack.c.b16 %v3800, %v3799
      %v3806 = vsel %vm674, %v3785, 0
      %3808 = vmatprep.subr.bf16.mxu0 0
      %3809 = vmatpush1.bf16.msra.mxu0 %v3801
      %3810 = vmatprep.subr.bf16.mxu0 0
      %3811 = vmatpush1.bf16.msra.mxu0 %v3802
      %3812 = vmatprep.subr.bf16.mxu0 0
      %3813 = vmatpush1.bf16.msra.mxu0 0
      %3814 = vmatprep.subr.bf16.mxu0 0
      %3815 = vmatpush1.bf16.msra.mxu0 0
      %3816 = vmatprep.subr.bf16.mxu0 0
      %3817 = vmatpush1.bf16.msra.mxu0 0
      %3818 = vmatprep.subr.bf16.mxu0 0
      %3819 = vmatpush1.bf16.msra.mxu0 0
      %3820 = vmatprep.subr.bf16.mxu0 0
      %3821 = vmatpush1.bf16.msra.mxu0 0
      %3822 = vmatprep.subr.bf16.mxu0 0
      %3823 = vmatpush1.bf16.msra.mxu0 0
      %3824 = vmatprep.subr.bf16.mxu0 0
      %3825 = vmatpush1.bf16.msra.mxu0 0
      %3826 = vmatprep.subr.bf16.mxu0 0
      %3827 = vmatpush1.bf16.msra.mxu0 0
      %3828 = vmatprep.subr.bf16.mxu0 0
      %3829 = vmatpush1.bf16.msra.mxu0 0
      %3830 = vmatprep.subr.bf16.mxu0 0
      %3831 = vmatpush1.bf16.msra.mxu0 0
      %3832 = vmatprep.subr.bf16.mxu0 0
      %3833 = vmatpush1.bf16.msra.mxu0 0
      %3834 = vmatprep.subr.bf16.mxu0 0
      %3835 = vmatpush1.bf16.msra.mxu0 0
      %3836 = vmatprep.subr.bf16.mxu0 0
      %3837 = vmatpush1.bf16.msra.mxu0 0
      %3838 = vmatprep.subr.bf16.mxu0 0
      %3839 = vmatpush1.bf16.msra.mxu0 0
      %3840 = vmatprep.mubr.bf16.mxu0 0
      %3841 = vmatmul.mubr.bf16.gmra.mrb[0].mxu0 %v3806
      %v3842 = vpop.f32.mrb[0].mxu0
      %v3843 = vadd.f32 %v3791, %v3842
      %v3844 = vpop.f32.mrb[0].mxu0
      %v3845 = vpop.f32.mrb[0].mxu0
      %v3846 = vpop.f32.mrb[0].mxu0
      %3847 = vdwg.mxu0
      %v3848 = vmax.f32 %v3843, 0.0
      %v3849 = vld [vmem:[%s16] sm:$0xf]
      %v3850 = vld [vmem:[%s16 + $0x4] sm:$0xf]
      %v3851 = vld [vmem:[%s16 + $0x8] sm:$0xf]
      %v3852 = vld [vmem:[%s16 + $0xc] sm:$0xf]
      %v3853 = vld [vmem:[%s16 + $0x10] sm:$0xf]
      %v3854 = vld [vmem:[%s16 + $0x14] sm:$0xf]
      %v3855 = vld [vmem:[%s16 + $0x18] sm:$0xf]
      %v3856 = vld [vmem:[%s16 + $0x1c] sm:$0xf]
      %v3857 = vld [vmem:[%s16 + $0x20] sm:$0xf]
      %v3858 = vld [vmem:[%s16 + $0x24] sm:$0xf]
      %v3859 = vld [vmem:[%s16 + $0x28] sm:$0xf]
      %v3860 = vld [vmem:[%s16 + $0x2c] sm:$0xf]
      %v3861 = vld [vmem:[%s16 + $0x30] sm:$0xf]
      %v3862 = vld [vmem:[%s16 + $0x34] sm:$0xf]
      %v3863 = vld [vmem:[%s16 + $0x38] sm:$0xf]
      %v3864 = vld [vmem:[%s16 + $0x3c] sm:$0xf]
      %v3865 = vpack.c.bf16 %v3848, %v3848
      %v3866 = vld [vmem:[%s17] sm:$0x1]
      %v3868 = vlaneseq
      %v3869 = vshrl.u32 %v3868, 7
      %v3870 = vsub.s32 0, %v3869
      %v3871 = vrot.slane %v3866, %v3870
      %v3889 = vunpack.c.l.b16 %v3849
      %v3890 = vunpack.c.l.b16 %v3850
      %v3891 = vunpack.c.l.b16 %v3851
      %v3892 = vunpack.c.l.b16 %v3852
      %v3893 = vunpack.c.l.b16 %v3853
      %v3894 = vunpack.c.l.b16 %v3854
      %v3895 = vunpack.c.l.b16 %v3855
      %v3896 = vunpack.c.l.b16 %v3856
      %v3897 = vunpack.c.l.b16 %v3857
      %v3898 = vunpack.c.l.b16 %v3858
      %v3899 = vunpack.c.l.b16 %v3859
      %v3900 = vunpack.c.l.b16 %v3860
      %v3901 = vunpack.c.l.b16 %v3861
      %v3902 = vunpack.c.l.b16 %v3862
      %v3903 = vunpack.c.l.b16 %v3863
      %v3904 = vunpack.c.l.b16 %v3864
      %v3905 = vpack.c.b16 %v3890, %v3889
      %v3906 = vpack.c.b16 %v3892, %v3891
      %v3907 = vpack.c.b16 %v3894, %v3893
      %v3908 = vpack.c.b16 %v3896, %v3895
      %v3909 = vpack.c.b16 %v3898, %v3897
      %v3910 = vpack.c.b16 %v3900, %v3899
      %v3911 = vpack.c.b16 %v3902, %v3901
      %v3912 = vpack.c.b16 %v3904, %v3903
      %3921 = vmatprep.subr.bf16.mxu0 0
      %3922 = vmatpush1.bf16.msra.mxu0 %v3905
      %3923 = vmatprep.subr.bf16.mxu0 0
      %3924 = vmatpush1.bf16.msra.mxu0 %v3906
      %3925 = vmatprep.subr.bf16.mxu0 0
      %3926 = vmatpush1.bf16.msra.mxu0 %v3907
      %3927 = vmatprep.subr.bf16.mxu0 0
      %3928 = vmatpush1.bf16.msra.mxu0 %v3908
      %3929 = vmatprep.subr.bf16.mxu0 0
      %3930 = vmatpush1.bf16.msra.mxu0 %v3909
      %3931 = vmatprep.subr.bf16.mxu0 0
      %3932 = vmatpush1.bf16.msra.mxu0 %v3910
      %3933 = vmatprep.subr.bf16.mxu0 0
      %3934 = vmatpush1.bf16.msra.mxu0 %v3911
      %3935 = vmatprep.subr.bf16.mxu0 0
      %3936 = vmatpush1.bf16.msra.mxu0 %v3912
      %3937 = vmatprep.subr.bf16.mxu0 0
      %3938 = vmatpush1.bf16.msra.mxu0 0
      %3939 = vmatprep.subr.bf16.mxu0 0
      %3940 = vmatpush1.bf16.msra.mxu0 0
      %3941 = vmatprep.subr.bf16.mxu0 0
      %3942 = vmatpush1.bf16.msra.mxu0 0
      %3943 = vmatprep.subr.bf16.mxu0 0
      %3944 = vmatpush1.bf16.msra.mxu0 0
      %3945 = vmatprep.subr.bf16.mxu0 0
      %3946 = vmatpush1.bf16.msra.mxu0 0
      %3947 = vmatprep.subr.bf16.mxu0 0
      %3948 = vmatpush1.bf16.msra.mxu0 0
      %3949 = vmatprep.subr.bf16.mxu0 0
      %3950 = vmatpush1.bf16.msra.mxu0 0
      %3951 = vmatprep.subr.bf16.mxu0 0
      %3952 = vmatpush1.bf16.msra.mxu0 0
      %3953 = vmatprep.mubr.bf16.mxu0 0
      %3954 = vmatmul.mubr.bf16.gmra.mrb[0].mxu0 %v3865
      %v3955 = vpop.f32.mrb[0].mxu0
      %v3956 = vadd.f32 %v3871, %v3955
      %v3957 = vpop.f32.mrb[0].mxu0
      %v3958 = vpop.f32.mrb[0].mxu0
      %v3959 = vpop.f32.mrb[0].mxu0
      %3960 = vdwg.mxu0
      %v3961 = vadd.f32 %v3780, %v3956
      %v3962 = vld [vmem:[%s18] sm:$0x1]
      %v3963 = vld [vmem:[%s19] sm:$0x1]
      %v3964 = vsel %vm2163, %v3961, 0.0
      %3965 = vadd.xlane.f32.xlu0 %v3964
      %v3966 = vpop.xlane.xlu0 %3965
      %v3967 = vmul.f32 %v3966, %v2167
      %v3968 = vsub.f32 %v3961, %v3967
      %v3969 = vmul.f32 %v3968, %v3968
      %v3970 = vsel %vm2163, %v3969, 0.0
      %3971 = vadd.xlane.f32.xlu0 %v3970
      %v3972 = vpop.xlane.xlu0 %3971
      %v3973 = vmul.f32 %v3972, %v2167
      %v3974 = vadd.f32 %v3973, 1e-05
      %v3975 = vrsqrt.pop %v3974
      %v3976 = vmul.f32 %v3968, %v3975
      %v3978 = vlaneseq
      %v3979 = vshrl.u32 %v3978, 7
      %v3980 = vsub.s32 0, %v3979
      %v3981 = vrot.slane %v3962, %v3980
      %v3983 = vmul.f32 %v3976, %v3981
      %v3985 = vlaneseq
      %v3986 = vshrl.u32 %v3985, 7
      %v3987 = vsub.s32 0, %v3986
      %v3988 = vrot.slane %v3963, %v3987
      %v3990 = vadd.f32 %v3983, %v3988
      %3991 = vst.msk [vmem:[%s641] sm:$0x3] %vm2163, %v3990
      %p3992 = scmp.lt.s32.totalorder %s31, 7
      %s3993 = scalar_select %p3992, %s31, 7
      %s3994 = smul.addr %s3993, 2
      %s3995 = scalar_lea.vmem %s20, %s3994
      // Predicated region
      $region101: #{custom_decoder_forward.3} parent=99 // pred_check
        %p3996 = pneg %p479
      $region102: #{custom_decoder_forward.3} parent=99 // pred_check_branch
        %3998 = sbr.rel (%p3996) target = $region104
      $region103: #{custom_decoder_forward.3} parent=99 // pred_region
        _
      $region104: #{custom_decoder_forward.3} parent=99 // pred_fallthru
        _
    $region100: #{custom_decoder_forward.3} parent=5 // pred_fallthru
      _
    %p3999 = scmp.le.s32.totalorder 2, %s26
    // Predicated region
    $region105: #{custom_decoder_forward.3} parent=5 // pred_check
      %p4000 = pneg %p3999
    $region106: #{custom_decoder_forward.3} parent=5 // pred_check_branch
      %4002 = sbr.rel (%p4000) target = $region108
    $region107: #{custom_decoder_forward.3} parent=5 // pred_region
      %s4003 = ssub.s32 %s26, 2
      // Predicated region
      $region109: #{custom_decoder_forward.3} parent=107 // pred_check
        %p4004 = pneg %p485
      $region110: #{custom_decoder_forward.3} parent=107 // pred_check_branch
        %4006 = sbr.rel (%p4004) target = $region112
      $region111: #{custom_decoder_forward.3} parent=107 // pred_region
        %p4007 = scmp.lt.s32.totalorder %s32, 7
        %s4008 = scalar_select %p4007, %s32, 7
        %s4009 = smul.addr %s4008, 2
        %s4010 = scalar_lea.vmem %s20, %s4009
      $region112: #{custom_decoder_forward.3} parent=107 // pred_fallthru
        _
    $region108: #{custom_decoder_forward.3} parent=5 // pred_fallthru
      _
  $region6: #{custom_decoder_forward.3} parent=0 // loop_footer
    %s30 = sadd.s32 1, %s26
  $region7: #{custom_decoder_forward.3} parent=0 // loop_footer_branch
    %25 = sbr.rel target = $region3
  $region8: #{custom_decoder_forward.3} parent=0 // loop_exit
    _

</llo_original>
